<compile_context>
chip_gen: v6e
topology: v6e:2x2x1
jax: 0.10.0
libtpu: 0.0.40
codegen_flags: <defaults>
</compile_context>

<pallas_src>
import numpy as np
import jax
import jax.numpy as jnp
from jax import lax
from jax.experimental import pallas as pl
from jax.experimental.pallas import tpu as pltpu

N_QUBITS = 4
ENCODER_DEPTH = 2
B = 2                    # batch
H_IN = W_IN = 28         # 28x28 x 1ch -> conv 26x26 -> pool 13x13 -> 32*169 = 5408
C_OUT = 32
POOL_POS = 13 * 13       # 169 pooled positions per channel
PAD_POS = 256            # pooled positions padded to an aligned 256-lane slab
FLAT = C_OUT * POOL_POS  # 5408
HID = 128
NCLS = 10


# ---------------------------------------------------------------------------
# Fused forward kernel: conv3x3 + bias + 2x2 maxpool + ReLU + fc1 + ReLU
# (+ quantum scalar folded into b2') + fc2 + softmax.  One grid step processes
# the whole (small) batch so the fc1 weight streams through the MXU once.
#   p4_ref : (B, 9, 4*256)     im2col taps, bf16, 4 pool offsets in 256-lane slabs
#   cw_ref : (32, 9)           conv weight, bf16
#   cb_ref : (32, 1)           conv bias, f32
#   w1_ref : (32, 169, 128)    fc1 weight [c, p, j], bf16 (PyTorch flatten order)
#   b1_ref : (1, 128)          fc1 bias, f32
#   w2_ref : (128, 10)         fc2 weight (transposed), f32
#   b2_ref : (1, 10)           fc2 bias with the quantum scalar folded in, f32
#   o_ref  : (B, 10)           softmax probabilities
#   act_sc : (32, B, 169) f32  VMEM scratch: pooled/ReLU'd conv activations
# ---------------------------------------------------------------------------
def fused_forward_kernel(p4_ref, cw_ref, cb_ref, w1_ref, b1_ref, w2_ref, b2_ref,
                         o_ref, act_sc):
    rows = p4_ref.shape[0]                 # static (== batch)
    cw = cw_ref[...]                       # (32, 9)  bf16
    cb = cb_ref[...]                       # (32, 1)  f32

    # ---- conv1 (3x3, 1->32) + 2x2 max-pool + bias + ReLU --------------------
    # One bf16 dot per batch row covers all 4 pool-window offsets (aligned
    # 256-lane slabs); the pool-max is 3 unmasked full-vreg maxes.  Bias is
    # offset-invariant and ReLU commutes with max, so relu(max(z)+b) is exact.
    for b in range(rows):                  # static unroll (rows == batch, small)
        z = jnp.dot(cw, p4_ref[b], preferred_element_type=jnp.float32)   # (32, 1024)
        m = jnp.maximum(jnp.maximum(z[:, 0 * PAD_POS:1 * PAD_POS],
                                    z[:, 1 * PAD_POS:2 * PAD_POS]),
                        jnp.maximum(z[:, 2 * PAD_POS:3 * PAD_POS],
                                    z[:, 3 * PAD_POS:4 * PAD_POS]))       # (32, 256)
        act_sc[:, b, :] = jnp.maximum(m + cb, 0.0)[:, :POOL_POS]          # (32, 169)

    # ---- fc1: h[b, j] = sum_{c,p} act[c, b, p] * w1[c, p, j], + b1, ReLU ----
    # Single batched contraction (batch = channel c, M = batch rows), both
    # operands bf16, f32 accumulation; then one sublane-sum over c.
    act = act_sc[...].astype(jnp.bfloat16)                                # cast once
    part = lax.dot_general(act, w1_ref[...],
                           dimension_numbers=(((2,), (1,)), ((0,), (0,))),
                           preferred_element_type=jnp.float32)            # (32, rows, 128)
    h = jnp.maximum(jnp.sum(part, axis=0) + b1_ref[...], 0.0)             # (rows, 128)

    # ---- (+ quantum scalar, already folded into b2') + fc2 + softmax --------
    logits = jnp.dot(h, w2_ref[...], preferred_element_type=jnp.float32) + b2_ref[...]
    mx = jnp.max(logits, axis=1, keepdims=True)
    e = jnp.exp(logits - mx)
    o_ref[...] = (e / jnp.sum(e, axis=1, keepdims=True)).astype(o_ref.dtype)


# ---------------------------------------------------------------------------
# Exact 4-qubit statevector simulation of the PennyLane variational circuit.
# x-independent -> runs host-side (NumPy); the scalar sum is folded into b2.
# ---------------------------------------------------------------------------
def quantum_expvals(params_np):
    n = N_QUBITS
    dim = 2 ** n
    psi = np.zeros(dim, dtype=np.complex128)
    psi[0] = 1.0
    I2 = np.eye(2, dtype=np.complex128)
    H = np.array([[1, 1], [1, -1]], dtype=np.complex128) / np.sqrt(2.0)
    CNOT2 = np.array([[1, 0, 0, 0], [0, 1, 0, 0], [0, 0, 0, 1], [0, 0, 1, 0]],
                     dtype=np.complex128)

    def RY(t):
        c, s = np.cos(t / 2), np.sin(t / 2)
        return np.array([[c, -s], [s, c]], dtype=np.complex128)

    def RX(t):
        c, s = np.cos(t / 2), np.sin(t / 2)
        return np.array([[c, -1j * s], [-1j * s, c]], dtype=np.complex128)

    def RZ(t):
        return np.array([[np.exp(-1j * t / 2), 0], [0, np.exp(1j * t / 2)]],
                        dtype=np.complex128)

    def single(U, wire):
        out = np.array([[1.0 + 0j]])
        for q in range(n):
            out = np.kron(out, U if q == wire else I2)
        return out

    def cnot_adjacent(c):  # control c, target c+1 (wire 0 = most significant)
        out = np.array([[1.0 + 0j]])
        for _ in range(c):
            out = np.kron(out, I2)
        out = np.kron(out, CNOT2)
        for _ in range(n - 2 - c):
            out = np.kron(out, I2)
        return out

    for idx in range(n):                 # featureMap
        psi = single(H, idx) @ psi
        psi = single(RY(0.1 * idx), idx) @ psi
    for layer in params_np:              # variational layers
        for q in range(n):
            psi = single(RY(layer[q, 0]), q) @ psi
            psi = single(RX(layer[q, 1]), q) @ psi
            psi = single(RZ(layer[q, 2]), q) @ psi
        for i in range(0, n - 1, 2):
            psi = cnot_adjacent(i) @ psi
        for i in range(1, n - 1, 2):
            psi = cnot_adjacent(i) @ psi

    probs = np.abs(psi) ** 2
    idxs = np.arange(dim)
    expvals = []
    for wire in range(n):
        bits = (idxs >> (n - 1 - wire)) & 1
        expvals.append(float(np.sum(probs * (1.0 - 2.0 * bits))))
    return expvals


# ---------------------------------------------------------------------------
# One-time parameter prep (hoisted out of the per-forward path).
# ---------------------------------------------------------------------------
def prepare_params(conv_w, conv_b, fc1_w, fc1_b, fc2_w, fc2_b, qsum):
    cw = conv_w.reshape(C_OUT, 9).astype(jnp.bfloat16)                    # (32, 9)
    cb = conv_b.reshape(C_OUT, 1).astype(jnp.float32)                     # (32, 1)
    # fc1_w is (128, 5408) with feature f = c*169 + p -> (32, 169, 128)[c,p,j], bf16.
    w1 = fc1_w.reshape(HID, C_OUT, POOL_POS).transpose(1, 2, 0).astype(jnp.bfloat16)
    b1 = fc1_b.reshape(1, HID).astype(jnp.float32)
    w2 = fc2_w.T.astype(jnp.float32)                                      # (128, 10)
    # (h + q) @ W2^T + b2  ==  h @ W2^T + (b2 + q * W2.sum(axis=1))
    b2f = (fc2_b + qsum * jnp.sum(fc2_w, axis=1)).reshape(1, NCLS).astype(jnp.float32)
    return cw, cb, w1, b1, w2, b2f


# ---------------------------------------------------------------------------
# Forward wrapper (jitted so the im2col glue fuses into a couple of XLA ops).
# ---------------------------------------------------------------------------
@jax.jit
def quantum_convnet_forward(x, cw, cb, w1, b1, w2, b2f):
    bsz = x.shape[0]
    img = x[:, 0]                                                         # (B, 28, 28)
    # im2col taps: taps[b, k, u, v] = img[b, u + di, v + dj], k = di*3 + dj
    taps = jnp.stack([img[:, di:di + 26, dj:dj + 26]
                      for di in range(3) for dj in range(3)], axis=1)     # (B, 9, 26, 26)
    # group by the 4 positions inside each 2x2 pool window; each offset gets an
    # aligned, zero-padded 256-lane slab so the kernel can do one conv dot per
    # row and unmasked full-vreg pool maxes.
    slabs = []
    for si in (0, 1):
        for ti in (0, 1):
            s = taps[:, :, si::2, ti::2].reshape(bsz, 9, POOL_POS)        # (B, 9, 169)
            slabs.append(jnp.pad(s, ((0, 0), (0, 0), (0, PAD_POS - POOL_POS))))
    p4 = jnp.concatenate(slabs, axis=2).astype(jnp.bfloat16)              # (B, 9, 1024)

    return pl.pallas_call(
        fused_forward_kernel,
        out_shape=jax.ShapeDtypeStruct((bsz, NCLS), jnp.float32),
        grid=(1,),                          # batch folded into the matmul M dim
        in_specs=[
            pl.BlockSpec((bsz, 9, 4 * PAD_POS), lambda i: (0, 0, 0)),
            pl.BlockSpec((C_OUT, 9), lambda i: (0, 0)),
            pl.BlockSpec((C_OUT, 1), lambda i: (0, 0)),
            pl.BlockSpec((C_OUT, POOL_POS, HID), lambda i: (0, 0, 0)),
            pl.BlockSpec((1, HID), lambda i: (0, 0)),
            pl.BlockSpec((HID, NCLS), lambda i: (0, 0)),
            pl.BlockSpec((1, NCLS), lambda i: (0, 0)),
        ],
        out_specs=pl.BlockSpec((bsz, NCLS), lambda i: (0, 0)),
        scratch_shapes=[pltpu.VMEM((C_OUT, bsz, POOL_POS), jnp.float32)],
        compiler_params=pltpu.CompilerParams(dimension_semantics=("arbitrary",)),
    )(p4, cw, cb, w1, b1, w2, b2f)


# ---------------------------------------------------------------------------
# Pure-JAX fp32 reference mirroring the ORIGINAL PyTorch forward (original
# weights, relu -> pool order, quantum scalar added to h before fc2).  This
# validates the bf16 quantization and the bias fold, not just the kernel glue.
# ---------------------------------------------------------------------------
def reference_forward(x, conv_w, conv_b, fc1_w, fc1_b, fc2_w, fc2_b, qsum):
    bsz = x.shape[0]
    img = x[:, 0]
    taps = jnp.stack([img[:, di:di + 26, dj:dj + 26]
                      for di in range(3) for dj in range(3)], axis=-1)    # (B, 26, 26, 9)
    conv = jnp.einsum('buvk,ck->bcuv', taps, conv_w.reshape(C_OUT, 9))
    conv = conv + conv_b.reshape(1, C_OUT, 1, 1)
    conv = jnp.maximum(conv, 0.0)                                         # ReLU
    pooled = jnp.max(conv.reshape(bsz, C_OUT, 13, 2, 13, 2), axis=(3, 5)) # MaxPool2d(2)
    feat = pooled.reshape(bsz, FLAT)                                      # c*169 + h*13 + w
    h = jnp.maximum(feat @ fc1_w.T + fc1_b, 0.0)
    h = h + qsum                                                          # x + q.sum()
    logits = h @ fc2_w.T + fc2_b
    return jax.nn.softmax(logits, axis=1)


if __name__ == "__main__":
    key = jax.random.PRNGKey(0)
    ks = jax.random.split(key, 8)

    # Deterministic parameter init (shapes from the module's __init__).
    conv_w = jax.random.normal(ks[0], (C_OUT, 1, 3, 3), jnp.float32) / 3.0
    conv_b = 0.1 * jax.random.normal(ks[1], (C_OUT,), jnp.float32)
    fc1_w = jax.random.normal(ks[2], (HID, FLAT), jnp.float32) / jnp.sqrt(float(FLAT))
    fc1_b = 0.1 * jax.random.normal(ks[3], (HID,), jnp.float32)
    fc2_w = jax.random.normal(ks[4], (NCLS, HID), jnp.float32) / jnp.sqrt(float(HID))
    fc2_b = 0.1 * jax.random.normal(ks[5], (NCLS,), jnp.float32)
    encoder_params = 0.01 * jax.random.normal(ks[6], (ENCODER_DEPTH, N_QUBITS, 3), jnp.float32)

    # Quantum circuit: exact statevector simulation -> x-independent scalar.
    qsum = float(sum(quantum_expvals(
        np.asarray(jax.device_get(encoder_params), dtype=np.float64))))

    # One-time weight prep (layouts, bf16 conv/fc1, quantum scalar folded into b2).
    params = prepare_params(conv_w, conv_b, fc1_w, fc1_b, fc2_w, fc2_b, qsum)

    # Input consistent with fc1 in_features=5408 -> (B, 1, 28, 28).
    x = jax.random.normal(ks[7], (B, 1, H_IN, W_IN), jnp.float32)

    out = jax.block_until_ready(quantum_convnet_forward(x, *params))
    ref = reference_forward(x, conv_w, conv_b, fc1_w, fc1_b, fc2_w, fc2_b, qsum)

    assert out.shape == (B, NCLS)
    assert bool(jnp.all(jnp.isfinite(out)))
    assert bool(jnp.allclose(jnp.sum(out, axis=1), 1.0, atol=1e-3))  # exact softmax norm
    assert bool(jnp.allclose(out, ref, atol=3e-2))                   # vs original fp32 semantics
    print("KERNEL_OK")
</pallas_src>

<mosaic_0001>
module attributes {stable_mosaic.version = 11 : i64} {
  func.func @fused_forward_kernel(%arg0: i32, %arg1: memref<2x9x1024xbf16, #tpu.memory_space<vmem>>, %arg2: memref<32x9xbf16, #tpu.memory_space<vmem>>, %arg3: memref<32x1xf32, #tpu.memory_space<vmem>>, %arg4: memref<32x169x128xbf16, #tpu.memory_space<vmem>>, %arg5: memref<1x128xf32, #tpu.memory_space<vmem>>, %arg6: memref<128x10xf32, #tpu.memory_space<vmem>>, %arg7: memref<1x10xf32, #tpu.memory_space<vmem>>, %arg8: memref<2x10xf32, #tpu.memory_space<vmem>>, %arg9: memref<32x2x169xf32, #tpu.memory_space<vmem>>) attributes {dimension_semantics = [#tpu.dimension_semantics<arbitrary>], iteration_bounds = array<i64: 1>, scalar_prefetch = 0 : i64, scratch_operands = 1 : i64, tpu.core_type = #tpu.core_type<tc>, window_params = [{pipeline_mode = #tpu.pipeline_mode<synchronous>, transform_indices = @transform_0, window_bounds = array<i64: 2, 9, 1024>}, {pipeline_mode = #tpu.pipeline_mode<synchronous>, transform_indices = @transform_1, window_bounds = array<i64: 32, 9>}, {pipeline_mode = #tpu.pipeline_mode<synchronous>, transform_indices = @transform_2, window_bounds = array<i64: 32, 1>}, {pipeline_mode = #tpu.pipeline_mode<synchronous>, transform_indices = @transform_3, window_bounds = array<i64: 32, 169, 128>}, {pipeline_mode = #tpu.pipeline_mode<synchronous>, transform_indices = @transform_4, window_bounds = array<i64: 1, 128>}, {pipeline_mode = #tpu.pipeline_mode<synchronous>, transform_indices = @transform_5, window_bounds = array<i64: 128, 10>}, {pipeline_mode = #tpu.pipeline_mode<synchronous>, transform_indices = @transform_6, window_bounds = array<i64: 1, 10>}, {pipeline_mode = #tpu.pipeline_mode<synchronous>, transform_indices = @transform_7, window_bounds = array<i64: 2, 10>}]} {
    %c0 = arith.constant 0 : index
    %c0_0 = arith.constant 0 : index
    %0 = vector.load %arg2[%c0, %c0_0] : memref<32x9xbf16, #tpu.memory_space<vmem>>, vector<32x9xbf16>
    %c0_1 = arith.constant 0 : index
    %c0_2 = arith.constant 0 : index
    %1 = vector.load %arg3[%c0_1, %c0_2] : memref<32x1xf32, #tpu.memory_space<vmem>>, vector<32x1xf32>
    %c0_3 = arith.constant 0 : index
    %c0_4 = arith.constant 0 : index
    %c0_5 = arith.constant 0 : index
    %2 = vector.load %arg1[%c0_3, %c0_4, %c0_5] : memref<2x9x1024xbf16, #tpu.memory_space<vmem>>, vector<1x9x1024xbf16>
    %3 = vector.shape_cast %2 : vector<1x9x1024xbf16> to vector<9x1024xbf16>
    %cst = arith.constant dense<0.000000e+00> : vector<32x1024xf32>
    %4 = tpu.matmul %0, %3, %cst {dimension_numbers = #tpu.dot_dimension_numbers<[1], [0], [0], [1], [0, 0, 1, 1], [], []>} : vector<32x9xbf16>, vector<9x1024xbf16>, vector<32x1024xf32> -> vector<32x1024xf32>
    %5 = vector.extract_strided_slice %4 {offsets = [0, 0], sizes = [32, 256], strides = [1, 1]} : vector<32x1024xf32> to vector<32x256xf32>
    %6 = vector.extract_strided_slice %4 {offsets = [0, 256], sizes = [32, 256], strides = [1, 1]} : vector<32x1024xf32> to vector<32x256xf32>
    %7 = arith.maximumf %5, %6 : vector<32x256xf32>
    %8 = vector.extract_strided_slice %4 {offsets = [0, 512], sizes = [32, 256], strides = [1, 1]} : vector<32x1024xf32> to vector<32x256xf32>
    %9 = vector.extract_strided_slice %4 {offsets = [0, 768], sizes = [32, 256], strides = [1, 1]} : vector<32x1024xf32> to vector<32x256xf32>
    %10 = arith.maximumf %8, %9 : vector<32x256xf32>
    %11 = arith.maximumf %7, %10 : vector<32x256xf32>
    %12 = vector.broadcast %1 : vector<32x1xf32> to vector<32x256xf32>
    %13 = arith.addf %11, %12 : vector<32x256xf32>
    %cst_6 = arith.constant 0.000000e+00 : f32
    %14 = vector.broadcast %cst_6 : f32 to vector<32x256xf32>
    %15 = arith.maximumf %13, %14 : vector<32x256xf32>
    %16 = vector.extract_strided_slice %15 {offsets = [0, 0], sizes = [32, 169], strides = [1, 1]} : vector<32x256xf32> to vector<32x169xf32>
    %c0_7 = arith.constant 0 : index
    %c0_8 = arith.constant 0 : index
    %c0_9 = arith.constant 0 : index
    %17 = vector.load %arg9[%c0_7, %c0_8, %c0_9] : memref<32x2x169xf32, #tpu.memory_space<vmem>>, vector<32x1x169xf32>
    %18 = vector.shape_cast %17 : vector<32x1x169xf32> to vector<32x169xf32>
    %19 = vector.shape_cast %16 : vector<32x169xf32> to vector<32x1x169xf32>
    tpu.vector_store %arg9[%c0_7, %c0_8, %c0_9], %19 {strides = array<i32>} : memref<32x2x169xf32, #tpu.memory_space<vmem>>, vector<32x1x169xf32>,
    %c1 = arith.constant 1 : index
    %c0_10 = arith.constant 0 : index
    %c0_11 = arith.constant 0 : index
    %20 = vector.load %arg1[%c1, %c0_10, %c0_11] : memref<2x9x1024xbf16, #tpu.memory_space<vmem>>, vector<1x9x1024xbf16>
    %21 = vector.shape_cast %20 : vector<1x9x1024xbf16> to vector<9x1024xbf16>
    %cst_12 = arith.constant dense<0.000000e+00> : vector<32x1024xf32>
    %22 = tpu.matmul %0, %21, %cst_12 {dimension_numbers = #tpu.dot_dimension_numbers<[1], [0], [0], [1], [0, 0, 1, 1], [], []>} : vector<32x9xbf16>, vector<9x1024xbf16>, vector<32x1024xf32> -> vector<32x1024xf32>
    %23 = vector.extract_strided_slice %22 {offsets = [0, 0], sizes = [32, 256], strides = [1, 1]} : vector<32x1024xf32> to vector<32x256xf32>
    %24 = vector.extract_strided_slice %22 {offsets = [0, 256], sizes = [32, 256], strides = [1, 1]} : vector<32x1024xf32> to vector<32x256xf32>
    %25 = arith.maximumf %23, %24 : vector<32x256xf32>
    %26 = vector.extract_strided_slice %22 {offsets = [0, 512], sizes = [32, 256], strides = [1, 1]} : vector<32x1024xf32> to vector<32x256xf32>
    %27 = vector.extract_strided_slice %22 {offsets = [0, 768], sizes = [32, 256], strides = [1, 1]} : vector<32x1024xf32> to vector<32x256xf32>
    %28 = arith.maximumf %26, %27 : vector<32x256xf32>
    %29 = arith.maximumf %25, %28 : vector<32x256xf32>
    %30 = vector.broadcast %1 : vector<32x1xf32> to vector<32x256xf32>
    %31 = arith.addf %29, %30 : vector<32x256xf32>
    %cst_13 = arith.constant 0.000000e+00 : f32
    %32 = vector.broadcast %cst_13 : f32 to vector<32x256xf32>
    %33 = arith.maximumf %31, %32 : vector<32x256xf32>
    %34 = vector.extract_strided_slice %33 {offsets = [0, 0], sizes = [32, 169], strides = [1, 1]} : vector<32x256xf32> to vector<32x169xf32>
    %c0_14 = arith.constant 0 : index
    %c1_15 = arith.constant 1 : index
    %c0_16 = arith.constant 0 : index
    %35 = vector.load %arg9[%c0_14, %c1_15, %c0_16] : memref<32x2x169xf32, #tpu.memory_space<vmem>>, vector<32x1x169xf32>
    %36 = vector.shape_cast %35 : vector<32x1x169xf32> to vector<32x169xf32>
    %37 = vector.shape_cast %34 : vector<32x169xf32> to vector<32x1x169xf32>
    tpu.vector_store %arg9[%c0_14, %c1_15, %c0_16], %37 {strides = array<i32>} : memref<32x2x169xf32, #tpu.memory_space<vmem>>, vector<32x1x169xf32>,
    %c0_17 = arith.constant 0 : index
    %c0_18 = arith.constant 0 : index
    %c0_19 = arith.constant 0 : index
    %38 = vector.load %arg9[%c0_17, %c0_18, %c0_19] : memref<32x2x169xf32, #tpu.memory_space<vmem>>, vector<32x2x169xf32>
    %39 = arith.truncf %38 : vector<32x2x169xf32> to vector<32x2x169xbf16>
    %c0_20 = arith.constant 0 : index
    %c0_21 = arith.constant 0 : index
    %c0_22 = arith.constant 0 : index
    %40 = vector.load %arg4[%c0_20, %c0_21, %c0_22] : memref<32x169x128xbf16, #tpu.memory_space<vmem>>, vector<32x169x128xbf16>
    %cst_23 = arith.constant dense<0.000000e+00> : vector<32x2x128xf32>
    %41 = tpu.matmul %39, %40, %cst_23 {dimension_numbers = #tpu.dot_dimension_numbers<[2], [1], [1], [2], [0, 0, 0, 1, 1, 2], [0], [0]>} : vector<32x2x169xbf16>, vector<32x169x128xbf16>, vector<32x2x128xf32> -> vector<32x2x128xf32>
    %cst_24 = arith.constant dense<0.000000e+00> : vector<2x128xf32>
    %42 = vector.multi_reduction <add>, %41, %cst_24 [0] : vector<32x2x128xf32> to vector<2x128xf32>
    %c0_25 = arith.constant 0 : index
    %c0_26 = arith.constant 0 : index
    %43 = vector.load %arg5[%c0_25, %c0_26] : memref<1x128xf32, #tpu.memory_space<vmem>>, vector<1x128xf32>
    %44 = vector.broadcast %43 : vector<1x128xf32> to vector<2x128xf32>
    %45 = arith.addf %42, %44 : vector<2x128xf32>
    %cst_27 = arith.constant 0.000000e+00 : f32
    %46 = vector.broadcast %cst_27 : f32 to vector<2x128xf32>
    %47 = arith.maximumf %45, %46 : vector<2x128xf32>
    %c0_28 = arith.constant 0 : index
    %c0_29 = arith.constant 0 : index
    %48 = vector.load %arg6[%c0_28, %c0_29] : memref<128x10xf32, #tpu.memory_space<vmem>>, vector<128x10xf32>
    %cst_30 = arith.constant dense<0.000000e+00> : vector<2x10xf32>
    %49 = tpu.matmul %47, %48, %cst_30 {dimension_numbers = #tpu.dot_dimension_numbers<[1], [0], [0], [1], [0, 0, 1, 1], [], []>} : vector<2x128xf32>, vector<128x10xf32>, vector<2x10xf32> -> vector<2x10xf32>
    %c0_31 = arith.constant 0 : index
    %c0_32 = arith.constant 0 : index
    %50 = vector.load %arg7[%c0_31, %c0_32] : memref<1x10xf32, #tpu.memory_space<vmem>>, vector<1x10xf32>
    %51 = vector.broadcast %50 : vector<1x10xf32> to vector<2x10xf32>
    %52 = arith.addf %49, %51 : vector<2x10xf32>
    %cst_33 = arith.constant dense<0xFF800000> : vector<2xf32>
    %53 = vector.multi_reduction <maximumf>, %52, %cst_33 [1] : vector<2x10xf32> to vector<2xf32>
    %54 = vector.shape_cast %53 : vector<2xf32> to vector<2x1xf32>
    %55 = vector.broadcast %54 : vector<2x1xf32> to vector<2x10xf32>
    %56 = arith.subf %52, %55 : vector<2x10xf32>
    %57 = math.exp %56 : vector<2x10xf32>
    %cst_34 = arith.constant dense<0.000000e+00> : vector<2xf32>
    %58 = vector.multi_reduction <add>, %57, %cst_34 [1] : vector<2x10xf32> to vector<2xf32>
    %59 = vector.shape_cast %58 : vector<2xf32> to vector<2x1xf32>
    %60 = vector.broadcast %59 : vector<2x1xf32> to vector<2x10xf32>
    %61 = arith.divf %57, %60 : vector<2x10xf32>
    %c0_35 = arith.constant 0 : index
    %c0_36 = arith.constant 0 : index
    %62 = vector.load %arg8[%c0_35, %c0_36] : memref<2x10xf32, #tpu.memory_space<vmem>>, vector<2x10xf32>
    tpu.vector_store %arg8[%c0_35, %c0_36], %61 {strides = array<i32>} : memref<2x10xf32, #tpu.memory_space<vmem>>, vector<2x10xf32>,
    return
  }
  func.func @transform_0(%arg0: i32) -> (i32, i32, i32) {
    %c0_i32 = arith.constant 0 : i32
    %c0_i32_0 = arith.constant 0 : i32
    %c0_i32_1 = arith.constant 0 : i32
    %c0_i32_2 = arith.constant 0 : i32
    return %c0_i32, %c0_i32_0, %c0_i32_1 : i32, i32, i32
  }
  func.func @transform_1(%arg0: i32) -> (i32, i32) {
    %c0_i32 = arith.constant 0 : i32
    %c0_i32_0 = arith.constant 0 : i32
    %c0_i32_1 = arith.constant 0 : i32
    return %c0_i32, %c0_i32_0 : i32, i32
  }
  func.func @transform_2(%arg0: i32) -> (i32, i32) {
    %c0_i32 = arith.constant 0 : i32
    %c0_i32_0 = arith.constant 0 : i32
    %c0_i32_1 = arith.constant 0 : i32
    return %c0_i32, %c0_i32_0 : i32, i32
  }
  func.func @transform_3(%arg0: i32) -> (i32, i32, i32) {
    %c0_i32 = arith.constant 0 : i32
    %c0_i32_0 = arith.constant 0 : i32
    %c0_i32_1 = arith.constant 0 : i32
    %c0_i32_2 = arith.constant 0 : i32
    return %c0_i32, %c0_i32_0, %c0_i32_1 : i32, i32, i32
  }
  func.func @transform_4(%arg0: i32) -> (i32, i32) {
    %c0_i32 = arith.constant 0 : i32
    %c0_i32_0 = arith.constant 0 : i32
    %c0_i32_1 = arith.constant 0 : i32
    return %c0_i32, %c0_i32_0 : i32, i32
  }
  func.func @transform_5(%arg0: i32) -> (i32, i32) {
    %c0_i32 = arith.constant 0 : i32
    %c0_i32_0 = arith.constant 0 : i32
    %c0_i32_1 = arith.constant 0 : i32
    return %c0_i32, %c0_i32_0 : i32, i32
  }
  func.func @transform_6(%arg0: i32) -> (i32, i32) {
    %c0_i32 = arith.constant 0 : i32
    %c0_i32_0 = arith.constant 0 : i32
    %c0_i32_1 = arith.constant 0 : i32
    return %c0_i32, %c0_i32_0 : i32, i32
  }
  func.func @transform_7(%arg0: i32) -> (i32, i32) {
    %c0_i32 = arith.constant 0 : i32
    %c0_i32_0 = arith.constant 0 : i32
    %c0_i32_1 = arith.constant 0 : i32
    return %c0_i32, %c0_i32_0 : i32, i32
  }
}

</mosaic_0001>

<llo_original>
// kernel: quantum_convnet_forward.1
$region0: #{quantum_convnet_forward.1}
  #allocation0 [shape = 'u32[]', space=smem, size = 0x4, offset = 0x4, fixed_abs, tag = 'smem constant byte address 0x4 - core index']
  #allocation1 [shape = 'u32[144,128]{1,0:T(1,128)}', space=vmem, size = 0x12000, scoped, tag = 'internal scratch']
  #allocation2 [shape = 'f32[32,2,169]{2,1,0:T(2,128)}', space=vmem, size = 0x10000, scoped, tag = 'scratch operand']
  %s0 = inlined_call_operand.vmem [shape: bf16[2,9,1024], index: 0, kind: input, shape index: {}]
  %s1 = inlined_call_operand.vmem [shape: bf16[32,9], index: 1, kind: input, shape index: {}]
  %s2 = inlined_call_operand.vmem [shape: f32[32,1], index: 2, kind: input, shape index: {}]
  %s3 = inlined_call_operand.vmem [shape: bf16[32,169,128], index: 3, kind: input, shape index: {}]
  %s4 = inlined_call_operand.vmem [shape: f32[1,128], index: 4, kind: input, shape index: {}]
  %s5 = inlined_call_operand.vmem [shape: f32[128,10], index: 5, kind: input, shape index: {}]
  %s6 = inlined_call_operand.vmem [shape: f32[1,10], index: 6, kind: input, shape index: {}]
  %s7 = inlined_call_operand.hbm [shape: f32[2,10], index: 7, kind: output, shape index: {}]
  %s8 = sld [smem:[#allocation0]]
  $region38: #{quantum_convnet_forward.1} parent=0
    _
  %s10 = ssub.s32 1, %s8
  %s11 = scalar_select 0, %s10, %s8
  $region1: #{quantum_convnet_forward.1} parent=0
    #allocation3 [shape = 'u8[1024]{0}', space=vmem, size = 0x400, scoped, tag = 'output window, operand 0, single buffered']
    #allocation4 [shape = 's32[1]{0}', space=sflag, size = 0x4, scoped, tag = 'scoped memory for quantum_convnet_forward.1']
    %12 = vsyncpa [#allocation4], 0
    // Predicated region
    $region2: #{quantum_convnet_forward.1} parent=1 // pred_check
      _
    $region3: #{quantum_convnet_forward.1} parent=1 // pred_check_branch
      %14 = sbr.rel (0) target = $region5
    $region4: #{quantum_convnet_forward.1} parent=1 // pred_region
      _
    $region5: #{quantum_convnet_forward.1} parent=1 // pred_fallthru
      _
    // Predicated region
    $region6: #{quantum_convnet_forward.1} parent=1 // pred_check
      _
    $region7: #{quantum_convnet_forward.1} parent=1 // pred_check_branch
      %16 = sbr.rel (0) target = $region9
    $region8: #{quantum_convnet_forward.1} parent=1 // pred_region
      _
    $region9: #{quantum_convnet_forward.1} parent=1 // pred_fallthru
      _
    // Predicated region
    $region10: #{quantum_convnet_forward.1} parent=1 // pred_check
      _
    $region11: #{quantum_convnet_forward.1} parent=1 // pred_check_branch
      %18 = sbr.rel (0) target = $region13
    $region12: #{quantum_convnet_forward.1} parent=1 // pred_region
      _
    $region13: #{quantum_convnet_forward.1} parent=1 // pred_fallthru
      _
    // Predicated region
    $region14: #{quantum_convnet_forward.1} parent=1 // pred_check
      _
    $region15: #{quantum_convnet_forward.1} parent=1 // pred_check_branch
      %20 = sbr.rel (0) target = $region17
    $region16: #{quantum_convnet_forward.1} parent=1 // pred_region
      _
    $region17: #{quantum_convnet_forward.1} parent=1 // pred_fallthru
      _
    // Predicated region
    $region18: #{quantum_convnet_forward.1} parent=1 // pred_check
      _
    $region19: #{quantum_convnet_forward.1} parent=1 // pred_check_branch
      %22 = sbr.rel (0) target = $region21
    $region20: #{quantum_convnet_forward.1} parent=1 // pred_region
      _
    $region21: #{quantum_convnet_forward.1} parent=1 // pred_fallthru
      _
    // Predicated region
    $region22: #{quantum_convnet_forward.1} parent=1 // pred_check
      _
    $region23: #{quantum_convnet_forward.1} parent=1 // pred_check_branch
      %24 = sbr.rel (0) target = $region25
    $region24: #{quantum_convnet_forward.1} parent=1 // pred_region
      _
    $region25: #{quantum_convnet_forward.1} parent=1 // pred_fallthru
      _
    // Predicated region
    $region26: #{quantum_convnet_forward.1} parent=1 // pred_check
      _
    $region27: #{quantum_convnet_forward.1} parent=1 // pred_check_branch
      %26 = sbr.rel (0) target = $region29
    $region28: #{quantum_convnet_forward.1} parent=1 // pred_region
      _
    $region29: #{quantum_convnet_forward.1} parent=1 // pred_fallthru
      _
    %v28 = vld [vmem:[%s1] sm:$0xf]
    %v29 = vld [vmem:[%s1 + $0x4] sm:$0xf]
    %v30 = vld [vmem:[%s1 + $0x8] sm:$0xf]
    %v31 = vld [vmem:[%s1 + $0xc] sm:$0xf]
    %v32 = vld [vmem:[%s2] sm:$0xff]
    %v33 = vld [vmem:[%s2 + $0x8] sm:$0xff]
    %v34 = vld [vmem:[%s2 + $0x10] sm:$0xff]
    %v35 = vld [vmem:[%s2 + $0x18] sm:$0xff]
    %v36 = vld [vmem:[%s0] sm:$0xff]
    %v37 = vld [vmem:[%s0 + $0x8] sm:$0xff]
    %v38 = vld [vmem:[%s0 + $0x10] sm:$0xff]
    %v39 = vld [vmem:[%s0 + $0x18] sm:$0xff]
    %v40 = vld [vmem:[%s0 + $0x20] sm:$0x11]
    %v41 = vld [vmem:[%s0 + $0x28] sm:$0x11]
    %v42 = vld [vmem:[%s0 + $0x30] sm:$0x11]
    %v43 = vld [vmem:[%s0 + $0x38] sm:$0x11]
    %v48 = vunpack.c.l.b16 %v28
    %v49 = vunpack.c.l.b16 %v29
    %v50 = vunpack.c.l.b16 %v30
    %v51 = vunpack.c.l.b16 %v31
    %v52 = vpack.c.b16 %v49, %v48
    %v53 = vpack.c.b16 %v51, %v50
    %v62 = vunpack.c.l.b16 %v36
    %v63 = vunpack.c.h.b16 %v36
    %v64 = vunpack.c.l.b16 %v37
    %v65 = vunpack.c.h.b16 %v37
    %v66 = vunpack.c.l.b16 %v38
    %v67 = vunpack.c.h.b16 %v38
    %v68 = vunpack.c.l.b16 %v39
    %v69 = vunpack.c.h.b16 %v39
    %v70 = vunpack.c.l.b16 %v40
    %v71 = vunpack.c.h.b16 %v40
    %v72 = vunpack.c.l.b16 %v41
    %v73 = vunpack.c.h.b16 %v41
    %v74 = vunpack.c.l.b16 %v42
    %v75 = vunpack.c.h.b16 %v42
    %v76 = vunpack.c.l.b16 %v43
    %v77 = vunpack.c.h.b16 %v43
    %v78 = vpack.c.b16 %v70, %v62
    %v79 = vpack.c.b16 %v71, %v63
    %v80 = vpack.c.b16 %v72, %v64
    %v81 = vpack.c.b16 %v73, %v65
    %v82 = vpack.c.b16 %v74, %v66
    %v83 = vpack.c.b16 %v75, %v67
    %v84 = vpack.c.b16 %v76, %v68
    %v85 = vpack.c.b16 %v77, %v69
    %vm86 = vcmask 72704
    %v88 = vsel %vm86, %v52, 0
    %v91 = vsel %vm86, %v53, 0
    %vm93 = vcmask 1043456
    %vm94 = vcmask 1044480
    %v95 = vsel %vm93, 4294967295, 65535
    %v96 = vsel %vm94, %v95, 0
    %v98 = vand.u32 %v78, %v96
    %v101 = vand.u32 %v79, %v96
    %v104 = vand.u32 %v80, %v96
    %v107 = vand.u32 %v81, %v96
    %v110 = vand.u32 %v82, %v96
    %v113 = vand.u32 %v83, %v96
    %v116 = vand.u32 %v84, %v96
    %v119 = vand.u32 %v85, %v96
    %121 = vmatprep.subr.bf16.mxu0 0
    %122 = vmatpush1.bf16.msra.mxu0 0
    %123 = vmatprep.subr.bf16.mxu0 0
    %124 = vmatpush1.bf16.msra.mxu0 0
    %125 = vmatprep.subr.bf16.mxu0 0
    %126 = vmatpush1.bf16.msra.mxu0 0
    %127 = vmatprep.subr.bf16.mxu0 0
    %128 = vmatpush1.bf16.msra.mxu0 0
    %129 = vmatprep.subr.bf16.mxu0 0
    %130 = vmatpush1.bf16.msra.mxu0 0
    %131 = vmatprep.subr.bf16.mxu0 0
    %132 = vmatpush1.bf16.msra.mxu0 0
    %133 = vmatprep.subr.bf16.mxu0 0
    %134 = vmatpush1.bf16.msra.mxu0 0
    %135 = vmatprep.subr.bf16.mxu0 %v101
    %136 = vmatpush1.bf16.msra.mxu0 %v98
    %137 = vmatprep.subr.bf16.mxu0 0
    %138 = vmatpush2.bf16.msra.mxu0 0
    %139 = vmatprep.subr.bf16.mxu0 0
    %140 = vmatpush2.bf16.msra.mxu0 0
    %141 = vmatprep.subr.bf16.mxu0 0
    %142 = vmatpush2.bf16.msra.mxu0 0
    %143 = vmatprep.subr.bf16.mxu0 0
    %144 = vmatpush2.bf16.msra.mxu0 0
    %145 = vmatprep.subr.bf16.mxu0 0
    %146 = vmatpush2.bf16.msra.mxu0 0
    %147 = vmatprep.subr.bf16.mxu0 0
    %148 = vmatpush2.bf16.msra.mxu0 0
    %149 = vmatprep.subr.bf16.mxu0 0
    %150 = vmatpush2.bf16.msra.mxu0 0
    %151 = vmatprep.subr.bf16.mxu0 0
    %152 = vmatpush2.bf16.msra.mxu0 0
    %153 = vmatprep.mubr.bf16.mxu0 0
    %154 = vmatmul.mubr.bf16.gmra.mxu0 %v88
    %v155 = vpop.f32.mrf.mxu0
    %v156 = vadd.f32 0.0, %v155
    %v157 = vpop.f32.mrf.mxu0
    %v158 = vadd.f32 0.0, %v157
    %v159 = vpop.f32.mrf.mxu0
    %v160 = vadd.f32 0.0, %v159
    %v161 = vpop.f32.mrf.mxu0
    %v162 = vadd.f32 0.0, %v161
    %163 = vmatprep.mubr.bf16.mxu0 0
    %164 = vmatmul.mubr.bf16.gmra.mxu0 %v91
    %v165 = vpop.f32.mrf.mxu0
    %v166 = vadd.f32 0.0, %v165
    %v167 = vpop.f32.mrf.mxu0
    %v168 = vadd.f32 0.0, %v167
    %v169 = vpop.f32.mrf.mxu0
    %v170 = vadd.f32 0.0, %v169
    %v171 = vpop.f32.mrf.mxu0
    %v172 = vadd.f32 0.0, %v171
    %173 = vdwg.mxu0
    %174 = vmatprep.subr.bf16.mxu0 0
    %175 = vmatpush1.bf16.msra.mxu0 0
    %176 = vmatprep.subr.bf16.mxu0 0
    %177 = vmatpush1.bf16.msra.mxu0 0
    %178 = vmatprep.subr.bf16.mxu0 0
    %179 = vmatpush1.bf16.msra.mxu0 0
    %180 = vmatprep.subr.bf16.mxu0 0
    %181 = vmatpush1.bf16.msra.mxu0 0
    %182 = vmatprep.subr.bf16.mxu0 0
    %183 = vmatpush1.bf16.msra.mxu0 0
    %184 = vmatprep.subr.bf16.mxu0 0
    %185 = vmatpush1.bf16.msra.mxu0 0
    %186 = vmatprep.subr.bf16.mxu0 0
    %187 = vmatpush1.bf16.msra.mxu0 0
    %188 = vmatprep.subr.bf16.mxu0 %v107
    %189 = vmatpush1.bf16.msra.mxu0 %v104
    %190 = vmatprep.subr.bf16.mxu0 0
    %191 = vmatpush2.bf16.msra.mxu0 0
    %192 = vmatprep.subr.bf16.mxu0 0
    %193 = vmatpush2.bf16.msra.mxu0 0
    %194 = vmatprep.subr.bf16.mxu0 0
    %195 = vmatpush2.bf16.msra.mxu0 0
    %196 = vmatprep.subr.bf16.mxu0 0
    %197 = vmatpush2.bf16.msra.mxu0 0
    %198 = vmatprep.subr.bf16.mxu0 0
    %199 = vmatpush2.bf16.msra.mxu0 0
    %200 = vmatprep.subr.bf16.mxu0 0
    %201 = vmatpush2.bf16.msra.mxu0 0
    %202 = vmatprep.subr.bf16.mxu0 0
    %203 = vmatpush2.bf16.msra.mxu0 0
    %204 = vmatprep.subr.bf16.mxu0 0
    %205 = vmatpush2.bf16.msra.mxu0 0
    %206 = vmatprep.mubr.bf16.mxu0 0
    %207 = vmatmul.mubr.bf16.gmra.mxu0 %v88
    %v208 = vpop.f32.mrf.mxu0
    %v209 = vadd.f32 0.0, %v208
    %v210 = vpop.f32.mrf.mxu0
    %v211 = vadd.f32 0.0, %v210
    %v212 = vpop.f32.mrf.mxu0
    %v213 = vadd.f32 0.0, %v212
    %v214 = vpop.f32.mrf.mxu0
    %v215 = vadd.f32 0.0, %v214
    %216 = vmatprep.mubr.bf16.mxu0 0
    %217 = vmatmul.mubr.bf16.gmra.mxu0 %v91
    %v218 = vpop.f32.mrf.mxu0
    %v219 = vadd.f32 0.0, %v218
    %v220 = vpop.f32.mrf.mxu0
    %v221 = vadd.f32 0.0, %v220
    %v222 = vpop.f32.mrf.mxu0
    %v223 = vadd.f32 0.0, %v222
    %v224 = vpop.f32.mrf.mxu0
    %v225 = vadd.f32 0.0, %v224
    %226 = vdwg.mxu0
    %227 = vmatprep.subr.bf16.mxu0 0
    %228 = vmatpush1.bf16.msra.mxu0 0
    %229 = vmatprep.subr.bf16.mxu0 0
    %230 = vmatpush1.bf16.msra.mxu0 0
    %231 = vmatprep.subr.bf16.mxu0 0
    %232 = vmatpush1.bf16.msra.mxu0 0
    %233 = vmatprep.subr.bf16.mxu0 0
    %234 = vmatpush1.bf16.msra.mxu0 0
    %235 = vmatprep.subr.bf16.mxu0 0
    %236 = vmatpush1.bf16.msra.mxu0 0
    %237 = vmatprep.subr.bf16.mxu0 0
    %238 = vmatpush1.bf16.msra.mxu0 0
    %239 = vmatprep.subr.bf16.mxu0 0
    %240 = vmatpush1.bf16.msra.mxu0 0
    %241 = vmatprep.subr.bf16.mxu0 %v113
    %242 = vmatpush1.bf16.msra.mxu0 %v110
    %243 = vmatprep.subr.bf16.mxu0 0
    %244 = vmatpush2.bf16.msra.mxu0 0
    %245 = vmatprep.subr.bf16.mxu0 0
    %246 = vmatpush2.bf16.msra.mxu0 0
    %247 = vmatprep.subr.bf16.mxu0 0
    %248 = vmatpush2.bf16.msra.mxu0 0
    %249 = vmatprep.subr.bf16.mxu0 0
    %250 = vmatpush2.bf16.msra.mxu0 0
    %251 = vmatprep.subr.bf16.mxu0 0
    %252 = vmatpush2.bf16.msra.mxu0 0
    %253 = vmatprep.subr.bf16.mxu0 0
    %254 = vmatpush2.bf16.msra.mxu0 0
    %255 = vmatprep.subr.bf16.mxu0 0
    %256 = vmatpush2.bf16.msra.mxu0 0
    %257 = vmatprep.subr.bf16.mxu0 0
    %258 = vmatpush2.bf16.msra.mxu0 0
    %259 = vmatprep.mubr.bf16.mxu0 0
    %260 = vmatmul.mubr.bf16.gmra.mxu0 %v88
    %v261 = vpop.f32.mrf.mxu0
    %v262 = vadd.f32 0.0, %v261
    %v263 = vpop.f32.mrf.mxu0
    %v264 = vadd.f32 0.0, %v263
    %v265 = vpop.f32.mrf.mxu0
    %v266 = vadd.f32 0.0, %v265
    %v267 = vpop.f32.mrf.mxu0
    %v268 = vadd.f32 0.0, %v267
    %269 = vmatprep.mubr.bf16.mxu0 0
    %270 = vmatmul.mubr.bf16.gmra.mxu0 %v91
    %v271 = vpop.f32.mrf.mxu0
    %v272 = vadd.f32 0.0, %v271
    %v273 = vpop.f32.mrf.mxu0
    %v274 = vadd.f32 0.0, %v273
    %v275 = vpop.f32.mrf.mxu0
    %v276 = vadd.f32 0.0, %v275
    %v277 = vpop.f32.mrf.mxu0
    %v278 = vadd.f32 0.0, %v277
    %279 = vdwg.mxu0
    %280 = vmatprep.subr.bf16.mxu0 0
    %281 = vmatpush1.bf16.msra.mxu0 0
    %282 = vmatprep.subr.bf16.mxu0 0
    %283 = vmatpush1.bf16.msra.mxu0 0
    %284 = vmatprep.subr.bf16.mxu0 0
    %285 = vmatpush1.bf16.msra.mxu0 0
    %286 = vmatprep.subr.bf16.mxu0 0
    %287 = vmatpush1.bf16.msra.mxu0 0
    %288 = vmatprep.subr.bf16.mxu0 0
    %289 = vmatpush1.bf16.msra.mxu0 0
    %290 = vmatprep.subr.bf16.mxu0 0
    %291 = vmatpush1.bf16.msra.mxu0 0
    %292 = vmatprep.subr.bf16.mxu0 0
    %293 = vmatpush1.bf16.msra.mxu0 0
    %294 = vmatprep.subr.bf16.mxu0 %v119
    %295 = vmatpush1.bf16.msra.mxu0 %v116
    %296 = vmatprep.subr.bf16.mxu0 0
    %297 = vmatpush2.bf16.msra.mxu0 0
    %298 = vmatprep.subr.bf16.mxu0 0
    %299 = vmatpush2.bf16.msra.mxu0 0
    %300 = vmatprep.subr.bf16.mxu0 0
    %301 = vmatpush2.bf16.msra.mxu0 0
    %302 = vmatprep.subr.bf16.mxu0 0
    %303 = vmatpush2.bf16.msra.mxu0 0
    %304 = vmatprep.subr.bf16.mxu0 0
    %305 = vmatpush2.bf16.msra.mxu0 0
    %306 = vmatprep.subr.bf16.mxu0 0
    %307 = vmatpush2.bf16.msra.mxu0 0
    %308 = vmatprep.subr.bf16.mxu0 0
    %309 = vmatpush2.bf16.msra.mxu0 0
    %310 = vmatprep.subr.bf16.mxu0 0
    %311 = vmatpush2.bf16.msra.mxu0 0
    %312 = vmatprep.mubr.bf16.mxu0 0
    %313 = vmatmul.mubr.bf16.gmra.mxu0 %v88
    %v314 = vpop.f32.mrf.mxu0
    %v315 = vadd.f32 0.0, %v314
    %v316 = vpop.f32.mrf.mxu0
    %v317 = vadd.f32 0.0, %v316
    %v318 = vpop.f32.mrf.mxu0
    %v319 = vadd.f32 0.0, %v318
    %v320 = vpop.f32.mrf.mxu0
    %v321 = vadd.f32 0.0, %v320
    %322 = vmatprep.mubr.bf16.mxu0 0
    %323 = vmatmul.mubr.bf16.gmra.mxu0 %v91
    %v324 = vpop.f32.mrf.mxu0
    %v325 = vadd.f32 0.0, %v324
    %v326 = vpop.f32.mrf.mxu0
    %v327 = vadd.f32 0.0, %v326
    %v328 = vpop.f32.mrf.mxu0
    %v329 = vadd.f32 0.0, %v328
    %v330 = vpop.f32.mrf.mxu0
    %v331 = vadd.f32 0.0, %v330
    %332 = vdwg.mxu0
    %v333 = vmax.f32 %v156, %v209
    %v334 = vmax.f32 %v158, %v211
    %v335 = vmax.f32 %v160, %v213
    %v336 = vmax.f32 %v162, %v215
    %v337 = vmax.f32 %v166, %v219
    %v338 = vmax.f32 %v168, %v221
    %v339 = vmax.f32 %v170, %v223
    %v340 = vmax.f32 %v172, %v225
    %v341 = vmax.f32 %v262, %v315
    %v342 = vmax.f32 %v264, %v317
    %v343 = vmax.f32 %v266, %v319
    %v344 = vmax.f32 %v268, %v321
    %v345 = vmax.f32 %v272, %v325
    %v346 = vmax.f32 %v274, %v327
    %v347 = vmax.f32 %v276, %v329
    %v348 = vmax.f32 %v278, %v331
    %v349 = vmax.f32 %v333, %v341
    %v350 = vmax.f32 %v334, %v342
    %v351 = vmax.f32 %v335, %v343
    %v352 = vmax.f32 %v336, %v344
    %v353 = vmax.f32 %v337, %v345
    %v354 = vmax.f32 %v338, %v346
    %v355 = vmax.f32 %v339, %v347
    %v356 = vmax.f32 %v340, %v348
    %358 = vset.pattern.permute.xlu0 0
    %359 = vperm.xlu0 %358, %v32
    %v360 = vpop.permute.xlu0 %359
    %363 = vset.pattern.permute.xlu0 0
    %364 = vperm.xlu0 %363, %v33
    %v365 = vpop.permute.xlu0 %364
    %368 = vset.pattern.permute.xlu0 0
    %369 = vperm.xlu0 %368, %v34
    %v370 = vpop.permute.xlu0 %369
    %373 = vset.pattern.permute.xlu0 0
    %374 = vperm.xlu0 %373, %v35
    %v375 = vpop.permute.xlu0 %374
    %v377 = vadd.f32 %v349, %v360
    %v378 = vadd.f32 %v350, %v360
    %v379 = vadd.f32 %v351, %v365
    %v380 = vadd.f32 %v352, %v365
    %v381 = vadd.f32 %v353, %v370
    %v382 = vadd.f32 %v354, %v370
    %v383 = vadd.f32 %v355, %v375
    %v384 = vadd.f32 %v356, %v375
    %v385 = vmax.f32 %v377, 0.0
    %v386 = vmax.f32 %v378, 0.0
    %v387 = vmax.f32 %v379, 0.0
    %v388 = vmax.f32 %v380, 0.0
    %v389 = vmax.f32 %v381, 0.0
    %v390 = vmax.f32 %v382, 0.0
    %v391 = vmax.f32 %v383, 0.0
    %v392 = vmax.f32 %v384, 0.0
    %v401 = vcombine.low %v385, %v386
    %v402 = vcombine.high %v385, %v386
    %v404 = vunpack.c.l.s4 1966171168
    %v405 = vunpack.c.0.s8 %v404
    %v406 = vlaneseq
    %v407 = vshrl.u32 %v406, 7
    %v408 = vsub.s32 %v405, %v407
    %v409 = vrot.slane %v401, %v408
    %v411 = vunpack.c.l.s4 1966171168
    %v412 = vunpack.c.0.s8 %v411
    %v413 = vlaneseq
    %v414 = vshrl.u32 %v413, 7
    %v415 = vsub.s32 %v412, %v414
    %v416 = vrot.slane %v402, %v415
    %v417 = vcombine.high %v409, %v409
    %v418 = vcombine.high %v416, %v416
    %v420 = vunpack.c.l.s4 1966171168
    %v421 = vunpack.c.0.s8 %v420
    %v422 = vlaneseq
    %v423 = vshrl.u32 %v422, 7
    %v424 = vsub.s32 %v421, %v423
    %v425 = vrot.slane %v409, %v424
    %v427 = vunpack.c.l.s4 1966171168
    %v428 = vunpack.c.0.s8 %v427
    %v429 = vlaneseq
    %v430 = vshrl.u32 %v429, 7
    %v431 = vsub.s32 %v428, %v430
    %v432 = vrot.slane %v416, %v431
    %v434 = vunpack.c.l.s4 1966171168
    %v435 = vunpack.c.0.s8 %v434
    %v436 = vlaneseq
    %v437 = vshrl.u32 %v436, 7
    %v438 = vsub.s32 %v435, %v437
    %v439 = vrot.slane %v417, %v438
    %v441 = vunpack.c.l.s4 1966171168
    %v442 = vunpack.c.0.s8 %v441
    %v443 = vlaneseq
    %v444 = vshrl.u32 %v443, 7
    %v445 = vsub.s32 %v442, %v444
    %v446 = vrot.slane %v418, %v445
    %v447 = vcombine.high %v425, %v425
    %v448 = vcombine.high %v432, %v432
    %v449 = vcombine.high %v439, %v439
    %v450 = vcombine.high %v446, %v446
    %v451 = vcombine.low %v387, %v388
    %v452 = vcombine.high %v387, %v388
    %v454 = vunpack.c.l.s4 1966171168
    %v455 = vunpack.c.0.s8 %v454
    %v456 = vlaneseq
    %v457 = vshrl.u32 %v456, 7
    %v458 = vsub.s32 %v455, %v457
    %v459 = vrot.slane %v451, %v458
    %v461 = vunpack.c.l.s4 1966171168
    %v462 = vunpack.c.0.s8 %v461
    %v463 = vlaneseq
    %v464 = vshrl.u32 %v463, 7
    %v465 = vsub.s32 %v462, %v464
    %v466 = vrot.slane %v452, %v465
    %v467 = vcombine.high %v459, %v459
    %v468 = vcombine.high %v466, %v466
    %v470 = vunpack.c.l.s4 1966171168
    %v471 = vunpack.c.0.s8 %v470
    %v472 = vlaneseq
    %v473 = vshrl.u32 %v472, 7
    %v474 = vsub.s32 %v471, %v473
    %v475 = vrot.slane %v459, %v474
    %v477 = vunpack.c.l.s4 1966171168
    %v478 = vunpack.c.0.s8 %v477
    %v479 = vlaneseq
    %v480 = vshrl.u32 %v479, 7
    %v481 = vsub.s32 %v478, %v480
    %v482 = vrot.slane %v466, %v481
    %v484 = vunpack.c.l.s4 1966171168
    %v485 = vunpack.c.0.s8 %v484
    %v486 = vlaneseq
    %v487 = vshrl.u32 %v486, 7
    %v488 = vsub.s32 %v485, %v487
    %v489 = vrot.slane %v467, %v488
    %v491 = vunpack.c.l.s4 1966171168
    %v492 = vunpack.c.0.s8 %v491
    %v493 = vlaneseq
    %v494 = vshrl.u32 %v493, 7
    %v495 = vsub.s32 %v492, %v494
    %v496 = vrot.slane %v468, %v495
    %v497 = vcombine.high %v475, %v475
    %v498 = vcombine.high %v482, %v482
    %v499 = vcombine.high %v489, %v489
    %v500 = vcombine.high %v496, %v496
    %v501 = vcombine.low %v389, %v390
    %v502 = vcombine.high %v389, %v390
    %v504 = vunpack.c.l.s4 1966171168
    %v505 = vunpack.c.0.s8 %v504
    %v506 = vlaneseq
    %v507 = vshrl.u32 %v506, 7
    %v508 = vsub.s32 %v505, %v507
    %v509 = vrot.slane %v501, %v508
    %v511 = vunpack.c.l.s4 1966171168
    %v512 = vunpack.c.0.s8 %v511
    %v513 = vlaneseq
    %v514 = vshrl.u32 %v513, 7
    %v515 = vsub.s32 %v512, %v514
    %v516 = vrot.slane %v502, %v515
    %v517 = vcombine.high %v509, %v509
    %v518 = vcombine.high %v516, %v516
    %v520 = vunpack.c.l.s4 1966171168
    %v521 = vunpack.c.0.s8 %v520
    %v522 = vlaneseq
    %v523 = vshrl.u32 %v522, 7
    %v524 = vsub.s32 %v521, %v523
    %v525 = vrot.slane %v509, %v524
    %v527 = vunpack.c.l.s4 1966171168
    %v528 = vunpack.c.0.s8 %v527
    %v529 = vlaneseq
    %v530 = vshrl.u32 %v529, 7
    %v531 = vsub.s32 %v528, %v530
    %v532 = vrot.slane %v516, %v531
    %v534 = vunpack.c.l.s4 1966171168
    %v535 = vunpack.c.0.s8 %v534
    %v536 = vlaneseq
    %v537 = vshrl.u32 %v536, 7
    %v538 = vsub.s32 %v535, %v537
    %v539 = vrot.slane %v517, %v538
    %v541 = vunpack.c.l.s4 1966171168
    %v542 = vunpack.c.0.s8 %v541
    %v543 = vlaneseq
    %v544 = vshrl.u32 %v543, 7
    %v545 = vsub.s32 %v542, %v544
    %v546 = vrot.slane %v518, %v545
    %v547 = vcombine.high %v525, %v525
    %v548 = vcombine.high %v532, %v532
    %v549 = vcombine.high %v539, %v539
    %v550 = vcombine.high %v546, %v546
    %v551 = vcombine.low %v391, %v392
    %v552 = vcombine.high %v391, %v392
    %v554 = vunpack.c.l.s4 1966171168
    %v555 = vunpack.c.0.s8 %v554
    %v556 = vlaneseq
    %v557 = vshrl.u32 %v556, 7
    %v558 = vsub.s32 %v555, %v557
    %v559 = vrot.slane %v551, %v558
    %v561 = vunpack.c.l.s4 1966171168
    %v562 = vunpack.c.0.s8 %v561
    %v563 = vlaneseq
    %v564 = vshrl.u32 %v563, 7
    %v565 = vsub.s32 %v562, %v564
    %v566 = vrot.slane %v552, %v565
    %v567 = vcombine.high %v559, %v559
    %v568 = vcombine.high %v566, %v566
    %v570 = vunpack.c.l.s4 1966171168
    %v571 = vunpack.c.0.s8 %v570
    %v572 = vlaneseq
    %v573 = vshrl.u32 %v572, 7
    %v574 = vsub.s32 %v571, %v573
    %v575 = vrot.slane %v559, %v574
    %v577 = vunpack.c.l.s4 1966171168
    %v578 = vunpack.c.0.s8 %v577
    %v579 = vlaneseq
    %v580 = vshrl.u32 %v579, 7
    %v581 = vsub.s32 %v578, %v580
    %v582 = vrot.slane %v566, %v581
    %v584 = vunpack.c.l.s4 1966171168
    %v585 = vunpack.c.0.s8 %v584
    %v586 = vlaneseq
    %v587 = vshrl.u32 %v586, 7
    %v588 = vsub.s32 %v585, %v587
    %v589 = vrot.slane %v567, %v588
    %v591 = vunpack.c.l.s4 1966171168
    %v592 = vunpack.c.0.s8 %v591
    %v593 = vlaneseq
    %v594 = vshrl.u32 %v593, 7
    %v595 = vsub.s32 %v592, %v594
    %v596 = vrot.slane %v568, %v595
    %v597 = vcombine.high %v575, %v575
    %v598 = vcombine.high %v582, %v582
    %v599 = vcombine.high %v589, %v589
    %v600 = vcombine.high %v596, %v596
    %v633 = vlaneseq
    %vm634 = vcmp.ge.s32.totalorder %v633, 0
    %vm635 = vcmp.lt.s32.totalorder %v633, 169
    %vm636 = vmand %vm634, %vm635
    %637 = vst.msk [vmem:[#allocation2] ss:$2 sm:$0x3] %vm636, %v425
    %s638 = scalar_lea.vmem [#allocation2], 4
    %639 = vst.msk [vmem:[%s638] ss:$2 sm:$0x3] %vm636, %v439
    %s640 = scalar_lea.vmem [#allocation2], 8
    %641 = vst.msk [vmem:[%s640] ss:$2 sm:$0x3] %vm636, %v447
    %s642 = scalar_lea.vmem [#allocation2], 12
    %643 = vst.msk [vmem:[%s642] ss:$2 sm:$0x3] %vm636, %v449
    %s644 = scalar_lea.vmem [#allocation2], 16
    %645 = vst.msk [vmem:[%s644] ss:$2 sm:$0x3] %vm636, %v432
    %s646 = scalar_lea.vmem [#allocation2], 20
    %647 = vst.msk [vmem:[%s646] ss:$2 sm:$0x3] %vm636, %v446
    %s648 = scalar_lea.vmem [#allocation2], 24
    %649 = vst.msk [vmem:[%s648] ss:$2 sm:$0x3] %vm636, %v448
    %s650 = scalar_lea.vmem [#allocation2], 28
    %651 = vst.msk [vmem:[%s650] ss:$2 sm:$0x3] %vm636, %v450
    %s652 = scalar_lea.vmem [#allocation2], 32
    %653 = vst.msk [vmem:[%s652] ss:$2 sm:$0x3] %vm636, %v475
    %s654 = scalar_lea.vmem [#allocation2], 36
    %655 = vst.msk [vmem:[%s654] ss:$2 sm:$0x3] %vm636, %v489
    %s656 = scalar_lea.vmem [#allocation2], 40
    %657 = vst.msk [vmem:[%s656] ss:$2 sm:$0x3] %vm636, %v497
    %s658 = scalar_lea.vmem [#allocation2], 44
    %659 = vst.msk [vmem:[%s658] ss:$2 sm:$0x3] %vm636, %v499
    %s660 = scalar_lea.vmem [#allocation2], 48
    %661 = vst.msk [vmem:[%s660] ss:$2 sm:$0x3] %vm636, %v482
    %s662 = scalar_lea.vmem [#allocation2], 52
    %663 = vst.msk [vmem:[%s662] ss:$2 sm:$0x3] %vm636, %v496
    %s664 = scalar_lea.vmem [#allocation2], 56
    %665 = vst.msk [vmem:[%s664] ss:$2 sm:$0x3] %vm636, %v498
    %s666 = scalar_lea.vmem [#allocation2], 60
    %667 = vst.msk [vmem:[%s666] ss:$2 sm:$0x3] %vm636, %v500
    %s668 = scalar_lea.vmem [#allocation2], 64
    %669 = vst.msk [vmem:[%s668] ss:$2 sm:$0x3] %vm636, %v525
    %s670 = scalar_lea.vmem [#allocation2], 68
    %671 = vst.msk [vmem:[%s670] ss:$2 sm:$0x3] %vm636, %v539
    %s672 = scalar_lea.vmem [#allocation2], 72
    %673 = vst.msk [vmem:[%s672] ss:$2 sm:$0x3] %vm636, %v547
    %s674 = scalar_lea.vmem [#allocation2], 76
    %675 = vst.msk [vmem:[%s674] ss:$2 sm:$0x3] %vm636, %v549
    %s676 = scalar_lea.vmem [#allocation2], 80
    %677 = vst.msk [vmem:[%s676] ss:$2 sm:$0x3] %vm636, %v532
    %s678 = scalar_lea.vmem [#allocation2], 84
    %679 = vst.msk [vmem:[%s678] ss:$2 sm:$0x3] %vm636, %v546
    %s680 = scalar_lea.vmem [#allocation2], 88
    %681 = vst.msk [vmem:[%s680] ss:$2 sm:$0x3] %vm636, %v548
    %s682 = scalar_lea.vmem [#allocation2], 92
    %683 = vst.msk [vmem:[%s682] ss:$2 sm:$0x3] %vm636, %v550
    %s684 = scalar_lea.vmem [#allocation2], 96
    %685 = vst.msk [vmem:[%s684] ss:$2 sm:$0x3] %vm636, %v575
    %s686 = scalar_lea.vmem [#allocation2], 100
    %687 = vst.msk [vmem:[%s686] ss:$2 sm:$0x3] %vm636, %v589
    %s688 = scalar_lea.vmem [#allocation2], 104
    %689 = vst.msk [vmem:[%s688] ss:$2 sm:$0x3] %vm636, %v597
    %s690 = scalar_lea.vmem [#allocation2], 108
    %691 = vst.msk [vmem:[%s690] ss:$2 sm:$0x3] %vm636, %v599
    %s692 = scalar_lea.vmem [#allocation2], 112
    %693 = vst.msk [vmem:[%s692] ss:$2 sm:$0x3] %vm636, %v582
    %s694 = scalar_lea.vmem [#allocation2], 116
    %695 = vst.msk [vmem:[%s694] ss:$2 sm:$0x3] %vm636, %v596
    %s696 = scalar_lea.vmem [#allocation2], 120
    %697 = vst.msk [vmem:[%s696] ss:$2 sm:$0x3] %vm636, %v598
    %s698 = scalar_lea.vmem [#allocation2], 124
    %699 = vst.msk [vmem:[%s698] ss:$2 sm:$0x3] %vm636, %v600
    %s700 = scalar_lea.vmem %s0, 64
    %v701 = vld [vmem:[%s700] sm:$0xff]
    %v702 = vld [vmem:[%s700 + $0x8] sm:$0xff]
    %v703 = vld [vmem:[%s700 + $0x10] sm:$0xff]
    %v704 = vld [vmem:[%s700 + $0x18] sm:$0xff]
    %v705 = vld [vmem:[%s700 + $0x20] sm:$0x11]
    %v706 = vld [vmem:[%s700 + $0x28] sm:$0x11]
    %v707 = vld [vmem:[%s700 + $0x30] sm:$0x11]
    %v708 = vld [vmem:[%s700 + $0x38] sm:$0x11]
    %v717 = vunpack.c.l.b16 %v701
    %v718 = vunpack.c.h.b16 %v701
    %v719 = vunpack.c.l.b16 %v702
    %v720 = vunpack.c.h.b16 %v702
    %v721 = vunpack.c.l.b16 %v703
    %v722 = vunpack.c.h.b16 %v703
    %v723 = vunpack.c.l.b16 %v704
    %v724 = vunpack.c.h.b16 %v704
    %v725 = vunpack.c.l.b16 %v705
    %v726 = vunpack.c.h.b16 %v705
    %v727 = vunpack.c.l.b16 %v706
    %v728 = vunpack.c.h.b16 %v706
    %v729 = vunpack.c.l.b16 %v707
    %v730 = vunpack.c.h.b16 %v707
    %v731 = vunpack.c.l.b16 %v708
    %v732 = vunpack.c.h.b16 %v708
    %v733 = vpack.c.b16 %v725, %v717
    %v734 = vpack.c.b16 %v726, %v718
    %v735 = vpack.c.b16 %v727, %v719
    %v736 = vpack.c.b16 %v728, %v720
    %v737 = vpack.c.b16 %v729, %v721
    %v738 = vpack.c.b16 %v730, %v722
    %v739 = vpack.c.b16 %v731, %v723
    %v740 = vpack.c.b16 %v732, %v724
    %v742 = vand.u32 %v733, %v96
    %v745 = vand.u32 %v734, %v96
    %v748 = vand.u32 %v735, %v96
    %v751 = vand.u32 %v736, %v96
    %v754 = vand.u32 %v737, %v96
    %v757 = vand.u32 %v738, %v96
    %v760 = vand.u32 %v739, %v96
    %v763 = vand.u32 %v740, %v96
    %765 = vmatprep.subr.bf16.mxu0 0
    %766 = vmatpush1.bf16.msra.mxu0 0
    %767 = vmatprep.subr.bf16.mxu0 0
    %768 = vmatpush1.bf16.msra.mxu0 0
    %769 = vmatprep.subr.bf16.mxu0 0
    %770 = vmatpush1.bf16.msra.mxu0 0
    %771 = vmatprep.subr.bf16.mxu0 0
    %772 = vmatpush1.bf16.msra.mxu0 0
    %773 = vmatprep.subr.bf16.mxu0 0
    %774 = vmatpush1.bf16.msra.mxu0 0
    %775 = vmatprep.subr.bf16.mxu0 0
    %776 = vmatpush1.bf16.msra.mxu0 0
    %777 = vmatprep.subr.bf16.mxu0 0
    %778 = vmatpush1.bf16.msra.mxu0 0
    %779 = vmatprep.subr.bf16.mxu0 %v745
    %780 = vmatpush1.bf16.msra.mxu0 %v742
    %781 = vmatprep.subr.bf16.mxu0 0
    %782 = vmatpush2.bf16.msra.mxu0 0
    %783 = vmatprep.subr.bf16.mxu0 0
    %784 = vmatpush2.bf16.msra.mxu0 0
    %785 = vmatprep.subr.bf16.mxu0 0
    %786 = vmatpush2.bf16.msra.mxu0 0
    %787 = vmatprep.subr.bf16.mxu0 0
    %788 = vmatpush2.bf16.msra.mxu0 0
    %789 = vmatprep.subr.bf16.mxu0 0
    %790 = vmatpush2.bf16.msra.mxu0 0
    %791 = vmatprep.subr.bf16.mxu0 0
    %792 = vmatpush2.bf16.msra.mxu0 0
    %793 = vmatprep.subr.bf16.mxu0 0
    %794 = vmatpush2.bf16.msra.mxu0 0
    %795 = vmatprep.subr.bf16.mxu0 0
    %796 = vmatpush2.bf16.msra.mxu0 0
    %797 = vmatprep.mubr.bf16.mxu0 0
    %798 = vmatmul.mubr.bf16.gmra.mxu0 %v88
    %v799 = vpop.f32.mrf.mxu0
    %v800 = vadd.f32 0.0, %v799
    %v801 = vpop.f32.mrf.mxu0
    %v802 = vadd.f32 0.0, %v801
    %v803 = vpop.f32.mrf.mxu0
    %v804 = vadd.f32 0.0, %v803
    %v805 = vpop.f32.mrf.mxu0
    %v806 = vadd.f32 0.0, %v805
    %807 = vmatprep.mubr.bf16.mxu0 0
    %808 = vmatmul.mubr.bf16.gmra.mxu0 %v91
    %v809 = vpop.f32.mrf.mxu0
    %v810 = vadd.f32 0.0, %v809
    %v811 = vpop.f32.mrf.mxu0
    %v812 = vadd.f32 0.0, %v811
    %v813 = vpop.f32.mrf.mxu0
    %v814 = vadd.f32 0.0, %v813
    %v815 = vpop.f32.mrf.mxu0
    %v816 = vadd.f32 0.0, %v815
    %817 = vdwg.mxu0
    %818 = vmatprep.subr.bf16.mxu0 0
    %819 = vmatpush1.bf16.msra.mxu0 0
    %820 = vmatprep.subr.bf16.mxu0 0
    %821 = vmatpush1.bf16.msra.mxu0 0
    %822 = vmatprep.subr.bf16.mxu0 0
    %823 = vmatpush1.bf16.msra.mxu0 0
    %824 = vmatprep.subr.bf16.mxu0 0
    %825 = vmatpush1.bf16.msra.mxu0 0
    %826 = vmatprep.subr.bf16.mxu0 0
    %827 = vmatpush1.bf16.msra.mxu0 0
    %828 = vmatprep.subr.bf16.mxu0 0
    %829 = vmatpush1.bf16.msra.mxu0 0
    %830 = vmatprep.subr.bf16.mxu0 0
    %831 = vmatpush1.bf16.msra.mxu0 0
    %832 = vmatprep.subr.bf16.mxu0 %v751
    %833 = vmatpush1.bf16.msra.mxu0 %v748
    %834 = vmatprep.subr.bf16.mxu0 0
    %835 = vmatpush2.bf16.msra.mxu0 0
    %836 = vmatprep.subr.bf16.mxu0 0
    %837 = vmatpush2.bf16.msra.mxu0 0
    %838 = vmatprep.subr.bf16.mxu0 0
    %839 = vmatpush2.bf16.msra.mxu0 0
    %840 = vmatprep.subr.bf16.mxu0 0
    %841 = vmatpush2.bf16.msra.mxu0 0
    %842 = vmatprep.subr.bf16.mxu0 0
    %843 = vmatpush2.bf16.msra.mxu0 0
    %844 = vmatprep.subr.bf16.mxu0 0
    %845 = vmatpush2.bf16.msra.mxu0 0
    %846 = vmatprep.subr.bf16.mxu0 0
    %847 = vmatpush2.bf16.msra.mxu0 0
    %848 = vmatprep.subr.bf16.mxu0 0
    %849 = vmatpush2.bf16.msra.mxu0 0
    %850 = vmatprep.mubr.bf16.mxu0 0
    %851 = vmatmul.mubr.bf16.gmra.mxu0 %v88
    %v852 = vpop.f32.mrf.mxu0
    %v853 = vadd.f32 0.0, %v852
    %v854 = vpop.f32.mrf.mxu0
    %v855 = vadd.f32 0.0, %v854
    %v856 = vpop.f32.mrf.mxu0
    %v857 = vadd.f32 0.0, %v856
    %v858 = vpop.f32.mrf.mxu0
    %v859 = vadd.f32 0.0, %v858
    %860 = vmatprep.mubr.bf16.mxu0 0
    %861 = vmatmul.mubr.bf16.gmra.mxu0 %v91
    %v862 = vpop.f32.mrf.mxu0
    %v863 = vadd.f32 0.0, %v862
    %v864 = vpop.f32.mrf.mxu0
    %v865 = vadd.f32 0.0, %v864
    %v866 = vpop.f32.mrf.mxu0
    %v867 = vadd.f32 0.0, %v866
    %v868 = vpop.f32.mrf.mxu0
    %v869 = vadd.f32 0.0, %v868
    %870 = vdwg.mxu0
    %871 = vmatprep.subr.bf16.mxu0 0
    %872 = vmatpush1.bf16.msra.mxu0 0
    %873 = vmatprep.subr.bf16.mxu0 0
    %874 = vmatpush1.bf16.msra.mxu0 0
    %875 = vmatprep.subr.bf16.mxu0 0
    %876 = vmatpush1.bf16.msra.mxu0 0
    %877 = vmatprep.subr.bf16.mxu0 0
    %878 = vmatpush1.bf16.msra.mxu0 0
    %879 = vmatprep.subr.bf16.mxu0 0
    %880 = vmatpush1.bf16.msra.mxu0 0
    %881 = vmatprep.subr.bf16.mxu0 0
    %882 = vmatpush1.bf16.msra.mxu0 0
    %883 = vmatprep.subr.bf16.mxu0 0
    %884 = vmatpush1.bf16.msra.mxu0 0
    %885 = vmatprep.subr.bf16.mxu0 %v757
    %886 = vmatpush1.bf16.msra.mxu0 %v754
    %887 = vmatprep.subr.bf16.mxu0 0
    %888 = vmatpush2.bf16.msra.mxu0 0
    %889 = vmatprep.subr.bf16.mxu0 0
    %890 = vmatpush2.bf16.msra.mxu0 0
    %891 = vmatprep.subr.bf16.mxu0 0
    %892 = vmatpush2.bf16.msra.mxu0 0
    %893 = vmatprep.subr.bf16.mxu0 0
    %894 = vmatpush2.bf16.msra.mxu0 0
    %895 = vmatprep.subr.bf16.mxu0 0
    %896 = vmatpush2.bf16.msra.mxu0 0
    %897 = vmatprep.subr.bf16.mxu0 0
    %898 = vmatpush2.bf16.msra.mxu0 0
    %899 = vmatprep.subr.bf16.mxu0 0
    %900 = vmatpush2.bf16.msra.mxu0 0
    %901 = vmatprep.subr.bf16.mxu0 0
    %902 = vmatpush2.bf16.msra.mxu0 0
    %903 = vmatprep.mubr.bf16.mxu0 0
    %904 = vmatmul.mubr.bf16.gmra.mxu0 %v88
    %v905 = vpop.f32.mrf.mxu0
    %v906 = vadd.f32 0.0, %v905
    %v907 = vpop.f32.mrf.mxu0
    %v908 = vadd.f32 0.0, %v907
    %v909 = vpop.f32.mrf.mxu0
    %v910 = vadd.f32 0.0, %v909
    %v911 = vpop.f32.mrf.mxu0
    %v912 = vadd.f32 0.0, %v911
    %913 = vmatprep.mubr.bf16.mxu0 0
    %914 = vmatmul.mubr.bf16.gmra.mxu0 %v91
    %v915 = vpop.f32.mrf.mxu0
    %v916 = vadd.f32 0.0, %v915
    %v917 = vpop.f32.mrf.mxu0
    %v918 = vadd.f32 0.0, %v917
    %v919 = vpop.f32.mrf.mxu0
    %v920 = vadd.f32 0.0, %v919
    %v921 = vpop.f32.mrf.mxu0
    %v922 = vadd.f32 0.0, %v921
    %923 = vdwg.mxu0
    %924 = vmatprep.subr.bf16.mxu0 0
    %925 = vmatpush1.bf16.msra.mxu0 0
    %926 = vmatprep.subr.bf16.mxu0 0
    %927 = vmatpush1.bf16.msra.mxu0 0
    %928 = vmatprep.subr.bf16.mxu0 0
    %929 = vmatpush1.bf16.msra.mxu0 0
    %930 = vmatprep.subr.bf16.mxu0 0
    %931 = vmatpush1.bf16.msra.mxu0 0
    %932 = vmatprep.subr.bf16.mxu0 0
    %933 = vmatpush1.bf16.msra.mxu0 0
    %934 = vmatprep.subr.bf16.mxu0 0
    %935 = vmatpush1.bf16.msra.mxu0 0
    %936 = vmatprep.subr.bf16.mxu0 0
    %937 = vmatpush1.bf16.msra.mxu0 0
    %938 = vmatprep.subr.bf16.mxu0 %v763
    %939 = vmatpush1.bf16.msra.mxu0 %v760
    %940 = vmatprep.subr.bf16.mxu0 0
    %941 = vmatpush2.bf16.msra.mxu0 0
    %942 = vmatprep.subr.bf16.mxu0 0
    %943 = vmatpush2.bf16.msra.mxu0 0
    %944 = vmatprep.subr.bf16.mxu0 0
    %945 = vmatpush2.bf16.msra.mxu0 0
    %946 = vmatprep.subr.bf16.mxu0 0
    %947 = vmatpush2.bf16.msra.mxu0 0
    %948 = vmatprep.subr.bf16.mxu0 0
    %949 = vmatpush2.bf16.msra.mxu0 0
    %950 = vmatprep.subr.bf16.mxu0 0
    %951 = vmatpush2.bf16.msra.mxu0 0
    %952 = vmatprep.subr.bf16.mxu0 0
    %953 = vmatpush2.bf16.msra.mxu0 0
    %954 = vmatprep.subr.bf16.mxu0 0
    %955 = vmatpush2.bf16.msra.mxu0 0
    %956 = vmatprep.mubr.bf16.mxu0 0
    %957 = vmatmul.mubr.bf16.gmra.mxu0 %v88
    %v958 = vpop.f32.mrf.mxu0
    %v959 = vadd.f32 0.0, %v958
    %v960 = vpop.f32.mrf.mxu0
    %v961 = vadd.f32 0.0, %v960
    %v962 = vpop.f32.mrf.mxu0
    %v963 = vadd.f32 0.0, %v962
    %v964 = vpop.f32.mrf.mxu0
    %v965 = vadd.f32 0.0, %v964
    %966 = vmatprep.mubr.bf16.mxu0 0
    %967 = vmatmul.mubr.bf16.gmra.mxu0 %v91
    %v968 = vpop.f32.mrf.mxu0
    %v969 = vadd.f32 0.0, %v968
    %v970 = vpop.f32.mrf.mxu0
    %v971 = vadd.f32 0.0, %v970
    %v972 = vpop.f32.mrf.mxu0
    %v973 = vadd.f32 0.0, %v972
    %v974 = vpop.f32.mrf.mxu0
    %v975 = vadd.f32 0.0, %v974
    %976 = vdwg.mxu0
    %v977 = vmax.f32 %v800, %v853
    %v978 = vmax.f32 %v802, %v855
    %v979 = vmax.f32 %v804, %v857
    %v980 = vmax.f32 %v806, %v859
    %v981 = vmax.f32 %v810, %v863
    %v982 = vmax.f32 %v812, %v865
    %v983 = vmax.f32 %v814, %v867
    %v984 = vmax.f32 %v816, %v869
    %v985 = vmax.f32 %v906, %v959
    %v986 = vmax.f32 %v908, %v961
    %v987 = vmax.f32 %v910, %v963
    %v988 = vmax.f32 %v912, %v965
    %v989 = vmax.f32 %v916, %v969
    %v990 = vmax.f32 %v918, %v971
    %v991 = vmax.f32 %v920, %v973
    %v992 = vmax.f32 %v922, %v975
    %v993 = vmax.f32 %v977, %v985
    %v994 = vmax.f32 %v978, %v986
    %v995 = vmax.f32 %v979, %v987
    %v996 = vmax.f32 %v980, %v988
    %v997 = vmax.f32 %v981, %v989
    %v998 = vmax.f32 %v982, %v990
    %v999 = vmax.f32 %v983, %v991
    %v1000 = vmax.f32 %v984, %v992
    %v1001 = vadd.f32 %v993, %v360
    %v1002 = vadd.f32 %v994, %v360
    %v1003 = vadd.f32 %v995, %v365
    %v1004 = vadd.f32 %v996, %v365
    %v1005 = vadd.f32 %v997, %v370
    %v1006 = vadd.f32 %v998, %v370
    %v1007 = vadd.f32 %v999, %v375
    %v1008 = vadd.f32 %v1000, %v375
    %v1009 = vmax.f32 %v1001, 0.0
    %v1010 = vmax.f32 %v1002, 0.0
    %v1011 = vmax.f32 %v1003, 0.0
    %v1012 = vmax.f32 %v1004, 0.0
    %v1013 = vmax.f32 %v1005, 0.0
    %v1014 = vmax.f32 %v1006, 0.0
    %v1015 = vmax.f32 %v1007, 0.0
    %v1016 = vmax.f32 %v1008, 0.0
    %v1025 = vcombine.low %v1009, %v1010
    %v1026 = vcombine.high %v1009, %v1010
    %v1028 = vunpack.c.l.s4 1966171168
    %v1029 = vunpack.c.0.s8 %v1028
    %v1030 = vlaneseq
    %v1031 = vshrl.u32 %v1030, 7
    %v1032 = vsub.s32 %v1029, %v1031
    %v1033 = vrot.slane %v1025, %v1032
    %v1035 = vunpack.c.l.s4 1966171168
    %v1036 = vunpack.c.0.s8 %v1035
    %v1037 = vlaneseq
    %v1038 = vshrl.u32 %v1037, 7
    %v1039 = vsub.s32 %v1036, %v1038
    %v1040 = vrot.slane %v1026, %v1039
    %v1041 = vcombine.high %v1033, %v1033
    %v1042 = vcombine.high %v1040, %v1040
    %v1044 = vunpack.c.l.s4 1966171168
    %v1045 = vunpack.c.0.s8 %v1044
    %v1046 = vlaneseq
    %v1047 = vshrl.u32 %v1046, 7
    %v1048 = vsub.s32 %v1045, %v1047
    %v1049 = vrot.slane %v1033, %v1048
    %v1051 = vunpack.c.l.s4 1966171168
    %v1052 = vunpack.c.0.s8 %v1051
    %v1053 = vlaneseq
    %v1054 = vshrl.u32 %v1053, 7
    %v1055 = vsub.s32 %v1052, %v1054
    %v1056 = vrot.slane %v1040, %v1055
    %v1058 = vunpack.c.l.s4 1966171168
    %v1059 = vunpack.c.0.s8 %v1058
    %v1060 = vlaneseq
    %v1061 = vshrl.u32 %v1060, 7
    %v1062 = vsub.s32 %v1059, %v1061
    %v1063 = vrot.slane %v1041, %v1062
    %v1065 = vunpack.c.l.s4 1966171168
    %v1066 = vunpack.c.0.s8 %v1065
    %v1067 = vlaneseq
    %v1068 = vshrl.u32 %v1067, 7
    %v1069 = vsub.s32 %v1066, %v1068
    %v1070 = vrot.slane %v1042, %v1069
    %v1071 = vcombine.high %v1049, %v1049
    %v1072 = vcombine.high %v1056, %v1056
    %v1073 = vcombine.high %v1063, %v1063
    %v1074 = vcombine.high %v1070, %v1070
    %v1075 = vcombine.low %v1011, %v1012
    %v1076 = vcombine.high %v1011, %v1012
    %v1078 = vunpack.c.l.s4 1966171168
    %v1079 = vunpack.c.0.s8 %v1078
    %v1080 = vlaneseq
    %v1081 = vshrl.u32 %v1080, 7
    %v1082 = vsub.s32 %v1079, %v1081
    %v1083 = vrot.slane %v1075, %v1082
    %v1085 = vunpack.c.l.s4 1966171168
    %v1086 = vunpack.c.0.s8 %v1085
    %v1087 = vlaneseq
    %v1088 = vshrl.u32 %v1087, 7
    %v1089 = vsub.s32 %v1086, %v1088
    %v1090 = vrot.slane %v1076, %v1089
    %v1091 = vcombine.high %v1083, %v1083
    %v1092 = vcombine.high %v1090, %v1090
    %v1094 = vunpack.c.l.s4 1966171168
    %v1095 = vunpack.c.0.s8 %v1094
    %v1096 = vlaneseq
    %v1097 = vshrl.u32 %v1096, 7
    %v1098 = vsub.s32 %v1095, %v1097
    %v1099 = vrot.slane %v1083, %v1098
    %v1101 = vunpack.c.l.s4 1966171168
    %v1102 = vunpack.c.0.s8 %v1101
    %v1103 = vlaneseq
    %v1104 = vshrl.u32 %v1103, 7
    %v1105 = vsub.s32 %v1102, %v1104
    %v1106 = vrot.slane %v1090, %v1105
    %v1108 = vunpack.c.l.s4 1966171168
    %v1109 = vunpack.c.0.s8 %v1108
    %v1110 = vlaneseq
    %v1111 = vshrl.u32 %v1110, 7
    %v1112 = vsub.s32 %v1109, %v1111
    %v1113 = vrot.slane %v1091, %v1112
    %v1115 = vunpack.c.l.s4 1966171168
    %v1116 = vunpack.c.0.s8 %v1115
    %v1117 = vlaneseq
    %v1118 = vshrl.u32 %v1117, 7
    %v1119 = vsub.s32 %v1116, %v1118
    %v1120 = vrot.slane %v1092, %v1119
    %v1121 = vcombine.high %v1099, %v1099
    %v1122 = vcombine.high %v1106, %v1106
    %v1123 = vcombine.high %v1113, %v1113
    %v1124 = vcombine.high %v1120, %v1120
    %v1125 = vcombine.low %v1013, %v1014
    %v1126 = vcombine.high %v1013, %v1014
    %v1128 = vunpack.c.l.s4 1966171168
    %v1129 = vunpack.c.0.s8 %v1128
    %v1130 = vlaneseq
    %v1131 = vshrl.u32 %v1130, 7
    %v1132 = vsub.s32 %v1129, %v1131
    %v1133 = vrot.slane %v1125, %v1132
    %v1135 = vunpack.c.l.s4 1966171168
    %v1136 = vunpack.c.0.s8 %v1135
    %v1137 = vlaneseq
    %v1138 = vshrl.u32 %v1137, 7
    %v1139 = vsub.s32 %v1136, %v1138
    %v1140 = vrot.slane %v1126, %v1139
    %v1141 = vcombine.high %v1133, %v1133
    %v1142 = vcombine.high %v1140, %v1140
    %v1144 = vunpack.c.l.s4 1966171168
    %v1145 = vunpack.c.0.s8 %v1144
    %v1146 = vlaneseq
    %v1147 = vshrl.u32 %v1146, 7
    %v1148 = vsub.s32 %v1145, %v1147
    %v1149 = vrot.slane %v1133, %v1148
    %v1151 = vunpack.c.l.s4 1966171168
    %v1152 = vunpack.c.0.s8 %v1151
    %v1153 = vlaneseq
    %v1154 = vshrl.u32 %v1153, 7
    %v1155 = vsub.s32 %v1152, %v1154
    %v1156 = vrot.slane %v1140, %v1155
    %v1158 = vunpack.c.l.s4 1966171168
    %v1159 = vunpack.c.0.s8 %v1158
    %v1160 = vlaneseq
    %v1161 = vshrl.u32 %v1160, 7
    %v1162 = vsub.s32 %v1159, %v1161
    %v1163 = vrot.slane %v1141, %v1162
    %v1165 = vunpack.c.l.s4 1966171168
    %v1166 = vunpack.c.0.s8 %v1165
    %v1167 = vlaneseq
    %v1168 = vshrl.u32 %v1167, 7
    %v1169 = vsub.s32 %v1166, %v1168
    %v1170 = vrot.slane %v1142, %v1169
    %v1171 = vcombine.high %v1149, %v1149
    %v1172 = vcombine.high %v1156, %v1156
    %v1173 = vcombine.high %v1163, %v1163
    %v1174 = vcombine.high %v1170, %v1170
    %v1175 = vcombine.low %v1015, %v1016
    %v1176 = vcombine.high %v1015, %v1016
    %v1178 = vunpack.c.l.s4 1966171168
    %v1179 = vunpack.c.0.s8 %v1178
    %v1180 = vlaneseq
    %v1181 = vshrl.u32 %v1180, 7
    %v1182 = vsub.s32 %v1179, %v1181
    %v1183 = vrot.slane %v1175, %v1182
    %v1185 = vunpack.c.l.s4 1966171168
    %v1186 = vunpack.c.0.s8 %v1185
    %v1187 = vlaneseq
    %v1188 = vshrl.u32 %v1187, 7
    %v1189 = vsub.s32 %v1186, %v1188
    %v1190 = vrot.slane %v1176, %v1189
    %v1191 = vcombine.high %v1183, %v1183
    %v1192 = vcombine.high %v1190, %v1190
    %v1194 = vunpack.c.l.s4 1966171168
    %v1195 = vunpack.c.0.s8 %v1194
    %v1196 = vlaneseq
    %v1197 = vshrl.u32 %v1196, 7
    %v1198 = vsub.s32 %v1195, %v1197
    %v1199 = vrot.slane %v1183, %v1198
    %v1201 = vunpack.c.l.s4 1966171168
    %v1202 = vunpack.c.0.s8 %v1201
    %v1203 = vlaneseq
    %v1204 = vshrl.u32 %v1203, 7
    %v1205 = vsub.s32 %v1202, %v1204
    %v1206 = vrot.slane %v1190, %v1205
    %v1208 = vunpack.c.l.s4 1966171168
    %v1209 = vunpack.c.0.s8 %v1208
    %v1210 = vlaneseq
    %v1211 = vshrl.u32 %v1210, 7
    %v1212 = vsub.s32 %v1209, %v1211
    %v1213 = vrot.slane %v1191, %v1212
    %v1215 = vunpack.c.l.s4 1966171168
    %v1216 = vunpack.c.0.s8 %v1215
    %v1217 = vlaneseq
    %v1218 = vshrl.u32 %v1217, 7
    %v1219 = vsub.s32 %v1216, %v1218
    %v1220 = vrot.slane %v1192, %v1219
    %v1221 = vcombine.high %v1199, %v1199
    %v1222 = vcombine.high %v1206, %v1206
    %v1223 = vcombine.high %v1213, %v1213
    %v1224 = vcombine.high %v1220, %v1220
    %s1257 = scalar_lea.vmem [#allocation2], 1
    %1258 = vst.msk [vmem:[%s1257] ss:$2 sm:$0x3] %vm636, %v1049
    %s1259 = scalar_lea.vmem [#allocation2], 5
    %1260 = vst.msk [vmem:[%s1259] ss:$2 sm:$0x3] %vm636, %v1063
    %s1261 = scalar_lea.vmem [#allocation2], 9
    %1262 = vst.msk [vmem:[%s1261] ss:$2 sm:$0x3] %vm636, %v1071
    %s1263 = scalar_lea.vmem [#allocation2], 13
    %1264 = vst.msk [vmem:[%s1263] ss:$2 sm:$0x3] %vm636, %v1073
    %s1265 = scalar_lea.vmem [#allocation2], 17
    %1266 = vst.msk [vmem:[%s1265] ss:$2 sm:$0x3] %vm636, %v1056
    %s1267 = scalar_lea.vmem [#allocation2], 21
    %1268 = vst.msk [vmem:[%s1267] ss:$2 sm:$0x3] %vm636, %v1070
    %s1269 = scalar_lea.vmem [#allocation2], 25
    %1270 = vst.msk [vmem:[%s1269] ss:$2 sm:$0x3] %vm636, %v1072
    %s1271 = scalar_lea.vmem [#allocation2], 29
    %1272 = vst.msk [vmem:[%s1271] ss:$2 sm:$0x3] %vm636, %v1074
    %s1273 = scalar_lea.vmem [#allocation2], 33
    %1274 = vst.msk [vmem:[%s1273] ss:$2 sm:$0x3] %vm636, %v1099
    %s1275 = scalar_lea.vmem [#allocation2], 37
    %1276 = vst.msk [vmem:[%s1275] ss:$2 sm:$0x3] %vm636, %v1113
    %s1277 = scalar_lea.vmem [#allocation2], 41
    %1278 = vst.msk [vmem:[%s1277] ss:$2 sm:$0x3] %vm636, %v1121
    %s1279 = scalar_lea.vmem [#allocation2], 45
    %1280 = vst.msk [vmem:[%s1279] ss:$2 sm:$0x3] %vm636, %v1123
    %s1281 = scalar_lea.vmem [#allocation2], 49
    %1282 = vst.msk [vmem:[%s1281] ss:$2 sm:$0x3] %vm636, %v1106
    %s1283 = scalar_lea.vmem [#allocation2], 53
    %1284 = vst.msk [vmem:[%s1283] ss:$2 sm:$0x3] %vm636, %v1120
    %s1285 = scalar_lea.vmem [#allocation2], 57
    %1286 = vst.msk [vmem:[%s1285] ss:$2 sm:$0x3] %vm636, %v1122
    %s1287 = scalar_lea.vmem [#allocation2], 61
    %1288 = vst.msk [vmem:[%s1287] ss:$2 sm:$0x3] %vm636, %v1124
    %s1289 = scalar_lea.vmem [#allocation2], 65
    %1290 = vst.msk [vmem:[%s1289] ss:$2 sm:$0x3] %vm636, %v1149
    %s1291 = scalar_lea.vmem [#allocation2], 69
    %1292 = vst.msk [vmem:[%s1291] ss:$2 sm:$0x3] %vm636, %v1163
    %s1293 = scalar_lea.vmem [#allocation2], 73
    %1294 = vst.msk [vmem:[%s1293] ss:$2 sm:$0x3] %vm636, %v1171
    %s1295 = scalar_lea.vmem [#allocation2], 77
    %1296 = vst.msk [vmem:[%s1295] ss:$2 sm:$0x3] %vm636, %v1173
    %s1297 = scalar_lea.vmem [#allocation2], 81
    %1298 = vst.msk [vmem:[%s1297] ss:$2 sm:$0x3] %vm636, %v1156
    %s1299 = scalar_lea.vmem [#allocation2], 85
    %1300 = vst.msk [vmem:[%s1299] ss:$2 sm:$0x3] %vm636, %v1170
    %s1301 = scalar_lea.vmem [#allocation2], 89
    %1302 = vst.msk [vmem:[%s1301] ss:$2 sm:$0x3] %vm636, %v1172
    %s1303 = scalar_lea.vmem [#allocation2], 93
    %1304 = vst.msk [vmem:[%s1303] ss:$2 sm:$0x3] %vm636, %v1174
    %s1305 = scalar_lea.vmem [#allocation2], 97
    %1306 = vst.msk [vmem:[%s1305] ss:$2 sm:$0x3] %vm636, %v1199
    %s1307 = scalar_lea.vmem [#allocation2], 101
    %1308 = vst.msk [vmem:[%s1307] ss:$2 sm:$0x3] %vm636, %v1213
    %s1309 = scalar_lea.vmem [#allocation2], 105
    %1310 = vst.msk [vmem:[%s1309] ss:$2 sm:$0x3] %vm636, %v1221
    %s1311 = scalar_lea.vmem [#allocation2], 109
    %1312 = vst.msk [vmem:[%s1311] ss:$2 sm:$0x3] %vm636, %v1223
    %s1313 = scalar_lea.vmem [#allocation2], 113
    %1314 = vst.msk [vmem:[%s1313] ss:$2 sm:$0x3] %vm636, %v1206
    %s1315 = scalar_lea.vmem [#allocation2], 117
    %1316 = vst.msk [vmem:[%s1315] ss:$2 sm:$0x3] %vm636, %v1220
    %s1317 = scalar_lea.vmem [#allocation2], 121
    %1318 = vst.msk [vmem:[%s1317] ss:$2 sm:$0x3] %vm636, %v1222
    %s1319 = scalar_lea.vmem [#allocation2], 125
    %1320 = vst.msk [vmem:[%s1319] ss:$2 sm:$0x3] %vm636, %v1224
    %v1321 = vld [vmem:[#allocation2] sm:$0xf]
    %v1322 = vld [vmem:[#allocation2 + $0x4] sm:$0xf]
    %v1323 = vld [vmem:[#allocation2 + $0x8] sm:$0xf]
    %v1324 = vld [vmem:[#allocation2 + $0xc] sm:$0xf]
    %v1325 = vld [vmem:[#allocation2 + $0x10] sm:$0xf]
    %v1326 = vld [vmem:[#allocation2 + $0x14] sm:$0xf]
    %v1327 = vld [vmem:[#allocation2 + $0x18] sm:$0xf]
    %v1328 = vld [vmem:[#allocation2 + $0x1c] sm:$0xf]
    %v1329 = vld [vmem:[#allocation2 + $0x20] sm:$0xf]
    %v1330 = vld [vmem:[#allocation2 + $0x24] sm:$0xf]
    %v1331 = vld [vmem:[#allocation2 + $0x28] sm:$0xf]
    %v1332 = vld [vmem:[#allocation2 + $0x2c] sm:$0xf]
    %v1333 = vld [vmem:[#allocation2 + $0x30] sm:$0xf]
    %v1334 = vld [vmem:[#allocation2 + $0x34] sm:$0xf]
    %v1335 = vld [vmem:[#allocation2 + $0x38] sm:$0xf]
    %v1336 = vld [vmem:[#allocation2 + $0x3c] sm:$0xf]
    %v1337 = vld [vmem:[#allocation2 + $0x40] sm:$0xf]
    %v1338 = vld [vmem:[#allocation2 + $0x44] sm:$0xf]
    %v1339 = vld [vmem:[#allocation2 + $0x48] sm:$0xf]
    %v1340 = vld [vmem:[#allocation2 + $0x4c] sm:$0xf]
    %v1341 = vld [vmem:[#allocation2 + $0x50] sm:$0xf]
    %v1342 = vld [vmem:[#allocation2 + $0x54] sm:$0xf]
    %v1343 = vld [vmem:[#allocation2 + $0x58] sm:$0xf]
    %v1344 = vld [vmem:[#allocation2 + $0x5c] sm:$0xf]
    %v1345 = vld [vmem:[#allocation2 + $0x60] sm:$0xf]
    %v1346 = vld [vmem:[#allocation2 + $0x64] sm:$0xf]
    %v1347 = vld [vmem:[#allocation2 + $0x68] sm:$0xf]
    %v1348 = vld [vmem:[#allocation2 + $0x6c] sm:$0xf]
    %v1349 = vld [vmem:[#allocation2 + $0x70] sm:$0xf]
    %v1350 = vld [vmem:[#allocation2 + $0x74] sm:$0xf]
    %v1351 = vld [vmem:[#allocation2 + $0x78] sm:$0xf]
    %v1352 = vld [vmem:[#allocation2 + $0x7c] sm:$0xf]
    %v1386 = vunpack.c.l.s4 1983009808
    %v1387 = vunpack.c.0.s8 %v1386
    %v1388 = vlaneseq
    %v1389 = vshrl.u32 %v1388, 7
    %v1390 = vsub.s32 %v1387, %v1389
    %v1391 = vrot.slane %v1321, %v1390
    %v1392 = vcombine.high %v1391, %v1391
    %v1394 = vunpack.c.l.s4 1983009808
    %v1395 = vunpack.c.0.s8 %v1394
    %v1396 = vlaneseq
    %v1397 = vshrl.u32 %v1396, 7
    %v1398 = vsub.s32 %v1395, %v1397
    %v1399 = vrot.slane %v1322, %v1398
    %v1400 = vcombine.high %v1399, %v1399
    %v1402 = vunpack.c.l.s4 1983009808
    %v1403 = vunpack.c.0.s8 %v1402
    %v1404 = vlaneseq
    %v1405 = vshrl.u32 %v1404, 7
    %v1406 = vsub.s32 %v1403, %v1405
    %v1407 = vrot.slane %v1323, %v1406
    %v1408 = vcombine.high %v1407, %v1407
    %v1410 = vunpack.c.l.s4 1983009808
    %v1411 = vunpack.c.0.s8 %v1410
    %v1412 = vlaneseq
    %v1413 = vshrl.u32 %v1412, 7
    %v1414 = vsub.s32 %v1411, %v1413
    %v1415 = vrot.slane %v1324, %v1414
    %v1416 = vcombine.high %v1415, %v1415
    %v1418 = vunpack.c.l.s4 1983009808
    %v1419 = vunpack.c.0.s8 %v1418
    %v1420 = vlaneseq
    %v1421 = vshrl.u32 %v1420, 7
    %v1422 = vsub.s32 %v1419, %v1421
    %v1423 = vrot.slane %v1325, %v1422
    %v1424 = vcombine.high %v1423, %v1423
    %v1426 = vunpack.c.l.s4 1983009808
    %v1427 = vunpack.c.0.s8 %v1426
    %v1428 = vlaneseq
    %v1429 = vshrl.u32 %v1428, 7
    %v1430 = vsub.s32 %v1427, %v1429
    %v1431 = vrot.slane %v1326, %v1430
    %v1432 = vcombine.high %v1431, %v1431
    %v1434 = vunpack.c.l.s4 1983009808
    %v1435 = vunpack.c.0.s8 %v1434
    %v1436 = vlaneseq
    %v1437 = vshrl.u32 %v1436, 7
    %v1438 = vsub.s32 %v1435, %v1437
    %v1439 = vrot.slane %v1327, %v1438
    %v1440 = vcombine.high %v1439, %v1439
    %v1442 = vunpack.c.l.s4 1983009808
    %v1443 = vunpack.c.0.s8 %v1442
    %v1444 = vlaneseq
    %v1445 = vshrl.u32 %v1444, 7
    %v1446 = vsub.s32 %v1443, %v1445
    %v1447 = vrot.slane %v1328, %v1446
    %v1448 = vcombine.high %v1447, %v1447
    %v1450 = vunpack.c.l.s4 1983009808
    %v1451 = vunpack.c.0.s8 %v1450
    %v1452 = vlaneseq
    %v1453 = vshrl.u32 %v1452, 7
    %v1454 = vsub.s32 %v1451, %v1453
    %v1455 = vrot.slane %v1329, %v1454
    %v1456 = vcombine.high %v1455, %v1455
    %v1458 = vunpack.c.l.s4 1983009808
    %v1459 = vunpack.c.0.s8 %v1458
    %v1460 = vlaneseq
    %v1461 = vshrl.u32 %v1460, 7
    %v1462 = vsub.s32 %v1459, %v1461
    %v1463 = vrot.slane %v1330, %v1462
    %v1464 = vcombine.high %v1463, %v1463
    %v1466 = vunpack.c.l.s4 1983009808
    %v1467 = vunpack.c.0.s8 %v1466
    %v1468 = vlaneseq
    %v1469 = vshrl.u32 %v1468, 7
    %v1470 = vsub.s32 %v1467, %v1469
    %v1471 = vrot.slane %v1331, %v1470
    %v1472 = vcombine.high %v1471, %v1471
    %v1474 = vunpack.c.l.s4 1983009808
    %v1475 = vunpack.c.0.s8 %v1474
    %v1476 = vlaneseq
    %v1477 = vshrl.u32 %v1476, 7
    %v1478 = vsub.s32 %v1475, %v1477
    %v1479 = vrot.slane %v1332, %v1478
    %v1480 = vcombine.high %v1479, %v1479
    %v1482 = vunpack.c.l.s4 1983009808
    %v1483 = vunpack.c.0.s8 %v1482
    %v1484 = vlaneseq
    %v1485 = vshrl.u32 %v1484, 7
    %v1486 = vsub.s32 %v1483, %v1485
    %v1487 = vrot.slane %v1333, %v1486
    %v1488 = vcombine.high %v1487, %v1487
    %v1490 = vunpack.c.l.s4 1983009808
    %v1491 = vunpack.c.0.s8 %v1490
    %v1492 = vlaneseq
    %v1493 = vshrl.u32 %v1492, 7
    %v1494 = vsub.s32 %v1491, %v1493
    %v1495 = vrot.slane %v1334, %v1494
    %v1496 = vcombine.high %v1495, %v1495
    %v1498 = vunpack.c.l.s4 1983009808
    %v1499 = vunpack.c.0.s8 %v1498
    %v1500 = vlaneseq
    %v1501 = vshrl.u32 %v1500, 7
    %v1502 = vsub.s32 %v1499, %v1501
    %v1503 = vrot.slane %v1335, %v1502
    %v1504 = vcombine.high %v1503, %v1503
    %v1506 = vunpack.c.l.s4 1983009808
    %v1507 = vunpack.c.0.s8 %v1506
    %v1508 = vlaneseq
    %v1509 = vshrl.u32 %v1508, 7
    %v1510 = vsub.s32 %v1507, %v1509
    %v1511 = vrot.slane %v1336, %v1510
    %v1512 = vcombine.high %v1511, %v1511
    %v1514 = vunpack.c.l.s4 1983009808
    %v1515 = vunpack.c.0.s8 %v1514
    %v1516 = vlaneseq
    %v1517 = vshrl.u32 %v1516, 7
    %v1518 = vsub.s32 %v1515, %v1517
    %v1519 = vrot.slane %v1337, %v1518
    %v1520 = vcombine.high %v1519, %v1519
    %v1522 = vunpack.c.l.s4 1983009808
    %v1523 = vunpack.c.0.s8 %v1522
    %v1524 = vlaneseq
    %v1525 = vshrl.u32 %v1524, 7
    %v1526 = vsub.s32 %v1523, %v1525
    %v1527 = vrot.slane %v1338, %v1526
    %v1528 = vcombine.high %v1527, %v1527
    %v1530 = vunpack.c.l.s4 1983009808
    %v1531 = vunpack.c.0.s8 %v1530
    %v1532 = vlaneseq
    %v1533 = vshrl.u32 %v1532, 7
    %v1534 = vsub.s32 %v1531, %v1533
    %v1535 = vrot.slane %v1339, %v1534
    %v1536 = vcombine.high %v1535, %v1535
    %v1538 = vunpack.c.l.s4 1983009808
    %v1539 = vunpack.c.0.s8 %v1538
    %v1540 = vlaneseq
    %v1541 = vshrl.u32 %v1540, 7
    %v1542 = vsub.s32 %v1539, %v1541
    %v1543 = vrot.slane %v1340, %v1542
    %v1544 = vcombine.high %v1543, %v1543
    %v1546 = vunpack.c.l.s4 1983009808
    %v1547 = vunpack.c.0.s8 %v1546
    %v1548 = vlaneseq
    %v1549 = vshrl.u32 %v1548, 7
    %v1550 = vsub.s32 %v1547, %v1549
    %v1551 = vrot.slane %v1341, %v1550
    %v1552 = vcombine.high %v1551, %v1551
    %v1554 = vunpack.c.l.s4 1983009808
    %v1555 = vunpack.c.0.s8 %v1554
    %v1556 = vlaneseq
    %v1557 = vshrl.u32 %v1556, 7
    %v1558 = vsub.s32 %v1555, %v1557
    %v1559 = vrot.slane %v1342, %v1558
    %v1560 = vcombine.high %v1559, %v1559
    %v1562 = vunpack.c.l.s4 1983009808
    %v1563 = vunpack.c.0.s8 %v1562
    %v1564 = vlaneseq
    %v1565 = vshrl.u32 %v1564, 7
    %v1566 = vsub.s32 %v1563, %v1565
    %v1567 = vrot.slane %v1343, %v1566
    %v1568 = vcombine.high %v1567, %v1567
    %v1570 = vunpack.c.l.s4 1983009808
    %v1571 = vunpack.c.0.s8 %v1570
    %v1572 = vlaneseq
    %v1573 = vshrl.u32 %v1572, 7
    %v1574 = vsub.s32 %v1571, %v1573
    %v1575 = vrot.slane %v1344, %v1574
    %v1576 = vcombine.high %v1575, %v1575
    %v1578 = vunpack.c.l.s4 1983009808
    %v1579 = vunpack.c.0.s8 %v1578
    %v1580 = vlaneseq
    %v1581 = vshrl.u32 %v1580, 7
    %v1582 = vsub.s32 %v1579, %v1581
    %v1583 = vrot.slane %v1345, %v1582
    %v1584 = vcombine.high %v1583, %v1583
    %v1586 = vunpack.c.l.s4 1983009808
    %v1587 = vunpack.c.0.s8 %v1586
    %v1588 = vlaneseq
    %v1589 = vshrl.u32 %v1588, 7
    %v1590 = vsub.s32 %v1587, %v1589
    %v1591 = vrot.slane %v1346, %v1590
    %v1592 = vcombine.high %v1591, %v1591
    %v1594 = vunpack.c.l.s4 1983009808
    %v1595 = vunpack.c.0.s8 %v1594
    %v1596 = vlaneseq
    %v1597 = vshrl.u32 %v1596, 7
    %v1598 = vsub.s32 %v1595, %v1597
    %v1599 = vrot.slane %v1347, %v1598
    %v1600 = vcombine.high %v1599, %v1599
    %v1602 = vunpack.c.l.s4 1983009808
    %v1603 = vunpack.c.0.s8 %v1602
    %v1604 = vlaneseq
    %v1605 = vshrl.u32 %v1604, 7
    %v1606 = vsub.s32 %v1603, %v1605
    %v1607 = vrot.slane %v1348, %v1606
    %v1608 = vcombine.high %v1607, %v1607
    %v1610 = vunpack.c.l.s4 1983009808
    %v1611 = vunpack.c.0.s8 %v1610
    %v1612 = vlaneseq
    %v1613 = vshrl.u32 %v1612, 7
    %v1614 = vsub.s32 %v1611, %v1613
    %v1615 = vrot.slane %v1349, %v1614
    %v1616 = vcombine.high %v1615, %v1615
    %v1618 = vunpack.c.l.s4 1983009808
    %v1619 = vunpack.c.0.s8 %v1618
    %v1620 = vlaneseq
    %v1621 = vshrl.u32 %v1620, 7
    %v1622 = vsub.s32 %v1619, %v1621
    %v1623 = vrot.slane %v1350, %v1622
    %v1624 = vcombine.high %v1623, %v1623
    %v1626 = vunpack.c.l.s4 1983009808
    %v1627 = vunpack.c.0.s8 %v1626
    %v1628 = vlaneseq
    %v1629 = vshrl.u32 %v1628, 7
    %v1630 = vsub.s32 %v1627, %v1629
    %v1631 = vrot.slane %v1351, %v1630
    %v1632 = vcombine.high %v1631, %v1631
    %v1634 = vunpack.c.l.s4 1983009808
    %v1635 = vunpack.c.0.s8 %v1634
    %v1636 = vlaneseq
    %v1637 = vshrl.u32 %v1636, 7
    %v1638 = vsub.s32 %v1635, %v1637
    %v1639 = vrot.slane %v1352, %v1638
    %v1640 = vcombine.high %v1639, %v1639
    %v1705 = vpack.c.bf16 %v1391, %v1391
    %v1706 = vpack.c.bf16 %v1392, %v1392
    %v1707 = vpack.c.bf16 %v1399, %v1399
    %v1708 = vpack.c.bf16 %v1400, %v1400
    %v1709 = vpack.c.bf16 %v1407, %v1407
    %v1710 = vpack.c.bf16 %v1408, %v1408
    %v1711 = vpack.c.bf16 %v1415, %v1415
    %v1712 = vpack.c.bf16 %v1416, %v1416
    %v1713 = vpack.c.bf16 %v1423, %v1423
    %v1714 = vpack.c.bf16 %v1424, %v1424
    %v1715 = vpack.c.bf16 %v1431, %v1431
    %v1716 = vpack.c.bf16 %v1432, %v1432
    %v1717 = vpack.c.bf16 %v1439, %v1439
    %v1718 = vpack.c.bf16 %v1440, %v1440
    %v1719 = vpack.c.bf16 %v1447, %v1447
    %v1720 = vpack.c.bf16 %v1448, %v1448
    %v1721 = vpack.c.bf16 %v1455, %v1455
    %v1722 = vpack.c.bf16 %v1456, %v1456
    %v1723 = vpack.c.bf16 %v1463, %v1463
    %v1724 = vpack.c.bf16 %v1464, %v1464
    %v1725 = vpack.c.bf16 %v1471, %v1471
    %v1726 = vpack.c.bf16 %v1472, %v1472
    %v1727 = vpack.c.bf16 %v1479, %v1479
    %v1728 = vpack.c.bf16 %v1480, %v1480
    %v1729 = vpack.c.bf16 %v1487, %v1487
    %v1730 = vpack.c.bf16 %v1488, %v1488
    %v1731 = vpack.c.bf16 %v1495, %v1495
    %v1732 = vpack.c.bf16 %v1496, %v1496
    %v1733 = vpack.c.bf16 %v1503, %v1503
    %v1734 = vpack.c.bf16 %v1504, %v1504
    %v1735 = vpack.c.bf16 %v1511, %v1511
    %v1736 = vpack.c.bf16 %v1512, %v1512
    %v1737 = vpack.c.bf16 %v1519, %v1519
    %v1738 = vpack.c.bf16 %v1520, %v1520
    %v1739 = vpack.c.bf16 %v1527, %v1527
    %v1740 = vpack.c.bf16 %v1528, %v1528
    %v1741 = vpack.c.bf16 %v1535, %v1535
    %v1742 = vpack.c.bf16 %v1536, %v1536
    %v1743 = vpack.c.bf16 %v1543, %v1543
    %v1744 = vpack.c.bf16 %v1544, %v1544
    %v1745 = vpack.c.bf16 %v1551, %v1551
    %v1746 = vpack.c.bf16 %v1552, %v1552
    %v1747 = vpack.c.bf16 %v1559, %v1559
    %v1748 = vpack.c.bf16 %v1560, %v1560
    %v1749 = vpack.c.bf16 %v1567, %v1567
    %v1750 = vpack.c.bf16 %v1568, %v1568
    %v1751 = vpack.c.bf16 %v1575, %v1575
    %v1752 = vpack.c.bf16 %v1576, %v1576
    %v1753 = vpack.c.bf16 %v1583, %v1583
    %v1754 = vpack.c.bf16 %v1584, %v1584
    %v1755 = vpack.c.bf16 %v1591, %v1591
    %v1756 = vpack.c.bf16 %v1592, %v1592
    %v1757 = vpack.c.bf16 %v1599, %v1599
    %v1758 = vpack.c.bf16 %v1600, %v1600
    %v1759 = vpack.c.bf16 %v1607, %v1607
    %v1760 = vpack.c.bf16 %v1608, %v1608
    %v1761 = vpack.c.bf16 %v1615, %v1615
    %v1762 = vpack.c.bf16 %v1616, %v1616
    %v1763 = vpack.c.bf16 %v1623, %v1623
    %v1764 = vpack.c.bf16 %v1624, %v1624
    %v1765 = vpack.c.bf16 %v1631, %v1631
    %v1766 = vpack.c.bf16 %v1632, %v1632
    %v1767 = vpack.c.bf16 %v1639, %v1639
    %v1768 = vpack.c.bf16 %v1640, %v1640
    %v1769 = vld [vmem:[%s3] sm:$0xf]
    %v1770 = vld [vmem:[%s3 + $0x4] sm:$0xf]
    %v1771 = vld [vmem:[%s3 + $0x8] sm:$0xf]
    %v1772 = vld [vmem:[%s3 + $0xc] sm:$0xf]
    %v1773 = vld [vmem:[%s3 + $0x10] sm:$0xf]
    %v1774 = vld [vmem:[%s3 + $0x14] sm:$0xf]
    %v1775 = vld [vmem:[%s3 + $0x18] sm:$0xf]
    %v1776 = vld [vmem:[%s3 + $0x1c] sm:$0xf]
    %v1777 = vld [vmem:[%s3 + $0x20] sm:$0xf]
    %v1778 = vld [vmem:[%s3 + $0x24] sm:$0xf]
    %v1779 = vld [vmem:[%s3 + $0x28] sm:$0xf]
    %v1780 = vld [vmem:[%s3 + $0x2c] sm:$0xf]
    %v1781 = vld [vmem:[%s3 + $0x30] sm:$0xf]
    %v1782 = vld [vmem:[%s3 + $0x34] sm:$0xf]
    %v1783 = vld [vmem:[%s3 + $0x38] sm:$0xf]
    %v1784 = vld [vmem:[%s3 + $0x3c] sm:$0xf]
    %v1785 = vld [vmem:[%s3 + $0x40] sm:$0xf]
    %v1786 = vld [vmem:[%s3 + $0x44] sm:$0xf]
    %v1787 = vld [vmem:[%s3 + $0x48] sm:$0xf]
    %v1788 = vld [vmem:[%s3 + $0x4c] sm:$0xf]
    %v1789 = vld [vmem:[%s3 + $0x50] sm:$0xf]
    %v1790 = vld [vmem:[%s3 + $0x54] sm:$0x1]
    %v1791 = vld [vmem:[%s3 + $0x58] sm:$0xf]
    %v1792 = vld [vmem:[%s3 + $0x5c] sm:$0xf]
    %v1793 = vld [vmem:[%s3 + $0x60] sm:$0xf]
    %v1794 = vld [vmem:[%s3 + $0x64] sm:$0xf]
    %v1795 = vld [vmem:[%s3 + $0x68] sm:$0xf]
    %v1796 = vld [vmem:[%s3 + $0x6c] sm:$0xf]
    %v1797 = vld [vmem:[%s3 + $0x70] sm:$0xf]
    %v1798 = vld [vmem:[%s3 + $0x74] sm:$0xf]
    %v1799 = vld [vmem:[%s3 + $0x78] sm:$0xf]
    %v1800 = vld [vmem:[%s3 + $0x7c] sm:$0xf]
    %v1801 = vld [vmem:[%s3 + $0x80] sm:$0xf]
    %v1802 = vld [vmem:[%s3 + $0x84] sm:$0xf]
    %v1803 = vld [vmem:[%s3 + $0x88] sm:$0xf]
    %v1804 = vld [vmem:[%s3 + $0x8c] sm:$0xf]
    %v1805 = vld [vmem:[%s3 + $0x90] sm:$0xf]
    %v1806 = vld [vmem:[%s3 + $0x94] sm:$0xf]
    %v1807 = vld [vmem:[%s3 + $0x98] sm:$0xf]
    %v1808 = vld [vmem:[%s3 + $0x9c] sm:$0xf]
    %v1809 = vld [vmem:[%s3 + $0xa0] sm:$0xf]
    %v1810 = vld [vmem:[%s3 + $0xa4] sm:$0xf]
    %v1811 = vld [vmem:[%s3 + $0xa8] sm:$0xf]
    %v1812 = vld [vmem:[%s3 + $0xac] sm:$0x1]
    %v1813 = vld [vmem:[%s3 + $0xb0] sm:$0xf]
    %v1814 = vld [vmem:[%s3 + $0xb4] sm:$0xf]
    %v1815 = vld [vmem:[%s3 + $0xb8] sm:$0xf]
    %v1816 = vld [vmem:[%s3 + $0xbc] sm:$0xf]
    %v1817 = vld [vmem:[%s3 + $0xc0] sm:$0xf]
    %v1818 = vld [vmem:[%s3 + $0xc4] sm:$0xf]
    %v1819 = vld [vmem:[%s3 + $0xc8] sm:$0xf]
    %v1820 = vld [vmem:[%s3 + $0xcc] sm:$0xf]
    %v1821 = vld [vmem:[%s3 + $0xd0] sm:$0xf]
    %v1822 = vld [vmem:[%s3 + $0xd4] sm:$0xf]
    %v1823 = vld [vmem:[%s3 + $0xd8] sm:$0xf]
    %v1824 = vld [vmem:[%s3 + $0xdc] sm:$0xf]
    %v1825 = vld [vmem:[%s3 + $0xe0] sm:$0xf]
    %v1826 = vld [vmem:[%s3 + $0xe4] sm:$0xf]
    %v1827 = vld [vmem:[%s3 + $0xe8] sm:$0xf]
    %v1828 = vld [vmem:[%s3 + $0xec] sm:$0xf]
    %v1829 = vld [vmem:[%s3 + $0xf0] sm:$0xf]
    %v1830 = vld [vmem:[%s3 + $0xf4] sm:$0xf]
    %v1831 = vld [vmem:[%s3 + $0xf8] sm:$0xf]
    %v1832 = vld [vmem:[%s3 + $0xfc] sm:$0xf]
    %v1833 = vld [vmem:[%s3 + $0x100] sm:$0xf]
    %v1834 = vld [vmem:[%s3 + $0x104] sm:$0x1]
    %v1835 = vld [vmem:[%s3 + $0x108] sm:$0xf]
    %v1836 = vld [vmem:[%s3 + $0x10c] sm:$0xf]
    %v1837 = vld [vmem:[%s3 + $0x110] sm:$0xf]
    %v1838 = vld [vmem:[%s3 + $0x114] sm:$0xf]
    %v1839 = vld [vmem:[%s3 + $0x118] sm:$0xf]
    %v1840 = vld [vmem:[%s3 + $0x11c] sm:$0xf]
    %v1841 = vld [vmem:[%s3 + $0x120] sm:$0xf]
    %v1842 = vld [vmem:[%s3 + $0x124] sm:$0xf]
    %v1843 = vld [vmem:[%s3 + $0x128] sm:$0xf]
    %v1844 = vld [vmem:[%s3 + $0x12c] sm:$0xf]
    %v1845 = vld [vmem:[%s3 + $0x130] sm:$0xf]
    %v1846 = vld [vmem:[%s3 + $0x134] sm:$0xf]
    %v1847 = vld [vmem:[%s3 + $0x138] sm:$0xf]
    %v1848 = vld [vmem:[%s3 + $0x13c] sm:$0xf]
    %v1849 = vld [vmem:[%s3 + $0x140] sm:$0xf]
    %v1850 = vld [vmem:[%s3 + $0x144] sm:$0xf]
    %v1851 = vld [vmem:[%s3 + $0x148] sm:$0xf]
    %v1852 = vld [vmem:[%s3 + $0x14c] sm:$0xf]
    %v1853 = vld [vmem:[%s3 + $0x150] sm:$0xf]
    %v1854 = vld [vmem:[%s3 + $0x154] sm:$0xf]
    %v1855 = vld [vmem:[%s3 + $0x158] sm:$0xf]
    %v1856 = vld [vmem:[%s3 + $0x15c] sm:$0x1]
    %v1857 = vld [vmem:[%s3 + $0x160] sm:$0xf]
    %v1858 = vld [vmem:[%s3 + $0x164] sm:$0xf]
    %v1859 = vld [vmem:[%s3 + $0x168] sm:$0xf]
    %v1860 = vld [vmem:[%s3 + $0x16c] sm:$0xf]
    %v1861 = vld [vmem:[%s3 + $0x170] sm:$0xf]
    %v1862 = vld [vmem:[%s3 + $0x174] sm:$0xf]
    %v1863 = vld [vmem:[%s3 + $0x178] sm:$0xf]
    %v1864 = vld [vmem:[%s3 + $0x17c] sm:$0xf]
    %v1865 = vld [vmem:[%s3 + $0x180] sm:$0xf]
    %v1866 = vld [vmem:[%s3 + $0x184] sm:$0xf]
    %v1867 = vld [vmem:[%s3 + $0x188] sm:$0xf]
    %v1868 = vld [vmem:[%s3 + $0x18c] sm:$0xf]
    %v1869 = vld [vmem:[%s3 + $0x190] sm:$0xf]
    %v1870 = vld [vmem:[%s3 + $0x194] sm:$0xf]
    %v1871 = vld [vmem:[%s3 + $0x198] sm:$0xf]
    %v1872 = vld [vmem:[%s3 + $0x19c] sm:$0xf]
    %v1873 = vld [vmem:[%s3 + $0x1a0] sm:$0xf]
    %v1874 = vld [vmem:[%s3 + $0x1a4] sm:$0xf]
    %v1875 = vld [vmem:[%s3 + $0x1a8] sm:$0xf]
    %v1876 = vld [vmem:[%s3 + $0x1ac] sm:$0xf]
    %v1877 = vld [vmem:[%s3 + $0x1b0] sm:$0xf]
    %v1878 = vld [vmem:[%s3 + $0x1b4] sm:$0x1]
    %v1879 = vld [vmem:[%s3 + $0x1b8] sm:$0xf]
    %v1880 = vld [vmem:[%s3 + $0x1bc] sm:$0xf]
    %v1881 = vld [vmem:[%s3 + $0x1c0] sm:$0xf]
    %v1882 = vld [vmem:[%s3 + $0x1c4] sm:$0xf]
    %v1883 = vld [vmem:[%s3 + $0x1c8] sm:$0xf]
    %v1884 = vld [vmem:[%s3 + $0x1cc] sm:$0xf]
    %v1885 = vld [vmem:[%s3 + $0x1d0] sm:$0xf]
    %v1886 = vld [vmem:[%s3 + $0x1d4] sm:$0xf]
    %v1887 = vld [vmem:[%s3 + $0x1d8] sm:$0xf]
    %v1888 = vld [vmem:[%s3 + $0x1dc] sm:$0xf]
    %v1889 = vld [vmem:[%s3 + $0x1e0] sm:$0xf]
    %v1890 = vld [vmem:[%s3 + $0x1e4] sm:$0xf]
    %v1891 = vld [vmem:[%s3 + $0x1e8] sm:$0xf]
    %v1892 = vld [vmem:[%s3 + $0x1ec] sm:$0xf]
    %v1893 = vld [vmem:[%s3 + $0x1f0] sm:$0xf]
    %v1894 = vld [vmem:[%s3 + $0x1f4] sm:$0xf]
    %v1895 = vld [vmem:[%s3 + $0x1f8] sm:$0xf]
    %v1896 = vld [vmem:[%s3 + $0x1fc] sm:$0xf]
    %v1897 = vld [vmem:[%s3 + $0x200] sm:$0xf]
    %v1898 = vld [vmem:[%s3 + $0x204] sm:$0xf]
    %v1899 = vld [vmem:[%s3 + $0x208] sm:$0xf]
    %v1900 = vld [vmem:[%s3 + $0x20c] sm:$0x1]
    %v1901 = vld [vmem:[%s3 + $0x210] sm:$0xf]
    %v1902 = vld [vmem:[%s3 + $0x214] sm:$0xf]
    %v1903 = vld [vmem:[%s3 + $0x218] sm:$0xf]
    %v1904 = vld [vmem:[%s3 + $0x21c] sm:$0xf]
    %v1905 = vld [vmem:[%s3 + $0x220] sm:$0xf]
    %v1906 = vld [vmem:[%s3 + $0x224] sm:$0xf]
    %v1907 = vld [vmem:[%s3 + $0x228] sm:$0xf]
    %v1908 = vld [vmem:[%s3 + $0x22c] sm:$0xf]
    %v1909 = vld [vmem:[%s3 + $0x230] sm:$0xf]
    %v1910 = vld [vmem:[%s3 + $0x234] sm:$0xf]
    %v1911 = vld [vmem:[%s3 + $0x238] sm:$0xf]
    %v1912 = vld [vmem:[%s3 + $0x23c] sm:$0xf]
    %v1913 = vld [vmem:[%s3 + $0x240] sm:$0xf]
    %v1914 = vld [vmem:[%s3 + $0x244] sm:$0xf]
    %v1915 = vld [vmem:[%s3 + $0x248] sm:$0xf]
    %v1916 = vld [vmem:[%s3 + $0x24c] sm:$0xf]
    %v1917 = vld [vmem:[%s3 + $0x250] sm:$0xf]
    %v1918 = vld [vmem:[%s3 + $0x254] sm:$0xf]
    %v1919 = vld [vmem:[%s3 + $0x258] sm:$0xf]
    %v1920 = vld [vmem:[%s3 + $0x25c] sm:$0xf]
    %v1921 = vld [vmem:[%s3 + $0x260] sm:$0xf]
    %v1922 = vld [vmem:[%s3 + $0x264] sm:$0x1]
    %v1923 = vld [vmem:[%s3 + $0x268] sm:$0xf]
    %v1924 = vld [vmem:[%s3 + $0x26c] sm:$0xf]
    %v1925 = vld [vmem:[%s3 + $0x270] sm:$0xf]
    %v1926 = vld [vmem:[%s3 + $0x274] sm:$0xf]
    %v1927 = vld [vmem:[%s3 + $0x278] sm:$0xf]
    %v1928 = vld [vmem:[%s3 + $0x27c] sm:$0xf]
    %v1929 = vld [vmem:[%s3 + $0x280] sm:$0xf]
    %v1930 = vld [vmem:[%s3 + $0x284] sm:$0xf]
    %v1931 = vld [vmem:[%s3 + $0x288] sm:$0xf]
    %v1932 = vld [vmem:[%s3 + $0x28c] sm:$0xf]
    %v1933 = vld [vmem:[%s3 + $0x290] sm:$0xf]
    %v1934 = vld [vmem:[%s3 + $0x294] sm:$0xf]
    %v1935 = vld [vmem:[%s3 + $0x298] sm:$0xf]
    %v1936 = vld [vmem:[%s3 + $0x29c] sm:$0xf]
    %v1937 = vld [vmem:[%s3 + $0x2a0] sm:$0xf]
    %v1938 = vld [vmem:[%s3 + $0x2a4] sm:$0xf]
    %v1939 = vld [vmem:[%s3 + $0x2a8] sm:$0xf]
    %v1940 = vld [vmem:[%s3 + $0x2ac] sm:$0xf]
    %v1941 = vld [vmem:[%s3 + $0x2b0] sm:$0xf]
    %v1942 = vld [vmem:[%s3 + $0x2b4] sm:$0xf]
    %v1943 = vld [vmem:[%s3 + $0x2b8] sm:$0xf]
    %v1944 = vld [vmem:[%s3 + $0x2bc] sm:$0x1]
    %v1945 = vld [vmem:[%s3 + $0x2c0] sm:$0xf]
    %v1946 = vld [vmem:[%s3 + $0x2c4] sm:$0xf]
    %v1947 = vld [vmem:[%s3 + $0x2c8] sm:$0xf]
    %v1948 = vld [vmem:[%s3 + $0x2cc] sm:$0xf]
    %v1949 = vld [vmem:[%s3 + $0x2d0] sm:$0xf]
    %v1950 = vld [vmem:[%s3 + $0x2d4] sm:$0xf]
    %v1951 = vld [vmem:[%s3 + $0x2d8] sm:$0xf]
    %v1952 = vld [vmem:[%s3 + $0x2dc] sm:$0xf]
    %v1953 = vld [vmem:[%s3 + $0x2e0] sm:$0xf]
    %v1954 = vld [vmem:[%s3 + $0x2e4] sm:$0xf]
    %v1955 = vld [vmem:[%s3 + $0x2e8] sm:$0xf]
    %v1956 = vld [vmem:[%s3 + $0x2ec] sm:$0xf]
    %v1957 = vld [vmem:[%s3 + $0x2f0] sm:$0xf]
    %v1958 = vld [vmem:[%s3 + $0x2f4] sm:$0xf]
    %v1959 = vld [vmem:[%s3 + $0x2f8] sm:$0xf]
    %v1960 = vld [vmem:[%s3 + $0x2fc] sm:$0xf]
    %v1961 = vld [vmem:[%s3 + $0x300] sm:$0xf]
    %v1962 = vld [vmem:[%s3 + $0x304] sm:$0xf]
    %v1963 = vld [vmem:[%s3 + $0x308] sm:$0xf]
    %v1964 = vld [vmem:[%s3 + $0x30c] sm:$0xf]
    %v1965 = vld [vmem:[%s3 + $0x310] sm:$0xf]
    %v1966 = vld [vmem:[%s3 + $0x314] sm:$0x1]
    %v1967 = vld [vmem:[%s3 + $0x318] sm:$0xf]
    %v1968 = vld [vmem:[%s3 + $0x31c] sm:$0xf]
    %v1969 = vld [vmem:[%s3 + $0x320] sm:$0xf]
    %v1970 = vld [vmem:[%s3 + $0x324] sm:$0xf]
    %v1971 = vld [vmem:[%s3 + $0x328] sm:$0xf]
    %v1972 = vld [vmem:[%s3 + $0x32c] sm:$0xf]
    %v1973 = vld [vmem:[%s3 + $0x330] sm:$0xf]
    %v1974 = vld [vmem:[%s3 + $0x334] sm:$0xf]
    %v1975 = vld [vmem:[%s3 + $0x338] sm:$0xf]
    %v1976 = vld [vmem:[%s3 + $0x33c] sm:$0xf]
    %v1977 = vld [vmem:[%s3 + $0x340] sm:$0xf]
    %v1978 = vld [vmem:[%s3 + $0x344] sm:$0xf]
    %v1979 = vld [vmem:[%s3 + $0x348] sm:$0xf]
    %v1980 = vld [vmem:[%s3 + $0x34c] sm:$0xf]
    %v1981 = vld [vmem:[%s3 + $0x350] sm:$0xf]
    %v1982 = vld [vmem:[%s3 + $0x354] sm:$0xf]
    %v1983 = vld [vmem:[%s3 + $0x358] sm:$0xf]
    %v1984 = vld [vmem:[%s3 + $0x35c] sm:$0xf]
    %v1985 = vld [vmem:[%s3 + $0x360] sm:$0xf]
    %v1986 = vld [vmem:[%s3 + $0x364] sm:$0xf]
    %v1987 = vld [vmem:[%s3 + $0x368] sm:$0xf]
    %v1988 = vld [vmem:[%s3 + $0x36c] sm:$0x1]
    %v1989 = vld [vmem:[%s3 + $0x370] sm:$0xf]
    %v1990 = vld [vmem:[%s3 + $0x374] sm:$0xf]
    %v1991 = vld [vmem:[%s3 + $0x378] sm:$0xf]
    %v1992 = vld [vmem:[%s3 + $0x37c] sm:$0xf]
    %v1993 = vld [vmem:[%s3 + $0x380] sm:$0xf]
    %v1994 = vld [vmem:[%s3 + $0x384] sm:$0xf]
    %v1995 = vld [vmem:[%s3 + $0x388] sm:$0xf]
    %v1996 = vld [vmem:[%s3 + $0x38c] sm:$0xf]
    %v1997 = vld [vmem:[%s3 + $0x390] sm:$0xf]
    %v1998 = vld [vmem:[%s3 + $0x394] sm:$0xf]
    %v1999 = vld [vmem:[%s3 + $0x398] sm:$0xf]
    %v2000 = vld [vmem:[%s3 + $0x39c] sm:$0xf]
    %v2001 = vld [vmem:[%s3 + $0x3a0] sm:$0xf]
    %v2002 = vld [vmem:[%s3 + $0x3a4] sm:$0xf]
    %v2003 = vld [vmem:[%s3 + $0x3a8] sm:$0xf]
    %v2004 = vld [vmem:[%s3 + $0x3ac] sm:$0xf]
    %v2005 = vld [vmem:[%s3 + $0x3b0] sm:$0xf]
    %v2006 = vld [vmem:[%s3 + $0x3b4] sm:$0xf]
    %v2007 = vld [vmem:[%s3 + $0x3b8] sm:$0xf]
    %v2008 = vld [vmem:[%s3 + $0x3bc] sm:$0xf]
    %v2009 = vld [vmem:[%s3 + $0x3c0] sm:$0xf]
    %v2010 = vld [vmem:[%s3 + $0x3c4] sm:$0x1]
    %v2011 = vld [vmem:[%s3 + $0x3c8] sm:$0xf]
    %v2012 = vld [vmem:[%s3 + $0x3cc] sm:$0xf]
    %v2013 = vld [vmem:[%s3 + $0x3d0] sm:$0xf]
    %v2014 = vld [vmem:[%s3 + $0x3d4] sm:$0xf]
    %v2015 = vld [vmem:[%s3 + $0x3d8] sm:$0xf]
    %v2016 = vld [vmem:[%s3 + $0x3dc] sm:$0xf]
    %v2017 = vld [vmem:[%s3 + $0x3e0] sm:$0xf]
    %v2018 = vld [vmem:[%s3 + $0x3e4] sm:$0xf]
    %v2019 = vld [vmem:[%s3 + $0x3e8] sm:$0xf]
    %v2020 = vld [vmem:[%s3 + $0x3ec] sm:$0xf]
    %v2021 = vld [vmem:[%s3 + $0x3f0] sm:$0xf]
    %v2022 = vld [vmem:[%s3 + $0x3f4] sm:$0xf]
    %v2023 = vld [vmem:[%s3 + $0x3f8] sm:$0xf]
    %v2024 = vld [vmem:[%s3 + $0x3fc] sm:$0xf]
    %v2025 = vld [vmem:[%s3 + $0x400] sm:$0xf]
    %v2026 = vld [vmem:[%s3 + $0x404] sm:$0xf]
    %v2027 = vld [vmem:[%s3 + $0x408] sm:$0xf]
    %v2028 = vld [vmem:[%s3 + $0x40c] sm:$0xf]
    %v2029 = vld [vmem:[%s3 + $0x410] sm:$0xf]
    %v2030 = vld [vmem:[%s3 + $0x414] sm:$0xf]
    %v2031 = vld [vmem:[%s3 + $0x418] sm:$0xf]
    %v2032 = vld [vmem:[%s3 + $0x41c] sm:$0x1]
    %v2033 = vld [vmem:[%s3 + $0x420] sm:$0xf]
    %v2034 = vld [vmem:[%s3 + $0x424] sm:$0xf]
    %v2035 = vld [vmem:[%s3 + $0x428] sm:$0xf]
    %v2036 = vld [vmem:[%s3 + $0x42c] sm:$0xf]
    %v2037 = vld [vmem:[%s3 + $0x430] sm:$0xf]
    %v2038 = vld [vmem:[%s3 + $0x434] sm:$0xf]
    %v2039 = vld [vmem:[%s3 + $0x438] sm:$0xf]
    %v2040 = vld [vmem:[%s3 + $0x43c] sm:$0xf]
    %v2041 = vld [vmem:[%s3 + $0x440] sm:$0xf]
    %v2042 = vld [vmem:[%s3 + $0x444] sm:$0xf]
    %v2043 = vld [vmem:[%s3 + $0x448] sm:$0xf]
    %v2044 = vld [vmem:[%s3 + $0x44c] sm:$0xf]
    %v2045 = vld [vmem:[%s3 + $0x450] sm:$0xf]
    %v2046 = vld [vmem:[%s3 + $0x454] sm:$0xf]
    %v2047 = vld [vmem:[%s3 + $0x458] sm:$0xf]
    %v2048 = vld [vmem:[%s3 + $0x45c] sm:$0xf]
    %v2049 = vld [vmem:[%s3 + $0x460] sm:$0xf]
    %v2050 = vld [vmem:[%s3 + $0x464] sm:$0xf]
    %v2051 = vld [vmem:[%s3 + $0x468] sm:$0xf]
    %v2052 = vld [vmem:[%s3 + $0x46c] sm:$0xf]
    %v2053 = vld [vmem:[%s3 + $0x470] sm:$0xf]
    %v2054 = vld [vmem:[%s3 + $0x474] sm:$0x1]
    %v2055 = vld [vmem:[%s3 + $0x478] sm:$0xf]
    %v2056 = vld [vmem:[%s3 + $0x47c] sm:$0xf]
    %v2057 = vld [vmem:[%s3 + $0x480] sm:$0xf]
    %v2058 = vld [vmem:[%s3 + $0x484] sm:$0xf]
    %v2059 = vld [vmem:[%s3 + $0x488] sm:$0xf]
    %v2060 = vld [vmem:[%s3 + $0x48c] sm:$0xf]
    %v2061 = vld [vmem:[%s3 + $0x490] sm:$0xf]
    %v2062 = vld [vmem:[%s3 + $0x494] sm:$0xf]
    %v2063 = vld [vmem:[%s3 + $0x498] sm:$0xf]
    %v2064 = vld [vmem:[%s3 + $0x49c] sm:$0xf]
    %v2065 = vld [vmem:[%s3 + $0x4a0] sm:$0xf]
    %v2066 = vld [vmem:[%s3 + $0x4a4] sm:$0xf]
    %v2067 = vld [vmem:[%s3 + $0x4a8] sm:$0xf]
    %v2068 = vld [vmem:[%s3 + $0x4ac] sm:$0xf]
    %v2069 = vld [vmem:[%s3 + $0x4b0] sm:$0xf]
    %v2070 = vld [vmem:[%s3 + $0x4b4] sm:$0xf]
    %v2071 = vld [vmem:[%s3 + $0x4b8] sm:$0xf]
    %v2072 = vld [vmem:[%s3 + $0x4bc] sm:$0xf]
    %v2073 = vld [vmem:[%s3 + $0x4c0] sm:$0xf]
    %v2074 = vld [vmem:[%s3 + $0x4c4] sm:$0xf]
    %v2075 = vld [vmem:[%s3 + $0x4c8] sm:$0xf]
    %v2076 = vld [vmem:[%s3 + $0x4cc] sm:$0x1]
    %v2077 = vld [vmem:[%s3 + $0x4d0] sm:$0xf]
    %v2078 = vld [vmem:[%s3 + $0x4d4] sm:$0xf]
    %v2079 = vld [vmem:[%s3 + $0x4d8] sm:$0xf]
    %v2080 = vld [vmem:[%s3 + $0x4dc] sm:$0xf]
    %v2081 = vld [vmem:[%s3 + $0x4e0] sm:$0xf]
    %v2082 = vld [vmem:[%s3 + $0x4e4] sm:$0xf]
    %v2083 = vld [vmem:[%s3 + $0x4e8] sm:$0xf]
    %v2084 = vld [vmem:[%s3 + $0x4ec] sm:$0xf]
    %v2085 = vld [vmem:[%s3 + $0x4f0] sm:$0xf]
    %v2086 = vld [vmem:[%s3 + $0x4f4] sm:$0xf]
    %v2087 = vld [vmem:[%s3 + $0x4f8] sm:$0xf]
    %v2088 = vld [vmem:[%s3 + $0x4fc] sm:$0xf]
    %v2089 = vld [vmem:[%s3 + $0x500] sm:$0xf]
    %v2090 = vld [vmem:[%s3 + $0x504] sm:$0xf]
    %v2091 = vld [vmem:[%s3 + $0x508] sm:$0xf]
    %v2092 = vld [vmem:[%s3 + $0x50c] sm:$0xf]
    %v2093 = vld [vmem:[%s3 + $0x510] sm:$0xf]
    %v2094 = vld [vmem:[%s3 + $0x514] sm:$0xf]
    %v2095 = vld [vmem:[%s3 + $0x518] sm:$0xf]
    %v2096 = vld [vmem:[%s3 + $0x51c] sm:$0xf]
    %v2097 = vld [vmem:[%s3 + $0x520] sm:$0xf]
    %v2098 = vld [vmem:[%s3 + $0x524] sm:$0x1]
    %v2099 = vld [vmem:[%s3 + $0x528] sm:$0xf]
    %v2100 = vld [vmem:[%s3 + $0x52c] sm:$0xf]
    %v2101 = vld [vmem:[%s3 + $0x530] sm:$0xf]
    %v2102 = vld [vmem:[%s3 + $0x534] sm:$0xf]
    %v2103 = vld [vmem:[%s3 + $0x538] sm:$0xf]
    %v2104 = vld [vmem:[%s3 + $0x53c] sm:$0xf]
    %v2105 = vld [vmem:[%s3 + $0x540] sm:$0xf]
    %v2106 = vld [vmem:[%s3 + $0x544] sm:$0xf]
    %v2107 = vld [vmem:[%s3 + $0x548] sm:$0xf]
    %v2108 = vld [vmem:[%s3 + $0x54c] sm:$0xf]
    %v2109 = vld [vmem:[%s3 + $0x550] sm:$0xf]
    %v2110 = vld [vmem:[%s3 + $0x554] sm:$0xf]
    %v2111 = vld [vmem:[%s3 + $0x558] sm:$0xf]
    %v2112 = vld [vmem:[%s3 + $0x55c] sm:$0xf]
    %v2113 = vld [vmem:[%s3 + $0x560] sm:$0xf]
    %v2114 = vld [vmem:[%s3 + $0x564] sm:$0xf]
    %v2115 = vld [vmem:[%s3 + $0x568] sm:$0xf]
    %v2116 = vld [vmem:[%s3 + $0x56c] sm:$0xf]
    %v2117 = vld [vmem:[%s3 + $0x570] sm:$0xf]
    %v2118 = vld [vmem:[%s3 + $0x574] sm:$0xf]
    %v2119 = vld [vmem:[%s3 + $0x578] sm:$0xf]
    %v2120 = vld [vmem:[%s3 + $0x57c] sm:$0x1]
    %v2121 = vld [vmem:[%s3 + $0x580] sm:$0xf]
    %v2122 = vld [vmem:[%s3 + $0x584] sm:$0xf]
    %v2123 = vld [vmem:[%s3 + $0x588] sm:$0xf]
    %v2124 = vld [vmem:[%s3 + $0x58c] sm:$0xf]
    %v2125 = vld [vmem:[%s3 + $0x590] sm:$0xf]
    %v2126 = vld [vmem:[%s3 + $0x594] sm:$0xf]
    %v2127 = vld [vmem:[%s3 + $0x598] sm:$0xf]
    %v2128 = vld [vmem:[%s3 + $0x59c] sm:$0xf]
    %v2129 = vld [vmem:[%s3 + $0x5a0] sm:$0xf]
    %v2130 = vld [vmem:[%s3 + $0x5a4] sm:$0xf]
    %v2131 = vld [vmem:[%s3 + $0x5a8] sm:$0xf]
    %v2132 = vld [vmem:[%s3 + $0x5ac] sm:$0xf]
    %v2133 = vld [vmem:[%s3 + $0x5b0] sm:$0xf]
    %v2134 = vld [vmem:[%s3 + $0x5b4] sm:$0xf]
    %v2135 = vld [vmem:[%s3 + $0x5b8] sm:$0xf]
    %v2136 = vld [vmem:[%s3 + $0x5bc] sm:$0xf]
    %v2137 = vld [vmem:[%s3 + $0x5c0] sm:$0xf]
    %v2138 = vld [vmem:[%s3 + $0x5c4] sm:$0xf]
    %v2139 = vld [vmem:[%s3 + $0x5c8] sm:$0xf]
    %v2140 = vld [vmem:[%s3 + $0x5cc] sm:$0xf]
    %v2141 = vld [vmem:[%s3 + $0x5d0] sm:$0xf]
    %v2142 = vld [vmem:[%s3 + $0x5d4] sm:$0x1]
    %v2143 = vld [vmem:[%s3 + $0x5d8] sm:$0xf]
    %v2144 = vld [vmem:[%s3 + $0x5dc] sm:$0xf]
    %v2145 = vld [vmem:[%s3 + $0x5e0] sm:$0xf]
    %v2146 = vld [vmem:[%s3 + $0x5e4] sm:$0xf]
    %v2147 = vld [vmem:[%s3 + $0x5e8] sm:$0xf]
    %v2148 = vld [vmem:[%s3 + $0x5ec] sm:$0xf]
    %v2149 = vld [vmem:[%s3 + $0x5f0] sm:$0xf]
    %v2150 = vld [vmem:[%s3 + $0x5f4] sm:$0xf]
    %v2151 = vld [vmem:[%s3 + $0x5f8] sm:$0xf]
    %v2152 = vld [vmem:[%s3 + $0x5fc] sm:$0xf]
    %v2153 = vld [vmem:[%s3 + $0x600] sm:$0xf]
    %v2154 = vld [vmem:[%s3 + $0x604] sm:$0xf]
    %v2155 = vld [vmem:[%s3 + $0x608] sm:$0xf]
    %v2156 = vld [vmem:[%s3 + $0x60c] sm:$0xf]
    %v2157 = vld [vmem:[%s3 + $0x610] sm:$0xf]
    %v2158 = vld [vmem:[%s3 + $0x614] sm:$0xf]
    %v2159 = vld [vmem:[%s3 + $0x618] sm:$0xf]
    %v2160 = vld [vmem:[%s3 + $0x61c] sm:$0xf]
    %v2161 = vld [vmem:[%s3 + $0x620] sm:$0xf]
    %v2162 = vld [vmem:[%s3 + $0x624] sm:$0xf]
    %v2163 = vld [vmem:[%s3 + $0x628] sm:$0xf]
    %v2164 = vld [vmem:[%s3 + $0x62c] sm:$0x1]
    %v2165 = vld [vmem:[%s3 + $0x630] sm:$0xf]
    %v2166 = vld [vmem:[%s3 + $0x634] sm:$0xf]
    %v2167 = vld [vmem:[%s3 + $0x638] sm:$0xf]
    %v2168 = vld [vmem:[%s3 + $0x63c] sm:$0xf]
    %v2169 = vld [vmem:[%s3 + $0x640] sm:$0xf]
    %v2170 = vld [vmem:[%s3 + $0x644] sm:$0xf]
    %v2171 = vld [vmem:[%s3 + $0x648] sm:$0xf]
    %v2172 = vld [vmem:[%s3 + $0x64c] sm:$0xf]
    %v2173 = vld [vmem:[%s3 + $0x650] sm:$0xf]
    %v2174 = vld [vmem:[%s3 + $0x654] sm:$0xf]
    %v2175 = vld [vmem:[%s3 + $0x658] sm:$0xf]
    %v2176 = vld [vmem:[%s3 + $0x65c] sm:$0xf]
    %v2177 = vld [vmem:[%s3 + $0x660] sm:$0xf]
    %v2178 = vld [vmem:[%s3 + $0x664] sm:$0xf]
    %v2179 = vld [vmem:[%s3 + $0x668] sm:$0xf]
    %v2180 = vld [vmem:[%s3 + $0x66c] sm:$0xf]
    %v2181 = vld [vmem:[%s3 + $0x670] sm:$0xf]
    %v2182 = vld [vmem:[%s3 + $0x674] sm:$0xf]
    %v2183 = vld [vmem:[%s3 + $0x678] sm:$0xf]
    %v2184 = vld [vmem:[%s3 + $0x67c] sm:$0xf]
    %v2185 = vld [vmem:[%s3 + $0x680] sm:$0xf]
    %v2186 = vld [vmem:[%s3 + $0x684] sm:$0x1]
    %v2187 = vld [vmem:[%s3 + $0x688] sm:$0xf]
    %v2188 = vld [vmem:[%s3 + $0x68c] sm:$0xf]
    %v2189 = vld [vmem:[%s3 + $0x690] sm:$0xf]
    %v2190 = vld [vmem:[%s3 + $0x694] sm:$0xf]
    %v2191 = vld [vmem:[%s3 + $0x698] sm:$0xf]
    %v2192 = vld [vmem:[%s3 + $0x69c] sm:$0xf]
    %v2193 = vld [vmem:[%s3 + $0x6a0] sm:$0xf]
    %v2194 = vld [vmem:[%s3 + $0x6a4] sm:$0xf]
    %v2195 = vld [vmem:[%s3 + $0x6a8] sm:$0xf]
    %v2196 = vld [vmem:[%s3 + $0x6ac] sm:$0xf]
    %v2197 = vld [vmem:[%s3 + $0x6b0] sm:$0xf]
    %v2198 = vld [vmem:[%s3 + $0x6b4] sm:$0xf]
    %v2199 = vld [vmem:[%s3 + $0x6b8] sm:$0xf]
    %v2200 = vld [vmem:[%s3 + $0x6bc] sm:$0xf]
    %v2201 = vld [vmem:[%s3 + $0x6c0] sm:$0xf]
    %v2202 = vld [vmem:[%s3 + $0x6c4] sm:$0xf]
    %v2203 = vld [vmem:[%s3 + $0x6c8] sm:$0xf]
    %v2204 = vld [vmem:[%s3 + $0x6cc] sm:$0xf]
    %v2205 = vld [vmem:[%s3 + $0x6d0] sm:$0xf]
    %v2206 = vld [vmem:[%s3 + $0x6d4] sm:$0xf]
    %v2207 = vld [vmem:[%s3 + $0x6d8] sm:$0xf]
    %v2208 = vld [vmem:[%s3 + $0x6dc] sm:$0x1]
    %v2209 = vld [vmem:[%s3 + $0x6e0] sm:$0xf]
    %v2210 = vld [vmem:[%s3 + $0x6e4] sm:$0xf]
    %v2211 = vld [vmem:[%s3 + $0x6e8] sm:$0xf]
    %v2212 = vld [vmem:[%s3 + $0x6ec] sm:$0xf]
    %v2213 = vld [vmem:[%s3 + $0x6f0] sm:$0xf]
    %v2214 = vld [vmem:[%s3 + $0x6f4] sm:$0xf]
    %v2215 = vld [vmem:[%s3 + $0x6f8] sm:$0xf]
    %v2216 = vld [vmem:[%s3 + $0x6fc] sm:$0xf]
    %v2217 = vld [vmem:[%s3 + $0x700] sm:$0xf]
    %v2218 = vld [vmem:[%s3 + $0x704] sm:$0xf]
    %v2219 = vld [vmem:[%s3 + $0x708] sm:$0xf]
    %v2220 = vld [vmem:[%s3 + $0x70c] sm:$0xf]
    %v2221 = vld [vmem:[%s3 + $0x710] sm:$0xf]
    %v2222 = vld [vmem:[%s3 + $0x714] sm:$0xf]
    %v2223 = vld [vmem:[%s3 + $0x718] sm:$0xf]
    %v2224 = vld [vmem:[%s3 + $0x71c] sm:$0xf]
    %v2225 = vld [vmem:[%s3 + $0x720] sm:$0xf]
    %v2226 = vld [vmem:[%s3 + $0x724] sm:$0xf]
    %v2227 = vld [vmem:[%s3 + $0x728] sm:$0xf]
    %v2228 = vld [vmem:[%s3 + $0x72c] sm:$0xf]
    %v2229 = vld [vmem:[%s3 + $0x730] sm:$0xf]
    %v2230 = vld [vmem:[%s3 + $0x734] sm:$0x1]
    %v2231 = vld [vmem:[%s3 + $0x738] sm:$0xf]
    %v2232 = vld [vmem:[%s3 + $0x73c] sm:$0xf]
    %v2233 = vld [vmem:[%s3 + $0x740] sm:$0xf]
    %v2234 = vld [vmem:[%s3 + $0x744] sm:$0xf]
    %v2235 = vld [vmem:[%s3 + $0x748] sm:$0xf]
    %v2236 = vld [vmem:[%s3 + $0x74c] sm:$0xf]
    %v2237 = vld [vmem:[%s3 + $0x750] sm:$0xf]
    %v2238 = vld [vmem:[%s3 + $0x754] sm:$0xf]
    %v2239 = vld [vmem:[%s3 + $0x758] sm:$0xf]
    %v2240 = vld [vmem:[%s3 + $0x75c] sm:$0xf]
    %v2241 = vld [vmem:[%s3 + $0x760] sm:$0xf]
    %v2242 = vld [vmem:[%s3 + $0x764] sm:$0xf]
    %v2243 = vld [vmem:[%s3 + $0x768] sm:$0xf]
    %v2244 = vld [vmem:[%s3 + $0x76c] sm:$0xf]
    %v2245 = vld [vmem:[%s3 + $0x770] sm:$0xf]
    %v2246 = vld [vmem:[%s3 + $0x774] sm:$0xf]
    %v2247 = vld [vmem:[%s3 + $0x778] sm:$0xf]
    %v2248 = vld [vmem:[%s3 + $0x77c] sm:$0xf]
    %v2249 = vld [vmem:[%s3 + $0x780] sm:$0xf]
    %v2250 = vld [vmem:[%s3 + $0x784] sm:$0xf]
    %v2251 = vld [vmem:[%s3 + $0x788] sm:$0xf]
    %v2252 = vld [vmem:[%s3 + $0x78c] sm:$0x1]
    %v2253 = vld [vmem:[%s3 + $0x790] sm:$0xf]
    %v2254 = vld [vmem:[%s3 + $0x794] sm:$0xf]
    %v2255 = vld [vmem:[%s3 + $0x798] sm:$0xf]
    %v2256 = vld [vmem:[%s3 + $0x79c] sm:$0xf]
    %v2257 = vld [vmem:[%s3 + $0x7a0] sm:$0xf]
    %v2258 = vld [vmem:[%s3 + $0x7a4] sm:$0xf]
    %v2259 = vld [vmem:[%s3 + $0x7a8] sm:$0xf]
    %v2260 = vld [vmem:[%s3 + $0x7ac] sm:$0xf]
    %v2261 = vld [vmem:[%s3 + $0x7b0] sm:$0xf]
    %v2262 = vld [vmem:[%s3 + $0x7b4] sm:$0xf]
    %v2263 = vld [vmem:[%s3 + $0x7b8] sm:$0xf]
    %v2264 = vld [vmem:[%s3 + $0x7bc] sm:$0xf]
    %v2265 = vld [vmem:[%s3 + $0x7c0] sm:$0xf]
    %v2266 = vld [vmem:[%s3 + $0x7c4] sm:$0xf]
    %v2267 = vld [vmem:[%s3 + $0x7c8] sm:$0xf]
    %v2268 = vld [vmem:[%s3 + $0x7cc] sm:$0xf]
    %v2269 = vld [vmem:[%s3 + $0x7d0] sm:$0xf]
    %v2270 = vld [vmem:[%s3 + $0x7d4] sm:$0xf]
    %v2271 = vld [vmem:[%s3 + $0x7d8] sm:$0xf]
    %v2272 = vld [vmem:[%s3 + $0x7dc] sm:$0xf]
    %v2273 = vld [vmem:[%s3 + $0x7e0] sm:$0xf]
    %v2274 = vld [vmem:[%s3 + $0x7e4] sm:$0x1]
    %v2275 = vld [vmem:[%s3 + $0x7e8] sm:$0xf]
    %v2276 = vld [vmem:[%s3 + $0x7ec] sm:$0xf]
    %v2277 = vld [vmem:[%s3 + $0x7f0] sm:$0xf]
    %v2278 = vld [vmem:[%s3 + $0x7f4] sm:$0xf]
    %v2279 = vld [vmem:[%s3 + $0x7f8] sm:$0xf]
    %v2280 = vld [vmem:[%s3 + $0x7fc] sm:$0xf]
    %v2281 = vld [vmem:[%s3 + $0x800] sm:$0xf]
    %v2282 = vld [vmem:[%s3 + $0x804] sm:$0xf]
    %v2283 = vld [vmem:[%s3 + $0x808] sm:$0xf]
    %v2284 = vld [vmem:[%s3 + $0x80c] sm:$0xf]
    %v2285 = vld [vmem:[%s3 + $0x810] sm:$0xf]
    %v2286 = vld [vmem:[%s3 + $0x814] sm:$0xf]
    %v2287 = vld [vmem:[%s3 + $0x818] sm:$0xf]
    %v2288 = vld [vmem:[%s3 + $0x81c] sm:$0xf]
    %v2289 = vld [vmem:[%s3 + $0x820] sm:$0xf]
    %v2290 = vld [vmem:[%s3 + $0x824] sm:$0xf]
    %v2291 = vld [vmem:[%s3 + $0x828] sm:$0xf]
    %v2292 = vld [vmem:[%s3 + $0x82c] sm:$0xf]
    %v2293 = vld [vmem:[%s3 + $0x830] sm:$0xf]
    %v2294 = vld [vmem:[%s3 + $0x834] sm:$0xf]
    %v2295 = vld [vmem:[%s3 + $0x838] sm:$0xf]
    %v2296 = vld [vmem:[%s3 + $0x83c] sm:$0x1]
    %v2297 = vld [vmem:[%s3 + $0x840] sm:$0xf]
    %v2298 = vld [vmem:[%s3 + $0x844] sm:$0xf]
    %v2299 = vld [vmem:[%s3 + $0x848] sm:$0xf]
    %v2300 = vld [vmem:[%s3 + $0x84c] sm:$0xf]
    %v2301 = vld [vmem:[%s3 + $0x850] sm:$0xf]
    %v2302 = vld [vmem:[%s3 + $0x854] sm:$0xf]
    %v2303 = vld [vmem:[%s3 + $0x858] sm:$0xf]
    %v2304 = vld [vmem:[%s3 + $0x85c] sm:$0xf]
    %v2305 = vld [vmem:[%s3 + $0x860] sm:$0xf]
    %v2306 = vld [vmem:[%s3 + $0x864] sm:$0xf]
    %v2307 = vld [vmem:[%s3 + $0x868] sm:$0xf]
    %v2308 = vld [vmem:[%s3 + $0x86c] sm:$0xf]
    %v2309 = vld [vmem:[%s3 + $0x870] sm:$0xf]
    %v2310 = vld [vmem:[%s3 + $0x874] sm:$0xf]
    %v2311 = vld [vmem:[%s3 + $0x878] sm:$0xf]
    %v2312 = vld [vmem:[%s3 + $0x87c] sm:$0xf]
    %v2313 = vld [vmem:[%s3 + $0x880] sm:$0xf]
    %v2314 = vld [vmem:[%s3 + $0x884] sm:$0xf]
    %v2315 = vld [vmem:[%s3 + $0x888] sm:$0xf]
    %v2316 = vld [vmem:[%s3 + $0x88c] sm:$0xf]
    %v2317 = vld [vmem:[%s3 + $0x890] sm:$0xf]
    %v2318 = vld [vmem:[%s3 + $0x894] sm:$0x1]
    %v2319 = vld [vmem:[%s3 + $0x898] sm:$0xf]
    %v2320 = vld [vmem:[%s3 + $0x89c] sm:$0xf]
    %v2321 = vld [vmem:[%s3 + $0x8a0] sm:$0xf]
    %v2322 = vld [vmem:[%s3 + $0x8a4] sm:$0xf]
    %v2323 = vld [vmem:[%s3 + $0x8a8] sm:$0xf]
    %v2324 = vld [vmem:[%s3 + $0x8ac] sm:$0xf]
    %v2325 = vld [vmem:[%s3 + $0x8b0] sm:$0xf]
    %v2326 = vld [vmem:[%s3 + $0x8b4] sm:$0xf]
    %v2327 = vld [vmem:[%s3 + $0x8b8] sm:$0xf]
    %v2328 = vld [vmem:[%s3 + $0x8bc] sm:$0xf]
    %v2329 = vld [vmem:[%s3 + $0x8c0] sm:$0xf]
    %v2330 = vld [vmem:[%s3 + $0x8c4] sm:$0xf]
    %v2331 = vld [vmem:[%s3 + $0x8c8] sm:$0xf]
    %v2332 = vld [vmem:[%s3 + $0x8cc] sm:$0xf]
    %v2333 = vld [vmem:[%s3 + $0x8d0] sm:$0xf]
    %v2334 = vld [vmem:[%s3 + $0x8d4] sm:$0xf]
    %v2335 = vld [vmem:[%s3 + $0x8d8] sm:$0xf]
    %v2336 = vld [vmem:[%s3 + $0x8dc] sm:$0xf]
    %v2337 = vld [vmem:[%s3 + $0x8e0] sm:$0xf]
    %v2338 = vld [vmem:[%s3 + $0x8e4] sm:$0xf]
    %v2339 = vld [vmem:[%s3 + $0x8e8] sm:$0xf]
    %v2340 = vld [vmem:[%s3 + $0x8ec] sm:$0x1]
    %v2341 = vld [vmem:[%s3 + $0x8f0] sm:$0xf]
    %v2342 = vld [vmem:[%s3 + $0x8f4] sm:$0xf]
    %v2343 = vld [vmem:[%s3 + $0x8f8] sm:$0xf]
    %v2344 = vld [vmem:[%s3 + $0x8fc] sm:$0xf]
    %v2345 = vld [vmem:[%s3 + $0x900] sm:$0xf]
    %v2346 = vld [vmem:[%s3 + $0x904] sm:$0xf]
    %v2347 = vld [vmem:[%s3 + $0x908] sm:$0xf]
    %v2348 = vld [vmem:[%s3 + $0x90c] sm:$0xf]
    %v2349 = vld [vmem:[%s3 + $0x910] sm:$0xf]
    %v2350 = vld [vmem:[%s3 + $0x914] sm:$0xf]
    %v2351 = vld [vmem:[%s3 + $0x918] sm:$0xf]
    %v2352 = vld [vmem:[%s3 + $0x91c] sm:$0xf]
    %v2353 = vld [vmem:[%s3 + $0x920] sm:$0xf]
    %v2354 = vld [vmem:[%s3 + $0x924] sm:$0xf]
    %v2355 = vld [vmem:[%s3 + $0x928] sm:$0xf]
    %v2356 = vld [vmem:[%s3 + $0x92c] sm:$0xf]
    %v2357 = vld [vmem:[%s3 + $0x930] sm:$0xf]
    %v2358 = vld [vmem:[%s3 + $0x934] sm:$0xf]
    %v2359 = vld [vmem:[%s3 + $0x938] sm:$0xf]
    %v2360 = vld [vmem:[%s3 + $0x93c] sm:$0xf]
    %v2361 = vld [vmem:[%s3 + $0x940] sm:$0xf]
    %v2362 = vld [vmem:[%s3 + $0x944] sm:$0x1]
    %v2363 = vld [vmem:[%s3 + $0x948] sm:$0xf]
    %v2364 = vld [vmem:[%s3 + $0x94c] sm:$0xf]
    %v2365 = vld [vmem:[%s3 + $0x950] sm:$0xf]
    %v2366 = vld [vmem:[%s3 + $0x954] sm:$0xf]
    %v2367 = vld [vmem:[%s3 + $0x958] sm:$0xf]
    %v2368 = vld [vmem:[%s3 + $0x95c] sm:$0xf]
    %v2369 = vld [vmem:[%s3 + $0x960] sm:$0xf]
    %v2370 = vld [vmem:[%s3 + $0x964] sm:$0xf]
    %v2371 = vld [vmem:[%s3 + $0x968] sm:$0xf]
    %v2372 = vld [vmem:[%s3 + $0x96c] sm:$0xf]
    %v2373 = vld [vmem:[%s3 + $0x970] sm:$0xf]
    %v2374 = vld [vmem:[%s3 + $0x974] sm:$0xf]
    %v2375 = vld [vmem:[%s3 + $0x978] sm:$0xf]
    %v2376 = vld [vmem:[%s3 + $0x97c] sm:$0xf]
    %v2377 = vld [vmem:[%s3 + $0x980] sm:$0xf]
    %v2378 = vld [vmem:[%s3 + $0x984] sm:$0xf]
    %v2379 = vld [vmem:[%s3 + $0x988] sm:$0xf]
    %v2380 = vld [vmem:[%s3 + $0x98c] sm:$0xf]
    %v2381 = vld [vmem:[%s3 + $0x990] sm:$0xf]
    %v2382 = vld [vmem:[%s3 + $0x994] sm:$0xf]
    %v2383 = vld [vmem:[%s3 + $0x998] sm:$0xf]
    %v2384 = vld [vmem:[%s3 + $0x99c] sm:$0x1]
    %v2385 = vld [vmem:[%s3 + $0x9a0] sm:$0xf]
    %v2386 = vld [vmem:[%s3 + $0x9a4] sm:$0xf]
    %v2387 = vld [vmem:[%s3 + $0x9a8] sm:$0xf]
    %v2388 = vld [vmem:[%s3 + $0x9ac] sm:$0xf]
    %v2389 = vld [vmem:[%s3 + $0x9b0] sm:$0xf]
    %v2390 = vld [vmem:[%s3 + $0x9b4] sm:$0xf]
    %v2391 = vld [vmem:[%s3 + $0x9b8] sm:$0xf]
    %v2392 = vld [vmem:[%s3 + $0x9bc] sm:$0xf]
    %v2393 = vld [vmem:[%s3 + $0x9c0] sm:$0xf]
    %v2394 = vld [vmem:[%s3 + $0x9c4] sm:$0xf]
    %v2395 = vld [vmem:[%s3 + $0x9c8] sm:$0xf]
    %v2396 = vld [vmem:[%s3 + $0x9cc] sm:$0xf]
    %v2397 = vld [vmem:[%s3 + $0x9d0] sm:$0xf]
    %v2398 = vld [vmem:[%s3 + $0x9d4] sm:$0xf]
    %v2399 = vld [vmem:[%s3 + $0x9d8] sm:$0xf]
    %v2400 = vld [vmem:[%s3 + $0x9dc] sm:$0xf]
    %v2401 = vld [vmem:[%s3 + $0x9e0] sm:$0xf]
    %v2402 = vld [vmem:[%s3 + $0x9e4] sm:$0xf]
    %v2403 = vld [vmem:[%s3 + $0x9e8] sm:$0xf]
    %v2404 = vld [vmem:[%s3 + $0x9ec] sm:$0xf]
    %v2405 = vld [vmem:[%s3 + $0x9f0] sm:$0xf]
    %v2406 = vld [vmem:[%s3 + $0x9f4] sm:$0x1]
    %v2407 = vld [vmem:[%s3 + $0x9f8] sm:$0xf]
    %v2408 = vld [vmem:[%s3 + $0x9fc] sm:$0xf]
    %v2409 = vld [vmem:[%s3 + $0xa00] sm:$0xf]
    %v2410 = vld [vmem:[%s3 + $0xa04] sm:$0xf]
    %v2411 = vld [vmem:[%s3 + $0xa08] sm:$0xf]
    %v2412 = vld [vmem:[%s3 + $0xa0c] sm:$0xf]
    %v2413 = vld [vmem:[%s3 + $0xa10] sm:$0xf]
    %v2414 = vld [vmem:[%s3 + $0xa14] sm:$0xf]
    %v2415 = vld [vmem:[%s3 + $0xa18] sm:$0xf]
    %v2416 = vld [vmem:[%s3 + $0xa1c] sm:$0xf]
    %v2417 = vld [vmem:[%s3 + $0xa20] sm:$0xf]
    %v2418 = vld [vmem:[%s3 + $0xa24] sm:$0xf]
    %v2419 = vld [vmem:[%s3 + $0xa28] sm:$0xf]
    %v2420 = vld [vmem:[%s3 + $0xa2c] sm:$0xf]
    %v2421 = vld [vmem:[%s3 + $0xa30] sm:$0xf]
    %v2422 = vld [vmem:[%s3 + $0xa34] sm:$0xf]
    %v2423 = vld [vmem:[%s3 + $0xa38] sm:$0xf]
    %v2424 = vld [vmem:[%s3 + $0xa3c] sm:$0xf]
    %v2425 = vld [vmem:[%s3 + $0xa40] sm:$0xf]
    %v2426 = vld [vmem:[%s3 + $0xa44] sm:$0xf]
    %v2427 = vld [vmem:[%s3 + $0xa48] sm:$0xf]
    %v2428 = vld [vmem:[%s3 + $0xa4c] sm:$0x1]
    %v2429 = vld [vmem:[%s3 + $0xa50] sm:$0xf]
    %v2430 = vld [vmem:[%s3 + $0xa54] sm:$0xf]
    %v2431 = vld [vmem:[%s3 + $0xa58] sm:$0xf]
    %v2432 = vld [vmem:[%s3 + $0xa5c] sm:$0xf]
    %v2433 = vld [vmem:[%s3 + $0xa60] sm:$0xf]
    %v2434 = vld [vmem:[%s3 + $0xa64] sm:$0xf]
    %v2435 = vld [vmem:[%s3 + $0xa68] sm:$0xf]
    %v2436 = vld [vmem:[%s3 + $0xa6c] sm:$0xf]
    %v2437 = vld [vmem:[%s3 + $0xa70] sm:$0xf]
    %v2438 = vld [vmem:[%s3 + $0xa74] sm:$0xf]
    %v2439 = vld [vmem:[%s3 + $0xa78] sm:$0xf]
    %v2440 = vld [vmem:[%s3 + $0xa7c] sm:$0xf]
    %v2441 = vld [vmem:[%s3 + $0xa80] sm:$0xf]
    %v2442 = vld [vmem:[%s3 + $0xa84] sm:$0xf]
    %v2443 = vld [vmem:[%s3 + $0xa88] sm:$0xf]
    %v2444 = vld [vmem:[%s3 + $0xa8c] sm:$0xf]
    %v2445 = vld [vmem:[%s3 + $0xa90] sm:$0xf]
    %v2446 = vld [vmem:[%s3 + $0xa94] sm:$0xf]
    %v2447 = vld [vmem:[%s3 + $0xa98] sm:$0xf]
    %v2448 = vld [vmem:[%s3 + $0xa9c] sm:$0xf]
    %v2449 = vld [vmem:[%s3 + $0xaa0] sm:$0xf]
    %v2450 = vld [vmem:[%s3 + $0xaa4] sm:$0x1]
    %v2451 = vld [vmem:[%s3 + $0xaa8] sm:$0xf]
    %v2452 = vld [vmem:[%s3 + $0xaac] sm:$0xf]
    %v2453 = vld [vmem:[%s3 + $0xab0] sm:$0xf]
    %v2454 = vld [vmem:[%s3 + $0xab4] sm:$0xf]
    %v2455 = vld [vmem:[%s3 + $0xab8] sm:$0xf]
    %v2456 = vld [vmem:[%s3 + $0xabc] sm:$0xf]
    %v2457 = vld [vmem:[%s3 + $0xac0] sm:$0xf]
    %v2458 = vld [vmem:[%s3 + $0xac4] sm:$0xf]
    %v2459 = vld [vmem:[%s3 + $0xac8] sm:$0xf]
    %v2460 = vld [vmem:[%s3 + $0xacc] sm:$0xf]
    %v2461 = vld [vmem:[%s3 + $0xad0] sm:$0xf]
    %v2462 = vld [vmem:[%s3 + $0xad4] sm:$0xf]
    %v2463 = vld [vmem:[%s3 + $0xad8] sm:$0xf]
    %v2464 = vld [vmem:[%s3 + $0xadc] sm:$0xf]
    %v2465 = vld [vmem:[%s3 + $0xae0] sm:$0xf]
    %v2466 = vld [vmem:[%s3 + $0xae4] sm:$0xf]
    %v2467 = vld [vmem:[%s3 + $0xae8] sm:$0xf]
    %v2468 = vld [vmem:[%s3 + $0xaec] sm:$0xf]
    %v2469 = vld [vmem:[%s3 + $0xaf0] sm:$0xf]
    %v2470 = vld [vmem:[%s3 + $0xaf4] sm:$0xf]
    %v2471 = vld [vmem:[%s3 + $0xaf8] sm:$0xf]
    %v2472 = vld [vmem:[%s3 + $0xafc] sm:$0x1]
    %v2495 = vunpack.c.l.b16 %v1769
    %v2496 = vunpack.c.l.b16 %v1770
    %v2497 = vunpack.c.l.b16 %v1771
    %v2498 = vunpack.c.l.b16 %v1772
    %v2499 = vunpack.c.l.b16 %v1773
    %v2500 = vunpack.c.l.b16 %v1774
    %v2501 = vunpack.c.l.b16 %v1775
    %v2502 = vunpack.c.l.b16 %v1776
    %v2503 = vunpack.c.l.b16 %v1777
    %v2504 = vunpack.c.l.b16 %v1778
    %v2505 = vunpack.c.l.b16 %v1779
    %v2506 = vunpack.c.l.b16 %v1780
    %v2507 = vunpack.c.l.b16 %v1781
    %v2508 = vunpack.c.l.b16 %v1782
    %v2509 = vunpack.c.l.b16 %v1783
    %v2510 = vunpack.c.l.b16 %v1784
    %v2511 = vunpack.c.l.b16 %v1785
    %v2512 = vunpack.c.l.b16 %v1786
    %v2513 = vunpack.c.l.b16 %v1787
    %v2514 = vunpack.c.l.b16 %v1788
    %v2515 = vunpack.c.l.b16 %v1789
    %v2516 = vunpack.c.l.b16 %v1790
    %v2517 = vpack.c.b16 %v2496, %v2495
    %v2518 = vpack.c.b16 %v2498, %v2497
    %v2519 = vpack.c.b16 %v2500, %v2499
    %v2520 = vpack.c.b16 %v2502, %v2501
    %v2521 = vpack.c.b16 %v2504, %v2503
    %v2522 = vpack.c.b16 %v2506, %v2505
    %v2523 = vpack.c.b16 %v2508, %v2507
    %v2524 = vpack.c.b16 %v2510, %v2509
    %v2525 = vpack.c.b16 %v2512, %v2511
    %v2526 = vpack.c.b16 %v2514, %v2513
    %v2527 = vpack.c.b16 %v2516, %v2515
    %vm2538 = vcmask 334848
    %v2540 = vsel %vm2538, %v1706, 0
    %v2543 = vand.u32 %v2527, %v96
    %2545 = vmatprep.subr.bf16.mxu0 0
    %2546 = vmatpush1.bf16.msra.mxu0 %v2524
    %2547 = vmatprep.subr.bf16.mxu0 0
    %2548 = vmatpush1.bf16.msra.mxu0 %v2523
    %2549 = vmatprep.subr.bf16.mxu0 0
    %2550 = vmatpush1.bf16.msra.mxu0 %v2522
    %2551 = vmatprep.subr.bf16.mxu0 0
    %2552 = vmatpush1.bf16.msra.mxu0 %v2521
    %2553 = vmatprep.subr.bf16.mxu0 0
    %2554 = vmatpush1.bf16.msra.mxu0 %v2520
    %2555 = vmatprep.subr.bf16.mxu0 0
    %2556 = vmatpush1.bf16.msra.mxu0 %v2519
    %2557 = vmatprep.subr.bf16.mxu0 0
    %2558 = vmatpush1.bf16.msra.mxu0 %v2518
    %2559 = vmatprep.subr.bf16.mxu0 0
    %2560 = vmatpush1.bf16.msra.mxu0 %v2517
    %2561 = vmatprep.subr.bf16.mxu0 0
    %2562 = vmatpush2.bf16.msra.mxu0 0
    %2563 = vmatprep.subr.bf16.mxu0 0
    %2564 = vmatpush2.bf16.msra.mxu0 0
    %2565 = vmatprep.subr.bf16.mxu0 0
    %2566 = vmatpush2.bf16.msra.mxu0 0
    %2567 = vmatprep.subr.bf16.mxu0 0
    %2568 = vmatpush2.bf16.msra.mxu0 0
    %2569 = vmatprep.subr.bf16.mxu0 0
    %2570 = vmatpush2.bf16.msra.mxu0 0
    %2571 = vmatprep.subr.bf16.mxu0 0
    %2572 = vmatpush2.bf16.msra.mxu0 %v2543
    %2573 = vmatprep.subr.bf16.mxu0 0
    %2574 = vmatpush2.bf16.msra.mxu0 %v2526
    %2575 = vmatprep.subr.bf16.mxu0 0
    %2576 = vmatpush2.bf16.msra.mxu0 %v2525
    %2577 = vmatprep.mubr.bf16.mxu0 %v2540
    %2578 = vmatmul.mubr.bf16.gmra.mxu0 %v1705
    %v2579 = vpop.f32.mrf.mxu0
    %v2580 = vadd.f32 0.0, %v2579
    %v2581 = vpop.f32.mrf.mxu0
    %v2582 = vpop.f32.mrf.mxu0
    %v2583 = vpop.f32.mrf.mxu0
    %2584 = vdwg.mxu0
    %v2607 = vunpack.c.l.b16 %v1791
    %v2608 = vunpack.c.l.b16 %v1792
    %v2609 = vunpack.c.l.b16 %v1793
    %v2610 = vunpack.c.l.b16 %v1794
    %v2611 = vunpack.c.l.b16 %v1795
    %v2612 = vunpack.c.l.b16 %v1796
    %v2613 = vunpack.c.l.b16 %v1797
    %v2614 = vunpack.c.l.b16 %v1798
    %v2615 = vunpack.c.l.b16 %v1799
    %v2616 = vunpack.c.l.b16 %v1800
    %v2617 = vunpack.c.l.b16 %v1801
    %v2618 = vunpack.c.l.b16 %v1802
    %v2619 = vunpack.c.l.b16 %v1803
    %v2620 = vunpack.c.l.b16 %v1804
    %v2621 = vunpack.c.l.b16 %v1805
    %v2622 = vunpack.c.l.b16 %v1806
    %v2623 = vunpack.c.l.b16 %v1807
    %v2624 = vunpack.c.l.b16 %v1808
    %v2625 = vunpack.c.l.b16 %v1809
    %v2626 = vunpack.c.l.b16 %v1810
    %v2627 = vunpack.c.l.b16 %v1811
    %v2628 = vunpack.c.l.b16 %v1812
    %v2629 = vpack.c.b16 %v2608, %v2607
    %v2630 = vpack.c.b16 %v2610, %v2609
    %v2631 = vpack.c.b16 %v2612, %v2611
    %v2632 = vpack.c.b16 %v2614, %v2613
    %v2633 = vpack.c.b16 %v2616, %v2615
    %v2634 = vpack.c.b16 %v2618, %v2617
    %v2635 = vpack.c.b16 %v2620, %v2619
    %v2636 = vpack.c.b16 %v2622, %v2621
    %v2637 = vpack.c.b16 %v2624, %v2623
    %v2638 = vpack.c.b16 %v2626, %v2625
    %v2639 = vpack.c.b16 %v2628, %v2627
    %v2651 = vsel %vm2538, %v1708, 0
    %v2654 = vand.u32 %v2639, %v96
    %2656 = vmatprep.subr.bf16.mxu0 0
    %2657 = vmatpush1.bf16.msra.mxu0 %v2636
    %2658 = vmatprep.subr.bf16.mxu0 0
    %2659 = vmatpush1.bf16.msra.mxu0 %v2635
    %2660 = vmatprep.subr.bf16.mxu0 0
    %2661 = vmatpush1.bf16.msra.mxu0 %v2634
    %2662 = vmatprep.subr.bf16.mxu0 0
    %2663 = vmatpush1.bf16.msra.mxu0 %v2633
    %2664 = vmatprep.subr.bf16.mxu0 0
    %2665 = vmatpush1.bf16.msra.mxu0 %v2632
    %2666 = vmatprep.subr.bf16.mxu0 0
    %2667 = vmatpush1.bf16.msra.mxu0 %v2631
    %2668 = vmatprep.subr.bf16.mxu0 0
    %2669 = vmatpush1.bf16.msra.mxu0 %v2630
    %2670 = vmatprep.subr.bf16.mxu0 0
    %2671 = vmatpush1.bf16.msra.mxu0 %v2629
    %2672 = vmatprep.subr.bf16.mxu0 0
    %2673 = vmatpush2.bf16.msra.mxu0 0
    %2674 = vmatprep.subr.bf16.mxu0 0
    %2675 = vmatpush2.bf16.msra.mxu0 0
    %2676 = vmatprep.subr.bf16.mxu0 0
    %2677 = vmatpush2.bf16.msra.mxu0 0
    %2678 = vmatprep.subr.bf16.mxu0 0
    %2679 = vmatpush2.bf16.msra.mxu0 0
    %2680 = vmatprep.subr.bf16.mxu0 0
    %2681 = vmatpush2.bf16.msra.mxu0 0
    %2682 = vmatprep.subr.bf16.mxu0 0
    %2683 = vmatpush2.bf16.msra.mxu0 %v2654
    %2684 = vmatprep.subr.bf16.mxu0 0
    %2685 = vmatpush2.bf16.msra.mxu0 %v2638
    %2686 = vmatprep.subr.bf16.mxu0 0
    %2687 = vmatpush2.bf16.msra.mxu0 %v2637
    %2688 = vmatprep.mubr.bf16.mxu0 %v2651
    %2689 = vmatmul.mubr.bf16.gmra.mxu0 %v1707
    %v2690 = vpop.f32.mrf.mxu0
    %v2691 = vadd.f32 0.0, %v2690
    %v2692 = vpop.f32.mrf.mxu0
    %v2693 = vpop.f32.mrf.mxu0
    %v2694 = vpop.f32.mrf.mxu0
    %2695 = vdwg.mxu0
    %v2718 = vunpack.c.l.b16 %v1813
    %v2719 = vunpack.c.l.b16 %v1814
    %v2720 = vunpack.c.l.b16 %v1815
    %v2721 = vunpack.c.l.b16 %v1816
    %v2722 = vunpack.c.l.b16 %v1817
    %v2723 = vunpack.c.l.b16 %v1818
    %v2724 = vunpack.c.l.b16 %v1819
    %v2725 = vunpack.c.l.b16 %v1820
    %v2726 = vunpack.c.l.b16 %v1821
    %v2727 = vunpack.c.l.b16 %v1822
    %v2728 = vunpack.c.l.b16 %v1823
    %v2729 = vunpack.c.l.b16 %v1824
    %v2730 = vunpack.c.l.b16 %v1825
    %v2731 = vunpack.c.l.b16 %v1826
    %v2732 = vunpack.c.l.b16 %v1827
    %v2733 = vunpack.c.l.b16 %v1828
    %v2734 = vunpack.c.l.b16 %v1829
    %v2735 = vunpack.c.l.b16 %v1830
    %v2736 = vunpack.c.l.b16 %v1831
    %v2737 = vunpack.c.l.b16 %v1832
    %v2738 = vunpack.c.l.b16 %v1833
    %v2739 = vunpack.c.l.b16 %v1834
    %v2740 = vpack.c.b16 %v2719, %v2718
    %v2741 = vpack.c.b16 %v2721, %v2720
    %v2742 = vpack.c.b16 %v2723, %v2722
    %v2743 = vpack.c.b16 %v2725, %v2724
    %v2744 = vpack.c.b16 %v2727, %v2726
    %v2745 = vpack.c.b16 %v2729, %v2728
    %v2746 = vpack.c.b16 %v2731, %v2730
    %v2747 = vpack.c.b16 %v2733, %v2732
    %v2748 = vpack.c.b16 %v2735, %v2734
    %v2749 = vpack.c.b16 %v2737, %v2736
    %v2750 = vpack.c.b16 %v2739, %v2738
    %v2762 = vsel %vm2538, %v1710, 0
    %v2765 = vand.u32 %v2750, %v96
    %2767 = vmatprep.subr.bf16.mxu0 0
    %2768 = vmatpush1.bf16.msra.mxu0 %v2747
    %2769 = vmatprep.subr.bf16.mxu0 0
    %2770 = vmatpush1.bf16.msra.mxu0 %v2746
    %2771 = vmatprep.subr.bf16.mxu0 0
    %2772 = vmatpush1.bf16.msra.mxu0 %v2745
    %2773 = vmatprep.subr.bf16.mxu0 0
    %2774 = vmatpush1.bf16.msra.mxu0 %v2744
    %2775 = vmatprep.subr.bf16.mxu0 0
    %2776 = vmatpush1.bf16.msra.mxu0 %v2743
    %2777 = vmatprep.subr.bf16.mxu0 0
    %2778 = vmatpush1.bf16.msra.mxu0 %v2742
    %2779 = vmatprep.subr.bf16.mxu0 0
    %2780 = vmatpush1.bf16.msra.mxu0 %v2741
    %2781 = vmatprep.subr.bf16.mxu0 0
    %2782 = vmatpush1.bf16.msra.mxu0 %v2740
    %2783 = vmatprep.subr.bf16.mxu0 0
    %2784 = vmatpush2.bf16.msra.mxu0 0
    %2785 = vmatprep.subr.bf16.mxu0 0
    %2786 = vmatpush2.bf16.msra.mxu0 0
    %2787 = vmatprep.subr.bf16.mxu0 0
    %2788 = vmatpush2.bf16.msra.mxu0 0
    %2789 = vmatprep.subr.bf16.mxu0 0
    %2790 = vmatpush2.bf16.msra.mxu0 0
    %2791 = vmatprep.subr.bf16.mxu0 0
    %2792 = vmatpush2.bf16.msra.mxu0 0
    %2793 = vmatprep.subr.bf16.mxu0 0
    %2794 = vmatpush2.bf16.msra.mxu0 %v2765
    %2795 = vmatprep.subr.bf16.mxu0 0
    %2796 = vmatpush2.bf16.msra.mxu0 %v2749
    %2797 = vmatprep.subr.bf16.mxu0 0
    %2798 = vmatpush2.bf16.msra.mxu0 %v2748
    %2799 = vmatprep.mubr.bf16.mxu0 %v2762
    %2800 = vmatmul.mubr.bf16.gmra.mxu0 %v1709
    %v2801 = vpop.f32.mrf.mxu0
    %v2802 = vadd.f32 0.0, %v2801
    %v2803 = vpop.f32.mrf.mxu0
    %v2804 = vpop.f32.mrf.mxu0
    %v2805 = vpop.f32.mrf.mxu0
    %2806 = vdwg.mxu0
    %v2829 = vunpack.c.l.b16 %v1835
    %v2830 = vunpack.c.l.b16 %v1836
    %v2831 = vunpack.c.l.b16 %v1837
    %v2832 = vunpack.c.l.b16 %v1838
    %v2833 = vunpack.c.l.b16 %v1839
    %v2834 = vunpack.c.l.b16 %v1840
    %v2835 = vunpack.c.l.b16 %v1841
    %v2836 = vunpack.c.l.b16 %v1842
    %v2837 = vunpack.c.l.b16 %v1843
    %v2838 = vunpack.c.l.b16 %v1844
    %v2839 = vunpack.c.l.b16 %v1845
    %v2840 = vunpack.c.l.b16 %v1846
    %v2841 = vunpack.c.l.b16 %v1847
    %v2842 = vunpack.c.l.b16 %v1848
    %v2843 = vunpack.c.l.b16 %v1849
    %v2844 = vunpack.c.l.b16 %v1850
    %v2845 = vunpack.c.l.b16 %v1851
    %v2846 = vunpack.c.l.b16 %v1852
    %v2847 = vunpack.c.l.b16 %v1853
    %v2848 = vunpack.c.l.b16 %v1854
    %v2849 = vunpack.c.l.b16 %v1855
    %v2850 = vunpack.c.l.b16 %v1856
    %v2851 = vpack.c.b16 %v2830, %v2829
    %v2852 = vpack.c.b16 %v2832, %v2831
    %v2853 = vpack.c.b16 %v2834, %v2833
    %v2854 = vpack.c.b16 %v2836, %v2835
    %v2855 = vpack.c.b16 %v2838, %v2837
    %v2856 = vpack.c.b16 %v2840, %v2839
    %v2857 = vpack.c.b16 %v2842, %v2841
    %v2858 = vpack.c.b16 %v2844, %v2843
    %v2859 = vpack.c.b16 %v2846, %v2845
    %v2860 = vpack.c.b16 %v2848, %v2847
    %v2861 = vpack.c.b16 %v2850, %v2849
    %v2873 = vsel %vm2538, %v1712, 0
    %v2876 = vand.u32 %v2861, %v96
    %2878 = vmatprep.subr.bf16.mxu0 0
    %2879 = vmatpush1.bf16.msra.mxu0 %v2858
    %2880 = vmatprep.subr.bf16.mxu0 0
    %2881 = vmatpush1.bf16.msra.mxu0 %v2857
    %2882 = vmatprep.subr.bf16.mxu0 0
    %2883 = vmatpush1.bf16.msra.mxu0 %v2856
    %2884 = vmatprep.subr.bf16.mxu0 0
    %2885 = vmatpush1.bf16.msra.mxu0 %v2855
    %2886 = vmatprep.subr.bf16.mxu0 0
    %2887 = vmatpush1.bf16.msra.mxu0 %v2854
    %2888 = vmatprep.subr.bf16.mxu0 0
    %2889 = vmatpush1.bf16.msra.mxu0 %v2853
    %2890 = vmatprep.subr.bf16.mxu0 0
    %2891 = vmatpush1.bf16.msra.mxu0 %v2852
    %2892 = vmatprep.subr.bf16.mxu0 0
    %2893 = vmatpush1.bf16.msra.mxu0 %v2851
    %2894 = vmatprep.subr.bf16.mxu0 0
    %2895 = vmatpush2.bf16.msra.mxu0 0
    %2896 = vmatprep.subr.bf16.mxu0 0
    %2897 = vmatpush2.bf16.msra.mxu0 0
    %2898 = vmatprep.subr.bf16.mxu0 0
    %2899 = vmatpush2.bf16.msra.mxu0 0
    %2900 = vmatprep.subr.bf16.mxu0 0
    %2901 = vmatpush2.bf16.msra.mxu0 0
    %2902 = vmatprep.subr.bf16.mxu0 0
    %2903 = vmatpush2.bf16.msra.mxu0 0
    %2904 = vmatprep.subr.bf16.mxu0 0
    %2905 = vmatpush2.bf16.msra.mxu0 %v2876
    %2906 = vmatprep.subr.bf16.mxu0 0
    %2907 = vmatpush2.bf16.msra.mxu0 %v2860
    %2908 = vmatprep.subr.bf16.mxu0 0
    %2909 = vmatpush2.bf16.msra.mxu0 %v2859
    %2910 = vmatprep.mubr.bf16.mxu0 %v2873
    %2911 = vmatmul.mubr.bf16.gmra.mxu0 %v1711
    %v2912 = vpop.f32.mrf.mxu0
    %v2913 = vadd.f32 0.0, %v2912
    %v2914 = vpop.f32.mrf.mxu0
    %v2915 = vpop.f32.mrf.mxu0
    %v2916 = vpop.f32.mrf.mxu0
    %2917 = vdwg.mxu0
    %v2940 = vunpack.c.l.b16 %v1857
    %v2941 = vunpack.c.l.b16 %v1858
    %v2942 = vunpack.c.l.b16 %v1859
    %v2943 = vunpack.c.l.b16 %v1860
    %v2944 = vunpack.c.l.b16 %v1861
    %v2945 = vunpack.c.l.b16 %v1862
    %v2946 = vunpack.c.l.b16 %v1863
    %v2947 = vunpack.c.l.b16 %v1864
    %v2948 = vunpack.c.l.b16 %v1865
    %v2949 = vunpack.c.l.b16 %v1866
    %v2950 = vunpack.c.l.b16 %v1867
    %v2951 = vunpack.c.l.b16 %v1868
    %v2952 = vunpack.c.l.b16 %v1869
    %v2953 = vunpack.c.l.b16 %v1870
    %v2954 = vunpack.c.l.b16 %v1871
    %v2955 = vunpack.c.l.b16 %v1872
    %v2956 = vunpack.c.l.b16 %v1873
    %v2957 = vunpack.c.l.b16 %v1874
    %v2958 = vunpack.c.l.b16 %v1875
    %v2959 = vunpack.c.l.b16 %v1876
    %v2960 = vunpack.c.l.b16 %v1877
    %v2961 = vunpack.c.l.b16 %v1878
    %v2962 = vpack.c.b16 %v2941, %v2940
    %v2963 = vpack.c.b16 %v2943, %v2942
    %v2964 = vpack.c.b16 %v2945, %v2944
    %v2965 = vpack.c.b16 %v2947, %v2946
    %v2966 = vpack.c.b16 %v2949, %v2948
    %v2967 = vpack.c.b16 %v2951, %v2950
    %v2968 = vpack.c.b16 %v2953, %v2952
    %v2969 = vpack.c.b16 %v2955, %v2954
    %v2970 = vpack.c.b16 %v2957, %v2956
    %v2971 = vpack.c.b16 %v2959, %v2958
    %v2972 = vpack.c.b16 %v2961, %v2960
    %v2984 = vsel %vm2538, %v1714, 0
    %v2987 = vand.u32 %v2972, %v96
    %2989 = vmatprep.subr.bf16.mxu0 0
    %2990 = vmatpush1.bf16.msra.mxu0 %v2969
    %2991 = vmatprep.subr.bf16.mxu0 0
    %2992 = vmatpush1.bf16.msra.mxu0 %v2968
    %2993 = vmatprep.subr.bf16.mxu0 0
    %2994 = vmatpush1.bf16.msra.mxu0 %v2967
    %2995 = vmatprep.subr.bf16.mxu0 0
    %2996 = vmatpush1.bf16.msra.mxu0 %v2966
    %2997 = vmatprep.subr.bf16.mxu0 0
    %2998 = vmatpush1.bf16.msra.mxu0 %v2965
    %2999 = vmatprep.subr.bf16.mxu0 0
    %3000 = vmatpush1.bf16.msra.mxu0 %v2964
    %3001 = vmatprep.subr.bf16.mxu0 0
    %3002 = vmatpush1.bf16.msra.mxu0 %v2963
    %3003 = vmatprep.subr.bf16.mxu0 0
    %3004 = vmatpush1.bf16.msra.mxu0 %v2962
    %3005 = vmatprep.subr.bf16.mxu0 0
    %3006 = vmatpush2.bf16.msra.mxu0 0
    %3007 = vmatprep.subr.bf16.mxu0 0
    %3008 = vmatpush2.bf16.msra.mxu0 0
    %3009 = vmatprep.subr.bf16.mxu0 0
    %3010 = vmatpush2.bf16.msra.mxu0 0
    %3011 = vmatprep.subr.bf16.mxu0 0
    %3012 = vmatpush2.bf16.msra.mxu0 0
    %3013 = vmatprep.subr.bf16.mxu0 0
    %3014 = vmatpush2.bf16.msra.mxu0 0
    %3015 = vmatprep.subr.bf16.mxu0 0
    %3016 = vmatpush2.bf16.msra.mxu0 %v2987
    %3017 = vmatprep.subr.bf16.mxu0 0
    %3018 = vmatpush2.bf16.msra.mxu0 %v2971
    %3019 = vmatprep.subr.bf16.mxu0 0
    %3020 = vmatpush2.bf16.msra.mxu0 %v2970
    %3021 = vmatprep.mubr.bf16.mxu0 %v2984
    %3022 = vmatmul.mubr.bf16.gmra.mxu0 %v1713
    %v3023 = vpop.f32.mrf.mxu0
    %v3024 = vadd.f32 0.0, %v3023
    %v3025 = vpop.f32.mrf.mxu0
    %v3026 = vpop.f32.mrf.mxu0
    %v3027 = vpop.f32.mrf.mxu0
    %3028 = vdwg.mxu0
    %v3051 = vunpack.c.l.b16 %v1879
    %v3052 = vunpack.c.l.b16 %v1880
    %v3053 = vunpack.c.l.b16 %v1881
    %v3054 = vunpack.c.l.b16 %v1882
    %v3055 = vunpack.c.l.b16 %v1883
    %v3056 = vunpack.c.l.b16 %v1884
    %v3057 = vunpack.c.l.b16 %v1885
    %v3058 = vunpack.c.l.b16 %v1886
    %v3059 = vunpack.c.l.b16 %v1887
    %v3060 = vunpack.c.l.b16 %v1888
    %v3061 = vunpack.c.l.b16 %v1889
    %v3062 = vunpack.c.l.b16 %v1890
    %v3063 = vunpack.c.l.b16 %v1891
    %v3064 = vunpack.c.l.b16 %v1892
    %v3065 = vunpack.c.l.b16 %v1893
    %v3066 = vunpack.c.l.b16 %v1894
    %v3067 = vunpack.c.l.b16 %v1895
    %v3068 = vunpack.c.l.b16 %v1896
    %v3069 = vunpack.c.l.b16 %v1897
    %v3070 = vunpack.c.l.b16 %v1898
    %v3071 = vunpack.c.l.b16 %v1899
    %v3072 = vunpack.c.l.b16 %v1900
    %v3073 = vpack.c.b16 %v3052, %v3051
    %v3074 = vpack.c.b16 %v3054, %v3053
    %v3075 = vpack.c.b16 %v3056, %v3055
    %v3076 = vpack.c.b16 %v3058, %v3057
    %v3077 = vpack.c.b16 %v3060, %v3059
    %v3078 = vpack.c.b16 %v3062, %v3061
    %v3079 = vpack.c.b16 %v3064, %v3063
    %v3080 = vpack.c.b16 %v3066, %v3065
    %v3081 = vpack.c.b16 %v3068, %v3067
    %v3082 = vpack.c.b16 %v3070, %v3069
    %v3083 = vpack.c.b16 %v3072, %v3071
    %v3095 = vsel %vm2538, %v1716, 0
    %v3098 = vand.u32 %v3083, %v96
    %3100 = vmatprep.subr.bf16.mxu0 0
    %3101 = vmatpush1.bf16.msra.mxu0 %v3080
    %3102 = vmatprep.subr.bf16.mxu0 0
    %3103 = vmatpush1.bf16.msra.mxu0 %v3079
    %3104 = vmatprep.subr.bf16.mxu0 0
    %3105 = vmatpush1.bf16.msra.mxu0 %v3078
    %3106 = vmatprep.subr.bf16.mxu0 0
    %3107 = vmatpush1.bf16.msra.mxu0 %v3077
    %3108 = vmatprep.subr.bf16.mxu0 0
    %3109 = vmatpush1.bf16.msra.mxu0 %v3076
    %3110 = vmatprep.subr.bf16.mxu0 0
    %3111 = vmatpush1.bf16.msra.mxu0 %v3075
    %3112 = vmatprep.subr.bf16.mxu0 0
    %3113 = vmatpush1.bf16.msra.mxu0 %v3074
    %3114 = vmatprep.subr.bf16.mxu0 0
    %3115 = vmatpush1.bf16.msra.mxu0 %v3073
    %3116 = vmatprep.subr.bf16.mxu0 0
    %3117 = vmatpush2.bf16.msra.mxu0 0
    %3118 = vmatprep.subr.bf16.mxu0 0
    %3119 = vmatpush2.bf16.msra.mxu0 0
    %3120 = vmatprep.subr.bf16.mxu0 0
    %3121 = vmatpush2.bf16.msra.mxu0 0
    %3122 = vmatprep.subr.bf16.mxu0 0
    %3123 = vmatpush2.bf16.msra.mxu0 0
    %3124 = vmatprep.subr.bf16.mxu0 0
    %3125 = vmatpush2.bf16.msra.mxu0 0
    %3126 = vmatprep.subr.bf16.mxu0 0
    %3127 = vmatpush2.bf16.msra.mxu0 %v3098
    %3128 = vmatprep.subr.bf16.mxu0 0
    %3129 = vmatpush2.bf16.msra.mxu0 %v3082
    %3130 = vmatprep.subr.bf16.mxu0 0
    %3131 = vmatpush2.bf16.msra.mxu0 %v3081
    %3132 = vmatprep.mubr.bf16.mxu0 %v3095
    %3133 = vmatmul.mubr.bf16.gmra.mxu0 %v1715
    %v3134 = vpop.f32.mrf.mxu0
    %v3135 = vadd.f32 0.0, %v3134
    %v3136 = vpop.f32.mrf.mxu0
    %v3137 = vpop.f32.mrf.mxu0
    %v3138 = vpop.f32.mrf.mxu0
    %3139 = vdwg.mxu0
    %v3162 = vunpack.c.l.b16 %v1901
    %v3163 = vunpack.c.l.b16 %v1902
    %v3164 = vunpack.c.l.b16 %v1903
    %v3165 = vunpack.c.l.b16 %v1904
    %v3166 = vunpack.c.l.b16 %v1905
    %v3167 = vunpack.c.l.b16 %v1906
    %v3168 = vunpack.c.l.b16 %v1907
    %v3169 = vunpack.c.l.b16 %v1908
    %v3170 = vunpack.c.l.b16 %v1909
    %v3171 = vunpack.c.l.b16 %v1910
    %v3172 = vunpack.c.l.b16 %v1911
    %v3173 = vunpack.c.l.b16 %v1912
    %v3174 = vunpack.c.l.b16 %v1913
    %v3175 = vunpack.c.l.b16 %v1914
    %v3176 = vunpack.c.l.b16 %v1915
    %v3177 = vunpack.c.l.b16 %v1916
    %v3178 = vunpack.c.l.b16 %v1917
    %v3179 = vunpack.c.l.b16 %v1918
    %v3180 = vunpack.c.l.b16 %v1919
    %v3181 = vunpack.c.l.b16 %v1920
    %v3182 = vunpack.c.l.b16 %v1921
    %v3183 = vunpack.c.l.b16 %v1922
    %v3184 = vpack.c.b16 %v3163, %v3162
    %v3185 = vpack.c.b16 %v3165, %v3164
    %v3186 = vpack.c.b16 %v3167, %v3166
    %v3187 = vpack.c.b16 %v3169, %v3168
    %v3188 = vpack.c.b16 %v3171, %v3170
    %v3189 = vpack.c.b16 %v3173, %v3172
    %v3190 = vpack.c.b16 %v3175, %v3174
    %v3191 = vpack.c.b16 %v3177, %v3176
    %v3192 = vpack.c.b16 %v3179, %v3178
    %v3193 = vpack.c.b16 %v3181, %v3180
    %v3194 = vpack.c.b16 %v3183, %v3182
    %v3206 = vsel %vm2538, %v1718, 0
    %v3209 = vand.u32 %v3194, %v96
    %3211 = vmatprep.subr.bf16.mxu0 0
    %3212 = vmatpush1.bf16.msra.mxu0 %v3191
    %3213 = vmatprep.subr.bf16.mxu0 0
    %3214 = vmatpush1.bf16.msra.mxu0 %v3190
    %3215 = vmatprep.subr.bf16.mxu0 0
    %3216 = vmatpush1.bf16.msra.mxu0 %v3189
    %3217 = vmatprep.subr.bf16.mxu0 0
    %3218 = vmatpush1.bf16.msra.mxu0 %v3188
    %3219 = vmatprep.subr.bf16.mxu0 0
    %3220 = vmatpush1.bf16.msra.mxu0 %v3187
    %3221 = vmatprep.subr.bf16.mxu0 0
    %3222 = vmatpush1.bf16.msra.mxu0 %v3186
    %3223 = vmatprep.subr.bf16.mxu0 0
    %3224 = vmatpush1.bf16.msra.mxu0 %v3185
    %3225 = vmatprep.subr.bf16.mxu0 0
    %3226 = vmatpush1.bf16.msra.mxu0 %v3184
    %3227 = vmatprep.subr.bf16.mxu0 0
    %3228 = vmatpush2.bf16.msra.mxu0 0
    %3229 = vmatprep.subr.bf16.mxu0 0
    %3230 = vmatpush2.bf16.msra.mxu0 0
    %3231 = vmatprep.subr.bf16.mxu0 0
    %3232 = vmatpush2.bf16.msra.mxu0 0
    %3233 = vmatprep.subr.bf16.mxu0 0
    %3234 = vmatpush2.bf16.msra.mxu0 0
    %3235 = vmatprep.subr.bf16.mxu0 0
    %3236 = vmatpush2.bf16.msra.mxu0 0
    %3237 = vmatprep.subr.bf16.mxu0 0
    %3238 = vmatpush2.bf16.msra.mxu0 %v3209
    %3239 = vmatprep.subr.bf16.mxu0 0
    %3240 = vmatpush2.bf16.msra.mxu0 %v3193
    %3241 = vmatprep.subr.bf16.mxu0 0
    %3242 = vmatpush2.bf16.msra.mxu0 %v3192
    %3243 = vmatprep.mubr.bf16.mxu0 %v3206
    %3244 = vmatmul.mubr.bf16.gmra.mxu0 %v1717
    %v3245 = vpop.f32.mrf.mxu0
    %v3246 = vadd.f32 0.0, %v3245
    %v3247 = vpop.f32.mrf.mxu0
    %v3248 = vpop.f32.mrf.mxu0
    %v3249 = vpop.f32.mrf.mxu0
    %3250 = vdwg.mxu0
    %v3273 = vunpack.c.l.b16 %v1923
    %v3274 = vunpack.c.l.b16 %v1924
    %v3275 = vunpack.c.l.b16 %v1925
    %v3276 = vunpack.c.l.b16 %v1926
    %v3277 = vunpack.c.l.b16 %v1927
    %v3278 = vunpack.c.l.b16 %v1928
    %v3279 = vunpack.c.l.b16 %v1929
    %v3280 = vunpack.c.l.b16 %v1930
    %v3281 = vunpack.c.l.b16 %v1931
    %v3282 = vunpack.c.l.b16 %v1932
    %v3283 = vunpack.c.l.b16 %v1933
    %v3284 = vunpack.c.l.b16 %v1934
    %v3285 = vunpack.c.l.b16 %v1935
    %v3286 = vunpack.c.l.b16 %v1936
    %v3287 = vunpack.c.l.b16 %v1937
    %v3288 = vunpack.c.l.b16 %v1938
    %v3289 = vunpack.c.l.b16 %v1939
    %v3290 = vunpack.c.l.b16 %v1940
    %v3291 = vunpack.c.l.b16 %v1941
    %v3292 = vunpack.c.l.b16 %v1942
    %v3293 = vunpack.c.l.b16 %v1943
    %v3294 = vunpack.c.l.b16 %v1944
    %v3295 = vpack.c.b16 %v3274, %v3273
    %v3296 = vpack.c.b16 %v3276, %v3275
    %v3297 = vpack.c.b16 %v3278, %v3277
    %v3298 = vpack.c.b16 %v3280, %v3279
    %v3299 = vpack.c.b16 %v3282, %v3281
    %v3300 = vpack.c.b16 %v3284, %v3283
    %v3301 = vpack.c.b16 %v3286, %v3285
    %v3302 = vpack.c.b16 %v3288, %v3287
    %v3303 = vpack.c.b16 %v3290, %v3289
    %v3304 = vpack.c.b16 %v3292, %v3291
    %v3305 = vpack.c.b16 %v3294, %v3293
    %v3317 = vsel %vm2538, %v1720, 0
    %v3320 = vand.u32 %v3305, %v96
    %3322 = vmatprep.subr.bf16.mxu0 0
    %3323 = vmatpush1.bf16.msra.mxu0 %v3302
    %3324 = vmatprep.subr.bf16.mxu0 0
    %3325 = vmatpush1.bf16.msra.mxu0 %v3301
    %3326 = vmatprep.subr.bf16.mxu0 0
    %3327 = vmatpush1.bf16.msra.mxu0 %v3300
    %3328 = vmatprep.subr.bf16.mxu0 0
    %3329 = vmatpush1.bf16.msra.mxu0 %v3299
    %3330 = vmatprep.subr.bf16.mxu0 0
    %3331 = vmatpush1.bf16.msra.mxu0 %v3298
    %3332 = vmatprep.subr.bf16.mxu0 0
    %3333 = vmatpush1.bf16.msra.mxu0 %v3297
    %3334 = vmatprep.subr.bf16.mxu0 0
    %3335 = vmatpush1.bf16.msra.mxu0 %v3296
    %3336 = vmatprep.subr.bf16.mxu0 0
    %3337 = vmatpush1.bf16.msra.mxu0 %v3295
    %3338 = vmatprep.subr.bf16.mxu0 0
    %3339 = vmatpush2.bf16.msra.mxu0 0
    %3340 = vmatprep.subr.bf16.mxu0 0
    %3341 = vmatpush2.bf16.msra.mxu0 0
    %3342 = vmatprep.subr.bf16.mxu0 0
    %3343 = vmatpush2.bf16.msra.mxu0 0
    %3344 = vmatprep.subr.bf16.mxu0 0
    %3345 = vmatpush2.bf16.msra.mxu0 0
    %3346 = vmatprep.subr.bf16.mxu0 0
    %3347 = vmatpush2.bf16.msra.mxu0 0
    %3348 = vmatprep.subr.bf16.mxu0 0
    %3349 = vmatpush2.bf16.msra.mxu0 %v3320
    %3350 = vmatprep.subr.bf16.mxu0 0
    %3351 = vmatpush2.bf16.msra.mxu0 %v3304
    %3352 = vmatprep.subr.bf16.mxu0 0
    %3353 = vmatpush2.bf16.msra.mxu0 %v3303
    %3354 = vmatprep.mubr.bf16.mxu0 %v3317
    %3355 = vmatmul.mubr.bf16.gmra.mxu0 %v1719
    %v3356 = vpop.f32.mrf.mxu0
    %v3357 = vadd.f32 0.0, %v3356
    %v3358 = vpop.f32.mrf.mxu0
    %v3359 = vpop.f32.mrf.mxu0
    %v3360 = vpop.f32.mrf.mxu0
    %3361 = vdwg.mxu0
    %v3384 = vunpack.c.l.b16 %v1945
    %v3385 = vunpack.c.l.b16 %v1946
    %v3386 = vunpack.c.l.b16 %v1947
    %v3387 = vunpack.c.l.b16 %v1948
    %v3388 = vunpack.c.l.b16 %v1949
    %v3389 = vunpack.c.l.b16 %v1950
    %v3390 = vunpack.c.l.b16 %v1951
    %v3391 = vunpack.c.l.b16 %v1952
    %v3392 = vunpack.c.l.b16 %v1953
    %v3393 = vunpack.c.l.b16 %v1954
    %v3394 = vunpack.c.l.b16 %v1955
    %v3395 = vunpack.c.l.b16 %v1956
    %v3396 = vunpack.c.l.b16 %v1957
    %v3397 = vunpack.c.l.b16 %v1958
    %v3398 = vunpack.c.l.b16 %v1959
    %v3399 = vunpack.c.l.b16 %v1960
    %v3400 = vunpack.c.l.b16 %v1961
    %v3401 = vunpack.c.l.b16 %v1962
    %v3402 = vunpack.c.l.b16 %v1963
    %v3403 = vunpack.c.l.b16 %v1964
    %v3404 = vunpack.c.l.b16 %v1965
    %v3405 = vunpack.c.l.b16 %v1966
    %v3406 = vpack.c.b16 %v3385, %v3384
    %v3407 = vpack.c.b16 %v3387, %v3386
    %v3408 = vpack.c.b16 %v3389, %v3388
    %v3409 = vpack.c.b16 %v3391, %v3390
    %v3410 = vpack.c.b16 %v3393, %v3392
    %v3411 = vpack.c.b16 %v3395, %v3394
    %v3412 = vpack.c.b16 %v3397, %v3396
    %v3413 = vpack.c.b16 %v3399, %v3398
    %v3414 = vpack.c.b16 %v3401, %v3400
    %v3415 = vpack.c.b16 %v3403, %v3402
    %v3416 = vpack.c.b16 %v3405, %v3404
    %v3428 = vsel %vm2538, %v1722, 0
    %v3431 = vand.u32 %v3416, %v96
    %3433 = vmatprep.subr.bf16.mxu0 0
    %3434 = vmatpush1.bf16.msra.mxu0 %v3413
    %3435 = vmatprep.subr.bf16.mxu0 0
    %3436 = vmatpush1.bf16.msra.mxu0 %v3412
    %3437 = vmatprep.subr.bf16.mxu0 0
    %3438 = vmatpush1.bf16.msra.mxu0 %v3411
    %3439 = vmatprep.subr.bf16.mxu0 0
    %3440 = vmatpush1.bf16.msra.mxu0 %v3410
    %3441 = vmatprep.subr.bf16.mxu0 0
    %3442 = vmatpush1.bf16.msra.mxu0 %v3409
    %3443 = vmatprep.subr.bf16.mxu0 0
    %3444 = vmatpush1.bf16.msra.mxu0 %v3408
    %3445 = vmatprep.subr.bf16.mxu0 0
    %3446 = vmatpush1.bf16.msra.mxu0 %v3407
    %3447 = vmatprep.subr.bf16.mxu0 0
    %3448 = vmatpush1.bf16.msra.mxu0 %v3406
    %3449 = vmatprep.subr.bf16.mxu0 0
    %3450 = vmatpush2.bf16.msra.mxu0 0
    %3451 = vmatprep.subr.bf16.mxu0 0
    %3452 = vmatpush2.bf16.msra.mxu0 0
    %3453 = vmatprep.subr.bf16.mxu0 0
    %3454 = vmatpush2.bf16.msra.mxu0 0
    %3455 = vmatprep.subr.bf16.mxu0 0
    %3456 = vmatpush2.bf16.msra.mxu0 0
    %3457 = vmatprep.subr.bf16.mxu0 0
    %3458 = vmatpush2.bf16.msra.mxu0 0
    %3459 = vmatprep.subr.bf16.mxu0 0
    %3460 = vmatpush2.bf16.msra.mxu0 %v3431
    %3461 = vmatprep.subr.bf16.mxu0 0
    %3462 = vmatpush2.bf16.msra.mxu0 %v3415
    %3463 = vmatprep.subr.bf16.mxu0 0
    %3464 = vmatpush2.bf16.msra.mxu0 %v3414
    %3465 = vmatprep.mubr.bf16.mxu0 %v3428
    %3466 = vmatmul.mubr.bf16.gmra.mxu0 %v1721
    %v3467 = vpop.f32.mrf.mxu0
    %v3468 = vadd.f32 0.0, %v3467
    %v3469 = vpop.f32.mrf.mxu0
    %v3470 = vpop.f32.mrf.mxu0
    %v3471 = vpop.f32.mrf.mxu0
    %3472 = vdwg.mxu0
    %v3495 = vunpack.c.l.b16 %v1967
    %v3496 = vunpack.c.l.b16 %v1968
    %v3497 = vunpack.c.l.b16 %v1969
    %v3498 = vunpack.c.l.b16 %v1970
    %v3499 = vunpack.c.l.b16 %v1971
    %v3500 = vunpack.c.l.b16 %v1972
    %v3501 = vunpack.c.l.b16 %v1973
    %v3502 = vunpack.c.l.b16 %v1974
    %v3503 = vunpack.c.l.b16 %v1975
    %v3504 = vunpack.c.l.b16 %v1976
    %v3505 = vunpack.c.l.b16 %v1977
    %v3506 = vunpack.c.l.b16 %v1978
    %v3507 = vunpack.c.l.b16 %v1979
    %v3508 = vunpack.c.l.b16 %v1980
    %v3509 = vunpack.c.l.b16 %v1981
    %v3510 = vunpack.c.l.b16 %v1982
    %v3511 = vunpack.c.l.b16 %v1983
    %v3512 = vunpack.c.l.b16 %v1984
    %v3513 = vunpack.c.l.b16 %v1985
    %v3514 = vunpack.c.l.b16 %v1986
    %v3515 = vunpack.c.l.b16 %v1987
    %v3516 = vunpack.c.l.b16 %v1988
    %v3517 = vpack.c.b16 %v3496, %v3495
    %v3518 = vpack.c.b16 %v3498, %v3497
    %v3519 = vpack.c.b16 %v3500, %v3499
    %v3520 = vpack.c.b16 %v3502, %v3501
    %v3521 = vpack.c.b16 %v3504, %v3503
    %v3522 = vpack.c.b16 %v3506, %v3505
    %v3523 = vpack.c.b16 %v3508, %v3507
    %v3524 = vpack.c.b16 %v3510, %v3509
    %v3525 = vpack.c.b16 %v3512, %v3511
    %v3526 = vpack.c.b16 %v3514, %v3513
    %v3527 = vpack.c.b16 %v3516, %v3515
    %v3539 = vsel %vm2538, %v1724, 0
    %v3542 = vand.u32 %v3527, %v96
    %3544 = vmatprep.subr.bf16.mxu0 0
    %3545 = vmatpush1.bf16.msra.mxu0 %v3524
    %3546 = vmatprep.subr.bf16.mxu0 0
    %3547 = vmatpush1.bf16.msra.mxu0 %v3523
    %3548 = vmatprep.subr.bf16.mxu0 0
    %3549 = vmatpush1.bf16.msra.mxu0 %v3522
    %3550 = vmatprep.subr.bf16.mxu0 0
    %3551 = vmatpush1.bf16.msra.mxu0 %v3521
    %3552 = vmatprep.subr.bf16.mxu0 0
    %3553 = vmatpush1.bf16.msra.mxu0 %v3520
    %3554 = vmatprep.subr.bf16.mxu0 0
    %3555 = vmatpush1.bf16.msra.mxu0 %v3519
    %3556 = vmatprep.subr.bf16.mxu0 0
    %3557 = vmatpush1.bf16.msra.mxu0 %v3518
    %3558 = vmatprep.subr.bf16.mxu0 0
    %3559 = vmatpush1.bf16.msra.mxu0 %v3517
    %3560 = vmatprep.subr.bf16.mxu0 0
    %3561 = vmatpush2.bf16.msra.mxu0 0
    %3562 = vmatprep.subr.bf16.mxu0 0
    %3563 = vmatpush2.bf16.msra.mxu0 0
    %3564 = vmatprep.subr.bf16.mxu0 0
    %3565 = vmatpush2.bf16.msra.mxu0 0
    %3566 = vmatprep.subr.bf16.mxu0 0
    %3567 = vmatpush2.bf16.msra.mxu0 0
    %3568 = vmatprep.subr.bf16.mxu0 0
    %3569 = vmatpush2.bf16.msra.mxu0 0
    %3570 = vmatprep.subr.bf16.mxu0 0
    %3571 = vmatpush2.bf16.msra.mxu0 %v3542
    %3572 = vmatprep.subr.bf16.mxu0 0
    %3573 = vmatpush2.bf16.msra.mxu0 %v3526
    %3574 = vmatprep.subr.bf16.mxu0 0
    %3575 = vmatpush2.bf16.msra.mxu0 %v3525
    %3576 = vmatprep.mubr.bf16.mxu0 %v3539
    %3577 = vmatmul.mubr.bf16.gmra.mxu0 %v1723
    %v3578 = vpop.f32.mrf.mxu0
    %v3579 = vadd.f32 0.0, %v3578
    %v3580 = vpop.f32.mrf.mxu0
    %v3581 = vpop.f32.mrf.mxu0
    %v3582 = vpop.f32.mrf.mxu0
    %3583 = vdwg.mxu0
    %v3606 = vunpack.c.l.b16 %v1989
    %v3607 = vunpack.c.l.b16 %v1990
    %v3608 = vunpack.c.l.b16 %v1991
    %v3609 = vunpack.c.l.b16 %v1992
    %v3610 = vunpack.c.l.b16 %v1993
    %v3611 = vunpack.c.l.b16 %v1994
    %v3612 = vunpack.c.l.b16 %v1995
    %v3613 = vunpack.c.l.b16 %v1996
    %v3614 = vunpack.c.l.b16 %v1997
    %v3615 = vunpack.c.l.b16 %v1998
    %v3616 = vunpack.c.l.b16 %v1999
    %v3617 = vunpack.c.l.b16 %v2000
    %v3618 = vunpack.c.l.b16 %v2001
    %v3619 = vunpack.c.l.b16 %v2002
    %v3620 = vunpack.c.l.b16 %v2003
    %v3621 = vunpack.c.l.b16 %v2004
    %v3622 = vunpack.c.l.b16 %v2005
    %v3623 = vunpack.c.l.b16 %v2006
    %v3624 = vunpack.c.l.b16 %v2007
    %v3625 = vunpack.c.l.b16 %v2008
    %v3626 = vunpack.c.l.b16 %v2009
    %v3627 = vunpack.c.l.b16 %v2010
    %v3628 = vpack.c.b16 %v3607, %v3606
    %v3629 = vpack.c.b16 %v3609, %v3608
    %v3630 = vpack.c.b16 %v3611, %v3610
    %v3631 = vpack.c.b16 %v3613, %v3612
    %v3632 = vpack.c.b16 %v3615, %v3614
    %v3633 = vpack.c.b16 %v3617, %v3616
    %v3634 = vpack.c.b16 %v3619, %v3618
    %v3635 = vpack.c.b16 %v3621, %v3620
    %v3636 = vpack.c.b16 %v3623, %v3622
    %v3637 = vpack.c.b16 %v3625, %v3624
    %v3638 = vpack.c.b16 %v3627, %v3626
    %v3650 = vsel %vm2538, %v1726, 0
    %v3653 = vand.u32 %v3638, %v96
    %3655 = vmatprep.subr.bf16.mxu0 0
    %3656 = vmatpush1.bf16.msra.mxu0 %v3635
    %3657 = vmatprep.subr.bf16.mxu0 0
    %3658 = vmatpush1.bf16.msra.mxu0 %v3634
    %3659 = vmatprep.subr.bf16.mxu0 0
    %3660 = vmatpush1.bf16.msra.mxu0 %v3633
    %3661 = vmatprep.subr.bf16.mxu0 0
    %3662 = vmatpush1.bf16.msra.mxu0 %v3632
    %3663 = vmatprep.subr.bf16.mxu0 0
    %3664 = vmatpush1.bf16.msra.mxu0 %v3631
    %3665 = vmatprep.subr.bf16.mxu0 0
    %3666 = vmatpush1.bf16.msra.mxu0 %v3630
    %3667 = vmatprep.subr.bf16.mxu0 0
    %3668 = vmatpush1.bf16.msra.mxu0 %v3629
    %3669 = vmatprep.subr.bf16.mxu0 0
    %3670 = vmatpush1.bf16.msra.mxu0 %v3628
    %3671 = vmatprep.subr.bf16.mxu0 0
    %3672 = vmatpush2.bf16.msra.mxu0 0
    %3673 = vmatprep.subr.bf16.mxu0 0
    %3674 = vmatpush2.bf16.msra.mxu0 0
    %3675 = vmatprep.subr.bf16.mxu0 0
    %3676 = vmatpush2.bf16.msra.mxu0 0
    %3677 = vmatprep.subr.bf16.mxu0 0
    %3678 = vmatpush2.bf16.msra.mxu0 0
    %3679 = vmatprep.subr.bf16.mxu0 0
    %3680 = vmatpush2.bf16.msra.mxu0 0
    %3681 = vmatprep.subr.bf16.mxu0 0
    %3682 = vmatpush2.bf16.msra.mxu0 %v3653
    %3683 = vmatprep.subr.bf16.mxu0 0
    %3684 = vmatpush2.bf16.msra.mxu0 %v3637
    %3685 = vmatprep.subr.bf16.mxu0 0
    %3686 = vmatpush2.bf16.msra.mxu0 %v3636
    %3687 = vmatprep.mubr.bf16.mxu0 %v3650
    %3688 = vmatmul.mubr.bf16.gmra.mxu0 %v1725
    %v3689 = vpop.f32.mrf.mxu0
    %v3690 = vadd.f32 0.0, %v3689
    %v3691 = vpop.f32.mrf.mxu0
    %v3692 = vpop.f32.mrf.mxu0
    %v3693 = vpop.f32.mrf.mxu0
    %3694 = vdwg.mxu0
    %v3717 = vunpack.c.l.b16 %v2011
    %v3718 = vunpack.c.l.b16 %v2012
    %v3719 = vunpack.c.l.b16 %v2013
    %v3720 = vunpack.c.l.b16 %v2014
    %v3721 = vunpack.c.l.b16 %v2015
    %v3722 = vunpack.c.l.b16 %v2016
    %v3723 = vunpack.c.l.b16 %v2017
    %v3724 = vunpack.c.l.b16 %v2018
    %v3725 = vunpack.c.l.b16 %v2019
    %v3726 = vunpack.c.l.b16 %v2020
    %v3727 = vunpack.c.l.b16 %v2021
    %v3728 = vunpack.c.l.b16 %v2022
    %v3729 = vunpack.c.l.b16 %v2023
    %v3730 = vunpack.c.l.b16 %v2024
    %v3731 = vunpack.c.l.b16 %v2025
    %v3732 = vunpack.c.l.b16 %v2026
    %v3733 = vunpack.c.l.b16 %v2027
    %v3734 = vunpack.c.l.b16 %v2028
    %v3735 = vunpack.c.l.b16 %v2029
    %v3736 = vunpack.c.l.b16 %v2030
    %v3737 = vunpack.c.l.b16 %v2031
    %v3738 = vunpack.c.l.b16 %v2032
    %v3739 = vpack.c.b16 %v3718, %v3717
    %v3740 = vpack.c.b16 %v3720, %v3719
    %v3741 = vpack.c.b16 %v3722, %v3721
    %v3742 = vpack.c.b16 %v3724, %v3723
    %v3743 = vpack.c.b16 %v3726, %v3725
    %v3744 = vpack.c.b16 %v3728, %v3727
    %v3745 = vpack.c.b16 %v3730, %v3729
    %v3746 = vpack.c.b16 %v3732, %v3731
    %v3747 = vpack.c.b16 %v3734, %v3733
    %v3748 = vpack.c.b16 %v3736, %v3735
    %v3749 = vpack.c.b16 %v3738, %v3737
    %v3761 = vsel %vm2538, %v1728, 0
    %v3764 = vand.u32 %v3749, %v96
    %3766 = vmatprep.subr.bf16.mxu0 0
    %3767 = vmatpush1.bf16.msra.mxu0 %v3746
    %3768 = vmatprep.subr.bf16.mxu0 0
    %3769 = vmatpush1.bf16.msra.mxu0 %v3745
    %3770 = vmatprep.subr.bf16.mxu0 0
    %3771 = vmatpush1.bf16.msra.mxu0 %v3744
    %3772 = vmatprep.subr.bf16.mxu0 0
    %3773 = vmatpush1.bf16.msra.mxu0 %v3743
    %3774 = vmatprep.subr.bf16.mxu0 0
    %3775 = vmatpush1.bf16.msra.mxu0 %v3742
    %3776 = vmatprep.subr.bf16.mxu0 0
    %3777 = vmatpush1.bf16.msra.mxu0 %v3741
    %3778 = vmatprep.subr.bf16.mxu0 0
    %3779 = vmatpush1.bf16.msra.mxu0 %v3740
    %3780 = vmatprep.subr.bf16.mxu0 0
    %3781 = vmatpush1.bf16.msra.mxu0 %v3739
    %3782 = vmatprep.subr.bf16.mxu0 0
    %3783 = vmatpush2.bf16.msra.mxu0 0
    %3784 = vmatprep.subr.bf16.mxu0 0
    %3785 = vmatpush2.bf16.msra.mxu0 0
    %3786 = vmatprep.subr.bf16.mxu0 0
    %3787 = vmatpush2.bf16.msra.mxu0 0
    %3788 = vmatprep.subr.bf16.mxu0 0
    %3789 = vmatpush2.bf16.msra.mxu0 0
    %3790 = vmatprep.subr.bf16.mxu0 0
    %3791 = vmatpush2.bf16.msra.mxu0 0
    %3792 = vmatprep.subr.bf16.mxu0 0
    %3793 = vmatpush2.bf16.msra.mxu0 %v3764
    %3794 = vmatprep.subr.bf16.mxu0 0
    %3795 = vmatpush2.bf16.msra.mxu0 %v3748
    %3796 = vmatprep.subr.bf16.mxu0 0
    %3797 = vmatpush2.bf16.msra.mxu0 %v3747
    %3798 = vmatprep.mubr.bf16.mxu0 %v3761
    %3799 = vmatmul.mubr.bf16.gmra.mxu0 %v1727
    %v3800 = vpop.f32.mrf.mxu0
    %v3801 = vadd.f32 0.0, %v3800
    %v3802 = vpop.f32.mrf.mxu0
    %v3803 = vpop.f32.mrf.mxu0
    %v3804 = vpop.f32.mrf.mxu0
    %3805 = vdwg.mxu0
    %v3828 = vunpack.c.l.b16 %v2033
    %v3829 = vunpack.c.l.b16 %v2034
    %v3830 = vunpack.c.l.b16 %v2035
    %v3831 = vunpack.c.l.b16 %v2036
    %v3832 = vunpack.c.l.b16 %v2037
    %v3833 = vunpack.c.l.b16 %v2038
    %v3834 = vunpack.c.l.b16 %v2039
    %v3835 = vunpack.c.l.b16 %v2040
    %v3836 = vunpack.c.l.b16 %v2041
    %v3837 = vunpack.c.l.b16 %v2042
    %v3838 = vunpack.c.l.b16 %v2043
    %v3839 = vunpack.c.l.b16 %v2044
    %v3840 = vunpack.c.l.b16 %v2045
    %v3841 = vunpack.c.l.b16 %v2046
    %v3842 = vunpack.c.l.b16 %v2047
    %v3843 = vunpack.c.l.b16 %v2048
    %v3844 = vunpack.c.l.b16 %v2049
    %v3845 = vunpack.c.l.b16 %v2050
    %v3846 = vunpack.c.l.b16 %v2051
    %v3847 = vunpack.c.l.b16 %v2052
    %v3848 = vunpack.c.l.b16 %v2053
    %v3849 = vunpack.c.l.b16 %v2054
    %v3850 = vpack.c.b16 %v3829, %v3828
    %v3851 = vpack.c.b16 %v3831, %v3830
    %v3852 = vpack.c.b16 %v3833, %v3832
    %v3853 = vpack.c.b16 %v3835, %v3834
    %v3854 = vpack.c.b16 %v3837, %v3836
    %v3855 = vpack.c.b16 %v3839, %v3838
    %v3856 = vpack.c.b16 %v3841, %v3840
    %v3857 = vpack.c.b16 %v3843, %v3842
    %v3858 = vpack.c.b16 %v3845, %v3844
    %v3859 = vpack.c.b16 %v3847, %v3846
    %v3860 = vpack.c.b16 %v3849, %v3848
    %v3872 = vsel %vm2538, %v1730, 0
    %v3875 = vand.u32 %v3860, %v96
    %3877 = vmatprep.subr.bf16.mxu0 0
    %3878 = vmatpush1.bf16.msra.mxu0 %v3857
    %3879 = vmatprep.subr.bf16.mxu0 0
    %3880 = vmatpush1.bf16.msra.mxu0 %v3856
    %3881 = vmatprep.subr.bf16.mxu0 0
    %3882 = vmatpush1.bf16.msra.mxu0 %v3855
    %3883 = vmatprep.subr.bf16.mxu0 0
    %3884 = vmatpush1.bf16.msra.mxu0 %v3854
    %3885 = vmatprep.subr.bf16.mxu0 0
    %3886 = vmatpush1.bf16.msra.mxu0 %v3853
    %3887 = vmatprep.subr.bf16.mxu0 0
    %3888 = vmatpush1.bf16.msra.mxu0 %v3852
    %3889 = vmatprep.subr.bf16.mxu0 0
    %3890 = vmatpush1.bf16.msra.mxu0 %v3851
    %3891 = vmatprep.subr.bf16.mxu0 0
    %3892 = vmatpush1.bf16.msra.mxu0 %v3850
    %3893 = vmatprep.subr.bf16.mxu0 0
    %3894 = vmatpush2.bf16.msra.mxu0 0
    %3895 = vmatprep.subr.bf16.mxu0 0
    %3896 = vmatpush2.bf16.msra.mxu0 0
    %3897 = vmatprep.subr.bf16.mxu0 0
    %3898 = vmatpush2.bf16.msra.mxu0 0
    %3899 = vmatprep.subr.bf16.mxu0 0
    %3900 = vmatpush2.bf16.msra.mxu0 0
    %3901 = vmatprep.subr.bf16.mxu0 0
    %3902 = vmatpush2.bf16.msra.mxu0 0
    %3903 = vmatprep.subr.bf16.mxu0 0
    %3904 = vmatpush2.bf16.msra.mxu0 %v3875
    %3905 = vmatprep.subr.bf16.mxu0 0
    %3906 = vmatpush2.bf16.msra.mxu0 %v3859
    %3907 = vmatprep.subr.bf16.mxu0 0
    %3908 = vmatpush2.bf16.msra.mxu0 %v3858
    %3909 = vmatprep.mubr.bf16.mxu0 %v3872
    %3910 = vmatmul.mubr.bf16.gmra.mxu0 %v1729
    %v3911 = vpop.f32.mrf.mxu0
    %v3912 = vadd.f32 0.0, %v3911
    %v3913 = vpop.f32.mrf.mxu0
    %v3914 = vpop.f32.mrf.mxu0
    %v3915 = vpop.f32.mrf.mxu0
    %3916 = vdwg.mxu0
    %v3939 = vunpack.c.l.b16 %v2055
    %v3940 = vunpack.c.l.b16 %v2056
    %v3941 = vunpack.c.l.b16 %v2057
    %v3942 = vunpack.c.l.b16 %v2058
    %v3943 = vunpack.c.l.b16 %v2059
    %v3944 = vunpack.c.l.b16 %v2060
    %v3945 = vunpack.c.l.b16 %v2061
    %v3946 = vunpack.c.l.b16 %v2062
    %v3947 = vunpack.c.l.b16 %v2063
    %v3948 = vunpack.c.l.b16 %v2064
    %v3949 = vunpack.c.l.b16 %v2065
    %v3950 = vunpack.c.l.b16 %v2066
    %v3951 = vunpack.c.l.b16 %v2067
    %v3952 = vunpack.c.l.b16 %v2068
    %v3953 = vunpack.c.l.b16 %v2069
    %v3954 = vunpack.c.l.b16 %v2070
    %v3955 = vunpack.c.l.b16 %v2071
    %v3956 = vunpack.c.l.b16 %v2072
    %v3957 = vunpack.c.l.b16 %v2073
    %v3958 = vunpack.c.l.b16 %v2074
    %v3959 = vunpack.c.l.b16 %v2075
    %v3960 = vunpack.c.l.b16 %v2076
    %v3961 = vpack.c.b16 %v3940, %v3939
    %v3962 = vpack.c.b16 %v3942, %v3941
    %v3963 = vpack.c.b16 %v3944, %v3943
    %v3964 = vpack.c.b16 %v3946, %v3945
    %v3965 = vpack.c.b16 %v3948, %v3947
    %v3966 = vpack.c.b16 %v3950, %v3949
    %v3967 = vpack.c.b16 %v3952, %v3951
    %v3968 = vpack.c.b16 %v3954, %v3953
    %v3969 = vpack.c.b16 %v3956, %v3955
    %v3970 = vpack.c.b16 %v3958, %v3957
    %v3971 = vpack.c.b16 %v3960, %v3959
    %v3983 = vsel %vm2538, %v1732, 0
    %v3986 = vand.u32 %v3971, %v96
    %3988 = vmatprep.subr.bf16.mxu0 0
    %3989 = vmatpush1.bf16.msra.mxu0 %v3968
    %3990 = vmatprep.subr.bf16.mxu0 0
    %3991 = vmatpush1.bf16.msra.mxu0 %v3967
    %3992 = vmatprep.subr.bf16.mxu0 0
    %3993 = vmatpush1.bf16.msra.mxu0 %v3966
    %3994 = vmatprep.subr.bf16.mxu0 0
    %3995 = vmatpush1.bf16.msra.mxu0 %v3965
    %3996 = vmatprep.subr.bf16.mxu0 0
    %3997 = vmatpush1.bf16.msra.mxu0 %v3964
    %3998 = vmatprep.subr.bf16.mxu0 0
    %3999 = vmatpush1.bf16.msra.mxu0 %v3963
    %4000 = vmatprep.subr.bf16.mxu0 0
    %4001 = vmatpush1.bf16.msra.mxu0 %v3962
    %4002 = vmatprep.subr.bf16.mxu0 0
    %4003 = vmatpush1.bf16.msra.mxu0 %v3961
    %4004 = vmatprep.subr.bf16.mxu0 0
    %4005 = vmatpush2.bf16.msra.mxu0 0
    %4006 = vmatprep.subr.bf16.mxu0 0
    %4007 = vmatpush2.bf16.msra.mxu0 0
    %4008 = vmatprep.subr.bf16.mxu0 0
    %4009 = vmatpush2.bf16.msra.mxu0 0
    %4010 = vmatprep.subr.bf16.mxu0 0
    %4011 = vmatpush2.bf16.msra.mxu0 0
    %4012 = vmatprep.subr.bf16.mxu0 0
    %4013 = vmatpush2.bf16.msra.mxu0 0
    %4014 = vmatprep.subr.bf16.mxu0 0
    %4015 = vmatpush2.bf16.msra.mxu0 %v3986
    %4016 = vmatprep.subr.bf16.mxu0 0
    %4017 = vmatpush2.bf16.msra.mxu0 %v3970
    %4018 = vmatprep.subr.bf16.mxu0 0
    %4019 = vmatpush2.bf16.msra.mxu0 %v3969
    %4020 = vmatprep.mubr.bf16.mxu0 %v3983
    %4021 = vmatmul.mubr.bf16.gmra.mxu0 %v1731
    %v4022 = vpop.f32.mrf.mxu0
    %v4023 = vadd.f32 0.0, %v4022
    %v4024 = vpop.f32.mrf.mxu0
    %v4025 = vpop.f32.mrf.mxu0
    %v4026 = vpop.f32.mrf.mxu0
    %4027 = vdwg.mxu0
    %v4050 = vunpack.c.l.b16 %v2077
    %v4051 = vunpack.c.l.b16 %v2078
    %v4052 = vunpack.c.l.b16 %v2079
    %v4053 = vunpack.c.l.b16 %v2080
    %v4054 = vunpack.c.l.b16 %v2081
    %v4055 = vunpack.c.l.b16 %v2082
    %v4056 = vunpack.c.l.b16 %v2083
    %v4057 = vunpack.c.l.b16 %v2084
    %v4058 = vunpack.c.l.b16 %v2085
    %v4059 = vunpack.c.l.b16 %v2086
    %v4060 = vunpack.c.l.b16 %v2087
    %v4061 = vunpack.c.l.b16 %v2088
    %v4062 = vunpack.c.l.b16 %v2089
    %v4063 = vunpack.c.l.b16 %v2090
    %v4064 = vunpack.c.l.b16 %v2091
    %v4065 = vunpack.c.l.b16 %v2092
    %v4066 = vunpack.c.l.b16 %v2093
    %v4067 = vunpack.c.l.b16 %v2094
    %v4068 = vunpack.c.l.b16 %v2095
    %v4069 = vunpack.c.l.b16 %v2096
    %v4070 = vunpack.c.l.b16 %v2097
    %v4071 = vunpack.c.l.b16 %v2098
    %v4072 = vpack.c.b16 %v4051, %v4050
    %v4073 = vpack.c.b16 %v4053, %v4052
    %v4074 = vpack.c.b16 %v4055, %v4054
    %v4075 = vpack.c.b16 %v4057, %v4056
    %v4076 = vpack.c.b16 %v4059, %v4058
    %v4077 = vpack.c.b16 %v4061, %v4060
    %v4078 = vpack.c.b16 %v4063, %v4062
    %v4079 = vpack.c.b16 %v4065, %v4064
    %v4080 = vpack.c.b16 %v4067, %v4066
    %v4081 = vpack.c.b16 %v4069, %v4068
    %v4082 = vpack.c.b16 %v4071, %v4070
    %v4094 = vsel %vm2538, %v1734, 0
    %v4097 = vand.u32 %v4082, %v96
    %4099 = vmatprep.subr.bf16.mxu0 0
    %4100 = vmatpush1.bf16.msra.mxu0 %v4079
    %4101 = vmatprep.subr.bf16.mxu0 0
    %4102 = vmatpush1.bf16.msra.mxu0 %v4078
    %4103 = vmatprep.subr.bf16.mxu0 0
    %4104 = vmatpush1.bf16.msra.mxu0 %v4077
    %4105 = vmatprep.subr.bf16.mxu0 0
    %4106 = vmatpush1.bf16.msra.mxu0 %v4076
    %4107 = vmatprep.subr.bf16.mxu0 0
    %4108 = vmatpush1.bf16.msra.mxu0 %v4075
    %4109 = vmatprep.subr.bf16.mxu0 0
    %4110 = vmatpush1.bf16.msra.mxu0 %v4074
    %4111 = vmatprep.subr.bf16.mxu0 0
    %4112 = vmatpush1.bf16.msra.mxu0 %v4073
    %4113 = vmatprep.subr.bf16.mxu0 0
    %4114 = vmatpush1.bf16.msra.mxu0 %v4072
    %4115 = vmatprep.subr.bf16.mxu0 0
    %4116 = vmatpush2.bf16.msra.mxu0 0
    %4117 = vmatprep.subr.bf16.mxu0 0
    %4118 = vmatpush2.bf16.msra.mxu0 0
    %4119 = vmatprep.subr.bf16.mxu0 0
    %4120 = vmatpush2.bf16.msra.mxu0 0
    %4121 = vmatprep.subr.bf16.mxu0 0
    %4122 = vmatpush2.bf16.msra.mxu0 0
    %4123 = vmatprep.subr.bf16.mxu0 0
    %4124 = vmatpush2.bf16.msra.mxu0 0
    %4125 = vmatprep.subr.bf16.mxu0 0
    %4126 = vmatpush2.bf16.msra.mxu0 %v4097
    %4127 = vmatprep.subr.bf16.mxu0 0
    %4128 = vmatpush2.bf16.msra.mxu0 %v4081
    %4129 = vmatprep.subr.bf16.mxu0 0
    %4130 = vmatpush2.bf16.msra.mxu0 %v4080
    %4131 = vmatprep.mubr.bf16.mxu0 %v4094
    %4132 = vmatmul.mubr.bf16.gmra.mxu0 %v1733
    %v4133 = vpop.f32.mrf.mxu0
    %v4134 = vadd.f32 0.0, %v4133
    %v4135 = vpop.f32.mrf.mxu0
    %v4136 = vpop.f32.mrf.mxu0
    %v4137 = vpop.f32.mrf.mxu0
    %4138 = vdwg.mxu0
    %v4161 = vunpack.c.l.b16 %v2099
    %v4162 = vunpack.c.l.b16 %v2100
    %v4163 = vunpack.c.l.b16 %v2101
    %v4164 = vunpack.c.l.b16 %v2102
    %v4165 = vunpack.c.l.b16 %v2103
    %v4166 = vunpack.c.l.b16 %v2104
    %v4167 = vunpack.c.l.b16 %v2105
    %v4168 = vunpack.c.l.b16 %v2106
    %v4169 = vunpack.c.l.b16 %v2107
    %v4170 = vunpack.c.l.b16 %v2108
    %v4171 = vunpack.c.l.b16 %v2109
    %v4172 = vunpack.c.l.b16 %v2110
    %v4173 = vunpack.c.l.b16 %v2111
    %v4174 = vunpack.c.l.b16 %v2112
    %v4175 = vunpack.c.l.b16 %v2113
    %v4176 = vunpack.c.l.b16 %v2114
    %v4177 = vunpack.c.l.b16 %v2115
    %v4178 = vunpack.c.l.b16 %v2116
    %v4179 = vunpack.c.l.b16 %v2117
    %v4180 = vunpack.c.l.b16 %v2118
    %v4181 = vunpack.c.l.b16 %v2119
    %v4182 = vunpack.c.l.b16 %v2120
    %v4183 = vpack.c.b16 %v4162, %v4161
    %v4184 = vpack.c.b16 %v4164, %v4163
    %v4185 = vpack.c.b16 %v4166, %v4165
    %v4186 = vpack.c.b16 %v4168, %v4167
    %v4187 = vpack.c.b16 %v4170, %v4169
    %v4188 = vpack.c.b16 %v4172, %v4171
    %v4189 = vpack.c.b16 %v4174, %v4173
    %v4190 = vpack.c.b16 %v4176, %v4175
    %v4191 = vpack.c.b16 %v4178, %v4177
    %v4192 = vpack.c.b16 %v4180, %v4179
    %v4193 = vpack.c.b16 %v4182, %v4181
    %v4205 = vsel %vm2538, %v1736, 0
    %v4208 = vand.u32 %v4193, %v96
    %4210 = vmatprep.subr.bf16.mxu0 0
    %4211 = vmatpush1.bf16.msra.mxu0 %v4190
    %4212 = vmatprep.subr.bf16.mxu0 0
    %4213 = vmatpush1.bf16.msra.mxu0 %v4189
    %4214 = vmatprep.subr.bf16.mxu0 0
    %4215 = vmatpush1.bf16.msra.mxu0 %v4188
    %4216 = vmatprep.subr.bf16.mxu0 0
    %4217 = vmatpush1.bf16.msra.mxu0 %v4187
    %4218 = vmatprep.subr.bf16.mxu0 0
    %4219 = vmatpush1.bf16.msra.mxu0 %v4186
    %4220 = vmatprep.subr.bf16.mxu0 0
    %4221 = vmatpush1.bf16.msra.mxu0 %v4185
    %4222 = vmatprep.subr.bf16.mxu0 0
    %4223 = vmatpush1.bf16.msra.mxu0 %v4184
    %4224 = vmatprep.subr.bf16.mxu0 0
    %4225 = vmatpush1.bf16.msra.mxu0 %v4183
    %4226 = vmatprep.subr.bf16.mxu0 0
    %4227 = vmatpush2.bf16.msra.mxu0 0
    %4228 = vmatprep.subr.bf16.mxu0 0
    %4229 = vmatpush2.bf16.msra.mxu0 0
    %4230 = vmatprep.subr.bf16.mxu0 0
    %4231 = vmatpush2.bf16.msra.mxu0 0
    %4232 = vmatprep.subr.bf16.mxu0 0
    %4233 = vmatpush2.bf16.msra.mxu0 0
    %4234 = vmatprep.subr.bf16.mxu0 0
    %4235 = vmatpush2.bf16.msra.mxu0 0
    %4236 = vmatprep.subr.bf16.mxu0 0
    %4237 = vmatpush2.bf16.msra.mxu0 %v4208
    %4238 = vmatprep.subr.bf16.mxu0 0
    %4239 = vmatpush2.bf16.msra.mxu0 %v4192
    %4240 = vmatprep.subr.bf16.mxu0 0
    %4241 = vmatpush2.bf16.msra.mxu0 %v4191
    %4242 = vmatprep.mubr.bf16.mxu0 %v4205
    %4243 = vmatmul.mubr.bf16.gmra.mxu0 %v1735
    %v4244 = vpop.f32.mrf.mxu0
    %v4245 = vadd.f32 0.0, %v4244
    %v4246 = vpop.f32.mrf.mxu0
    %v4247 = vpop.f32.mrf.mxu0
    %v4248 = vpop.f32.mrf.mxu0
    %4249 = vdwg.mxu0
    %v4272 = vunpack.c.l.b16 %v2121
    %v4273 = vunpack.c.l.b16 %v2122
    %v4274 = vunpack.c.l.b16 %v2123
    %v4275 = vunpack.c.l.b16 %v2124
    %v4276 = vunpack.c.l.b16 %v2125
    %v4277 = vunpack.c.l.b16 %v2126
    %v4278 = vunpack.c.l.b16 %v2127
    %v4279 = vunpack.c.l.b16 %v2128
    %v4280 = vunpack.c.l.b16 %v2129
    %v4281 = vunpack.c.l.b16 %v2130
    %v4282 = vunpack.c.l.b16 %v2131
    %v4283 = vunpack.c.l.b16 %v2132
    %v4284 = vunpack.c.l.b16 %v2133
    %v4285 = vunpack.c.l.b16 %v2134
    %v4286 = vunpack.c.l.b16 %v2135
    %v4287 = vunpack.c.l.b16 %v2136
    %v4288 = vunpack.c.l.b16 %v2137
    %v4289 = vunpack.c.l.b16 %v2138
    %v4290 = vunpack.c.l.b16 %v2139
    %v4291 = vunpack.c.l.b16 %v2140
    %v4292 = vunpack.c.l.b16 %v2141
    %v4293 = vunpack.c.l.b16 %v2142
    %v4294 = vpack.c.b16 %v4273, %v4272
    %v4295 = vpack.c.b16 %v4275, %v4274
    %v4296 = vpack.c.b16 %v4277, %v4276
    %v4297 = vpack.c.b16 %v4279, %v4278
    %v4298 = vpack.c.b16 %v4281, %v4280
    %v4299 = vpack.c.b16 %v4283, %v4282
    %v4300 = vpack.c.b16 %v4285, %v4284
    %v4301 = vpack.c.b16 %v4287, %v4286
    %v4302 = vpack.c.b16 %v4289, %v4288
    %v4303 = vpack.c.b16 %v4291, %v4290
    %v4304 = vpack.c.b16 %v4293, %v4292
    %v4316 = vsel %vm2538, %v1738, 0
    %v4319 = vand.u32 %v4304, %v96
    %4321 = vmatprep.subr.bf16.mxu0 0
    %4322 = vmatpush1.bf16.msra.mxu0 %v4301
    %4323 = vmatprep.subr.bf16.mxu0 0
    %4324 = vmatpush1.bf16.msra.mxu0 %v4300
    %4325 = vmatprep.subr.bf16.mxu0 0
    %4326 = vmatpush1.bf16.msra.mxu0 %v4299
    %4327 = vmatprep.subr.bf16.mxu0 0
    %4328 = vmatpush1.bf16.msra.mxu0 %v4298
    %4329 = vmatprep.subr.bf16.mxu0 0
    %4330 = vmatpush1.bf16.msra.mxu0 %v4297
    %4331 = vmatprep.subr.bf16.mxu0 0
    %4332 = vmatpush1.bf16.msra.mxu0 %v4296
    %4333 = vmatprep.subr.bf16.mxu0 0
    %4334 = vmatpush1.bf16.msra.mxu0 %v4295
    %4335 = vmatprep.subr.bf16.mxu0 0
    %4336 = vmatpush1.bf16.msra.mxu0 %v4294
    %4337 = vmatprep.subr.bf16.mxu0 0
    %4338 = vmatpush2.bf16.msra.mxu0 0
    %4339 = vmatprep.subr.bf16.mxu0 0
    %4340 = vmatpush2.bf16.msra.mxu0 0
    %4341 = vmatprep.subr.bf16.mxu0 0
    %4342 = vmatpush2.bf16.msra.mxu0 0
    %4343 = vmatprep.subr.bf16.mxu0 0
    %4344 = vmatpush2.bf16.msra.mxu0 0
    %4345 = vmatprep.subr.bf16.mxu0 0
    %4346 = vmatpush2.bf16.msra.mxu0 0
    %4347 = vmatprep.subr.bf16.mxu0 0
    %4348 = vmatpush2.bf16.msra.mxu0 %v4319
    %4349 = vmatprep.subr.bf16.mxu0 0
    %4350 = vmatpush2.bf16.msra.mxu0 %v4303
    %4351 = vmatprep.subr.bf16.mxu0 0
    %4352 = vmatpush2.bf16.msra.mxu0 %v4302
    %4353 = vmatprep.mubr.bf16.mxu0 %v4316
    %4354 = vmatmul.mubr.bf16.gmra.mxu0 %v1737
    %v4355 = vpop.f32.mrf.mxu0
    %v4356 = vadd.f32 0.0, %v4355
    %v4357 = vpop.f32.mrf.mxu0
    %v4358 = vpop.f32.mrf.mxu0
    %v4359 = vpop.f32.mrf.mxu0
    %4360 = vdwg.mxu0
    %v4383 = vunpack.c.l.b16 %v2143
    %v4384 = vunpack.c.l.b16 %v2144
    %v4385 = vunpack.c.l.b16 %v2145
    %v4386 = vunpack.c.l.b16 %v2146
    %v4387 = vunpack.c.l.b16 %v2147
    %v4388 = vunpack.c.l.b16 %v2148
    %v4389 = vunpack.c.l.b16 %v2149
    %v4390 = vunpack.c.l.b16 %v2150
    %v4391 = vunpack.c.l.b16 %v2151
    %v4392 = vunpack.c.l.b16 %v2152
    %v4393 = vunpack.c.l.b16 %v2153
    %v4394 = vunpack.c.l.b16 %v2154
    %v4395 = vunpack.c.l.b16 %v2155
    %v4396 = vunpack.c.l.b16 %v2156
    %v4397 = vunpack.c.l.b16 %v2157
    %v4398 = vunpack.c.l.b16 %v2158
    %v4399 = vunpack.c.l.b16 %v2159
    %v4400 = vunpack.c.l.b16 %v2160
    %v4401 = vunpack.c.l.b16 %v2161
    %v4402 = vunpack.c.l.b16 %v2162
    %v4403 = vunpack.c.l.b16 %v2163
    %v4404 = vunpack.c.l.b16 %v2164
    %v4405 = vpack.c.b16 %v4384, %v4383
    %v4406 = vpack.c.b16 %v4386, %v4385
    %v4407 = vpack.c.b16 %v4388, %v4387
    %v4408 = vpack.c.b16 %v4390, %v4389
    %v4409 = vpack.c.b16 %v4392, %v4391
    %v4410 = vpack.c.b16 %v4394, %v4393
    %v4411 = vpack.c.b16 %v4396, %v4395
    %v4412 = vpack.c.b16 %v4398, %v4397
    %v4413 = vpack.c.b16 %v4400, %v4399
    %v4414 = vpack.c.b16 %v4402, %v4401
    %v4415 = vpack.c.b16 %v4404, %v4403
    %v4427 = vsel %vm2538, %v1740, 0
    %v4430 = vand.u32 %v4415, %v96
    %4432 = vmatprep.subr.bf16.mxu0 0
    %4433 = vmatpush1.bf16.msra.mxu0 %v4412
    %4434 = vmatprep.subr.bf16.mxu0 0
    %4435 = vmatpush1.bf16.msra.mxu0 %v4411
    %4436 = vmatprep.subr.bf16.mxu0 0
    %4437 = vmatpush1.bf16.msra.mxu0 %v4410
    %4438 = vmatprep.subr.bf16.mxu0 0
    %4439 = vmatpush1.bf16.msra.mxu0 %v4409
    %4440 = vmatprep.subr.bf16.mxu0 0
    %4441 = vmatpush1.bf16.msra.mxu0 %v4408
    %4442 = vmatprep.subr.bf16.mxu0 0
    %4443 = vmatpush1.bf16.msra.mxu0 %v4407
    %4444 = vmatprep.subr.bf16.mxu0 0
    %4445 = vmatpush1.bf16.msra.mxu0 %v4406
    %4446 = vmatprep.subr.bf16.mxu0 0
    %4447 = vmatpush1.bf16.msra.mxu0 %v4405
    %4448 = vmatprep.subr.bf16.mxu0 0
    %4449 = vmatpush2.bf16.msra.mxu0 0
    %4450 = vmatprep.subr.bf16.mxu0 0
    %4451 = vmatpush2.bf16.msra.mxu0 0
    %4452 = vmatprep.subr.bf16.mxu0 0
    %4453 = vmatpush2.bf16.msra.mxu0 0
    %4454 = vmatprep.subr.bf16.mxu0 0
    %4455 = vmatpush2.bf16.msra.mxu0 0
    %4456 = vmatprep.subr.bf16.mxu0 0
    %4457 = vmatpush2.bf16.msra.mxu0 0
    %4458 = vmatprep.subr.bf16.mxu0 0
    %4459 = vmatpush2.bf16.msra.mxu0 %v4430
    %4460 = vmatprep.subr.bf16.mxu0 0
    %4461 = vmatpush2.bf16.msra.mxu0 %v4414
    %4462 = vmatprep.subr.bf16.mxu0 0
    %4463 = vmatpush2.bf16.msra.mxu0 %v4413
    %4464 = vmatprep.mubr.bf16.mxu0 %v4427
    %4465 = vmatmul.mubr.bf16.gmra.mxu0 %v1739
    %v4466 = vpop.f32.mrf.mxu0
    %v4467 = vadd.f32 0.0, %v4466
    %v4468 = vpop.f32.mrf.mxu0
    %v4469 = vpop.f32.mrf.mxu0
    %v4470 = vpop.f32.mrf.mxu0
    %4471 = vdwg.mxu0
    %v4494 = vunpack.c.l.b16 %v2165
    %v4495 = vunpack.c.l.b16 %v2166
    %v4496 = vunpack.c.l.b16 %v2167
    %v4497 = vunpack.c.l.b16 %v2168
    %v4498 = vunpack.c.l.b16 %v2169
    %v4499 = vunpack.c.l.b16 %v2170
    %v4500 = vunpack.c.l.b16 %v2171
    %v4501 = vunpack.c.l.b16 %v2172
    %v4502 = vunpack.c.l.b16 %v2173
    %v4503 = vunpack.c.l.b16 %v2174
    %v4504 = vunpack.c.l.b16 %v2175
    %v4505 = vunpack.c.l.b16 %v2176
    %v4506 = vunpack.c.l.b16 %v2177
    %v4507 = vunpack.c.l.b16 %v2178
    %v4508 = vunpack.c.l.b16 %v2179
    %v4509 = vunpack.c.l.b16 %v2180
    %v4510 = vunpack.c.l.b16 %v2181
    %v4511 = vunpack.c.l.b16 %v2182
    %v4512 = vunpack.c.l.b16 %v2183
    %v4513 = vunpack.c.l.b16 %v2184
    %v4514 = vunpack.c.l.b16 %v2185
    %v4515 = vunpack.c.l.b16 %v2186
    %v4516 = vpack.c.b16 %v4495, %v4494
    %v4517 = vpack.c.b16 %v4497, %v4496
    %v4518 = vpack.c.b16 %v4499, %v4498
    %v4519 = vpack.c.b16 %v4501, %v4500
    %v4520 = vpack.c.b16 %v4503, %v4502
    %v4521 = vpack.c.b16 %v4505, %v4504
    %v4522 = vpack.c.b16 %v4507, %v4506
    %v4523 = vpack.c.b16 %v4509, %v4508
    %v4524 = vpack.c.b16 %v4511, %v4510
    %v4525 = vpack.c.b16 %v4513, %v4512
    %v4526 = vpack.c.b16 %v4515, %v4514
    %v4538 = vsel %vm2538, %v1742, 0
    %v4541 = vand.u32 %v4526, %v96
    %4543 = vmatprep.subr.bf16.mxu0 0
    %4544 = vmatpush1.bf16.msra.mxu0 %v4523
    %4545 = vmatprep.subr.bf16.mxu0 0
    %4546 = vmatpush1.bf16.msra.mxu0 %v4522
    %4547 = vmatprep.subr.bf16.mxu0 0
    %4548 = vmatpush1.bf16.msra.mxu0 %v4521
    %4549 = vmatprep.subr.bf16.mxu0 0
    %4550 = vmatpush1.bf16.msra.mxu0 %v4520
    %4551 = vmatprep.subr.bf16.mxu0 0
    %4552 = vmatpush1.bf16.msra.mxu0 %v4519
    %4553 = vmatprep.subr.bf16.mxu0 0
    %4554 = vmatpush1.bf16.msra.mxu0 %v4518
    %4555 = vmatprep.subr.bf16.mxu0 0
    %4556 = vmatpush1.bf16.msra.mxu0 %v4517
    %4557 = vmatprep.subr.bf16.mxu0 0
    %4558 = vmatpush1.bf16.msra.mxu0 %v4516
    %4559 = vmatprep.subr.bf16.mxu0 0
    %4560 = vmatpush2.bf16.msra.mxu0 0
    %4561 = vmatprep.subr.bf16.mxu0 0
    %4562 = vmatpush2.bf16.msra.mxu0 0
    %4563 = vmatprep.subr.bf16.mxu0 0
    %4564 = vmatpush2.bf16.msra.mxu0 0
    %4565 = vmatprep.subr.bf16.mxu0 0
    %4566 = vmatpush2.bf16.msra.mxu0 0
    %4567 = vmatprep.subr.bf16.mxu0 0
    %4568 = vmatpush2.bf16.msra.mxu0 0
    %4569 = vmatprep.subr.bf16.mxu0 0
    %4570 = vmatpush2.bf16.msra.mxu0 %v4541
    %4571 = vmatprep.subr.bf16.mxu0 0
    %4572 = vmatpush2.bf16.msra.mxu0 %v4525
    %4573 = vmatprep.subr.bf16.mxu0 0
    %4574 = vmatpush2.bf16.msra.mxu0 %v4524
    %4575 = vmatprep.mubr.bf16.mxu0 %v4538
    %4576 = vmatmul.mubr.bf16.gmra.mxu0 %v1741
    %v4577 = vpop.f32.mrf.mxu0
    %v4578 = vadd.f32 0.0, %v4577
    %v4579 = vpop.f32.mrf.mxu0
    %v4580 = vpop.f32.mrf.mxu0
    %v4581 = vpop.f32.mrf.mxu0
    %4582 = vdwg.mxu0
    %v4605 = vunpack.c.l.b16 %v2187
    %v4606 = vunpack.c.l.b16 %v2188
    %v4607 = vunpack.c.l.b16 %v2189
    %v4608 = vunpack.c.l.b16 %v2190
    %v4609 = vunpack.c.l.b16 %v2191
    %v4610 = vunpack.c.l.b16 %v2192
    %v4611 = vunpack.c.l.b16 %v2193
    %v4612 = vunpack.c.l.b16 %v2194
    %v4613 = vunpack.c.l.b16 %v2195
    %v4614 = vunpack.c.l.b16 %v2196
    %v4615 = vunpack.c.l.b16 %v2197
    %v4616 = vunpack.c.l.b16 %v2198
    %v4617 = vunpack.c.l.b16 %v2199
    %v4618 = vunpack.c.l.b16 %v2200
    %v4619 = vunpack.c.l.b16 %v2201
    %v4620 = vunpack.c.l.b16 %v2202
    %v4621 = vunpack.c.l.b16 %v2203
    %v4622 = vunpack.c.l.b16 %v2204
    %v4623 = vunpack.c.l.b16 %v2205
    %v4624 = vunpack.c.l.b16 %v2206
    %v4625 = vunpack.c.l.b16 %v2207
    %v4626 = vunpack.c.l.b16 %v2208
    %v4627 = vpack.c.b16 %v4606, %v4605
    %v4628 = vpack.c.b16 %v4608, %v4607
    %v4629 = vpack.c.b16 %v4610, %v4609
    %v4630 = vpack.c.b16 %v4612, %v4611
    %v4631 = vpack.c.b16 %v4614, %v4613
    %v4632 = vpack.c.b16 %v4616, %v4615
    %v4633 = vpack.c.b16 %v4618, %v4617
    %v4634 = vpack.c.b16 %v4620, %v4619
    %v4635 = vpack.c.b16 %v4622, %v4621
    %v4636 = vpack.c.b16 %v4624, %v4623
    %v4637 = vpack.c.b16 %v4626, %v4625
    %v4649 = vsel %vm2538, %v1744, 0
    %v4652 = vand.u32 %v4637, %v96
    %4654 = vmatprep.subr.bf16.mxu0 0
    %4655 = vmatpush1.bf16.msra.mxu0 %v4634
    %4656 = vmatprep.subr.bf16.mxu0 0
    %4657 = vmatpush1.bf16.msra.mxu0 %v4633
    %4658 = vmatprep.subr.bf16.mxu0 0
    %4659 = vmatpush1.bf16.msra.mxu0 %v4632
    %4660 = vmatprep.subr.bf16.mxu0 0
    %4661 = vmatpush1.bf16.msra.mxu0 %v4631
    %4662 = vmatprep.subr.bf16.mxu0 0
    %4663 = vmatpush1.bf16.msra.mxu0 %v4630
    %4664 = vmatprep.subr.bf16.mxu0 0
    %4665 = vmatpush1.bf16.msra.mxu0 %v4629
    %4666 = vmatprep.subr.bf16.mxu0 0
    %4667 = vmatpush1.bf16.msra.mxu0 %v4628
    %4668 = vmatprep.subr.bf16.mxu0 0
    %4669 = vmatpush1.bf16.msra.mxu0 %v4627
    %4670 = vmatprep.subr.bf16.mxu0 0
    %4671 = vmatpush2.bf16.msra.mxu0 0
    %4672 = vmatprep.subr.bf16.mxu0 0
    %4673 = vmatpush2.bf16.msra.mxu0 0
    %4674 = vmatprep.subr.bf16.mxu0 0
    %4675 = vmatpush2.bf16.msra.mxu0 0
    %4676 = vmatprep.subr.bf16.mxu0 0
    %4677 = vmatpush2.bf16.msra.mxu0 0
    %4678 = vmatprep.subr.bf16.mxu0 0
    %4679 = vmatpush2.bf16.msra.mxu0 0
    %4680 = vmatprep.subr.bf16.mxu0 0
    %4681 = vmatpush2.bf16.msra.mxu0 %v4652
    %4682 = vmatprep.subr.bf16.mxu0 0
    %4683 = vmatpush2.bf16.msra.mxu0 %v4636
    %4684 = vmatprep.subr.bf16.mxu0 0
    %4685 = vmatpush2.bf16.msra.mxu0 %v4635
    %4686 = vmatprep.mubr.bf16.mxu0 %v4649
    %4687 = vmatmul.mubr.bf16.gmra.mxu0 %v1743
    %v4688 = vpop.f32.mrf.mxu0
    %v4689 = vadd.f32 0.0, %v4688
    %v4690 = vpop.f32.mrf.mxu0
    %v4691 = vpop.f32.mrf.mxu0
    %v4692 = vpop.f32.mrf.mxu0
    %4693 = vdwg.mxu0
    %v4716 = vunpack.c.l.b16 %v2209
    %v4717 = vunpack.c.l.b16 %v2210
    %v4718 = vunpack.c.l.b16 %v2211
    %v4719 = vunpack.c.l.b16 %v2212
    %v4720 = vunpack.c.l.b16 %v2213
    %v4721 = vunpack.c.l.b16 %v2214
    %v4722 = vunpack.c.l.b16 %v2215
    %v4723 = vunpack.c.l.b16 %v2216
    %v4724 = vunpack.c.l.b16 %v2217
    %v4725 = vunpack.c.l.b16 %v2218
    %v4726 = vunpack.c.l.b16 %v2219
    %v4727 = vunpack.c.l.b16 %v2220
    %v4728 = vunpack.c.l.b16 %v2221
    %v4729 = vunpack.c.l.b16 %v2222
    %v4730 = vunpack.c.l.b16 %v2223
    %v4731 = vunpack.c.l.b16 %v2224
    %v4732 = vunpack.c.l.b16 %v2225
    %v4733 = vunpack.c.l.b16 %v2226
    %v4734 = vunpack.c.l.b16 %v2227
    %v4735 = vunpack.c.l.b16 %v2228
    %v4736 = vunpack.c.l.b16 %v2229
    %v4737 = vunpack.c.l.b16 %v2230
    %v4738 = vpack.c.b16 %v4717, %v4716
    %v4739 = vpack.c.b16 %v4719, %v4718
    %v4740 = vpack.c.b16 %v4721, %v4720
    %v4741 = vpack.c.b16 %v4723, %v4722
    %v4742 = vpack.c.b16 %v4725, %v4724
    %v4743 = vpack.c.b16 %v4727, %v4726
    %v4744 = vpack.c.b16 %v4729, %v4728
    %v4745 = vpack.c.b16 %v4731, %v4730
    %v4746 = vpack.c.b16 %v4733, %v4732
    %v4747 = vpack.c.b16 %v4735, %v4734
    %v4748 = vpack.c.b16 %v4737, %v4736
    %v4760 = vsel %vm2538, %v1746, 0
    %v4763 = vand.u32 %v4748, %v96
    %4765 = vmatprep.subr.bf16.mxu0 0
    %4766 = vmatpush1.bf16.msra.mxu0 %v4745
    %4767 = vmatprep.subr.bf16.mxu0 0
    %4768 = vmatpush1.bf16.msra.mxu0 %v4744
    %4769 = vmatprep.subr.bf16.mxu0 0
    %4770 = vmatpush1.bf16.msra.mxu0 %v4743
    %4771 = vmatprep.subr.bf16.mxu0 0
    %4772 = vmatpush1.bf16.msra.mxu0 %v4742
    %4773 = vmatprep.subr.bf16.mxu0 0
    %4774 = vmatpush1.bf16.msra.mxu0 %v4741
    %4775 = vmatprep.subr.bf16.mxu0 0
    %4776 = vmatpush1.bf16.msra.mxu0 %v4740
    %4777 = vmatprep.subr.bf16.mxu0 0
    %4778 = vmatpush1.bf16.msra.mxu0 %v4739
    %4779 = vmatprep.subr.bf16.mxu0 0
    %4780 = vmatpush1.bf16.msra.mxu0 %v4738
    %4781 = vmatprep.subr.bf16.mxu0 0
    %4782 = vmatpush2.bf16.msra.mxu0 0
    %4783 = vmatprep.subr.bf16.mxu0 0
    %4784 = vmatpush2.bf16.msra.mxu0 0
    %4785 = vmatprep.subr.bf16.mxu0 0
    %4786 = vmatpush2.bf16.msra.mxu0 0
    %4787 = vmatprep.subr.bf16.mxu0 0
    %4788 = vmatpush2.bf16.msra.mxu0 0
    %4789 = vmatprep.subr.bf16.mxu0 0
    %4790 = vmatpush2.bf16.msra.mxu0 0
    %4791 = vmatprep.subr.bf16.mxu0 0
    %4792 = vmatpush2.bf16.msra.mxu0 %v4763
    %4793 = vmatprep.subr.bf16.mxu0 0
    %4794 = vmatpush2.bf16.msra.mxu0 %v4747
    %4795 = vmatprep.subr.bf16.mxu0 0
    %4796 = vmatpush2.bf16.msra.mxu0 %v4746
    %4797 = vmatprep.mubr.bf16.mxu0 %v4760
    %4798 = vmatmul.mubr.bf16.gmra.mxu0 %v1745
    %v4799 = vpop.f32.mrf.mxu0
    %v4800 = vadd.f32 0.0, %v4799
    %v4801 = vpop.f32.mrf.mxu0
    %v4802 = vpop.f32.mrf.mxu0
    %v4803 = vpop.f32.mrf.mxu0
    %4804 = vdwg.mxu0
    %v4827 = vunpack.c.l.b16 %v2231
    %v4828 = vunpack.c.l.b16 %v2232
    %v4829 = vunpack.c.l.b16 %v2233
    %v4830 = vunpack.c.l.b16 %v2234
    %v4831 = vunpack.c.l.b16 %v2235
    %v4832 = vunpack.c.l.b16 %v2236
    %v4833 = vunpack.c.l.b16 %v2237
    %v4834 = vunpack.c.l.b16 %v2238
    %v4835 = vunpack.c.l.b16 %v2239
    %v4836 = vunpack.c.l.b16 %v2240
    %v4837 = vunpack.c.l.b16 %v2241
    %v4838 = vunpack.c.l.b16 %v2242
    %v4839 = vunpack.c.l.b16 %v2243
    %v4840 = vunpack.c.l.b16 %v2244
    %v4841 = vunpack.c.l.b16 %v2245
    %v4842 = vunpack.c.l.b16 %v2246
    %v4843 = vunpack.c.l.b16 %v2247
    %v4844 = vunpack.c.l.b16 %v2248
    %v4845 = vunpack.c.l.b16 %v2249
    %v4846 = vunpack.c.l.b16 %v2250
    %v4847 = vunpack.c.l.b16 %v2251
    %v4848 = vunpack.c.l.b16 %v2252
    %v4849 = vpack.c.b16 %v4828, %v4827
    %v4850 = vpack.c.b16 %v4830, %v4829
    %v4851 = vpack.c.b16 %v4832, %v4831
    %v4852 = vpack.c.b16 %v4834, %v4833
    %v4853 = vpack.c.b16 %v4836, %v4835
    %v4854 = vpack.c.b16 %v4838, %v4837
    %v4855 = vpack.c.b16 %v4840, %v4839
    %v4856 = vpack.c.b16 %v4842, %v4841
    %v4857 = vpack.c.b16 %v4844, %v4843
    %v4858 = vpack.c.b16 %v4846, %v4845
    %v4859 = vpack.c.b16 %v4848, %v4847
    %v4871 = vsel %vm2538, %v1748, 0
    %v4874 = vand.u32 %v4859, %v96
    %4876 = vmatprep.subr.bf16.mxu0 0
    %4877 = vmatpush1.bf16.msra.mxu0 %v4856
    %4878 = vmatprep.subr.bf16.mxu0 0
    %4879 = vmatpush1.bf16.msra.mxu0 %v4855
    %4880 = vmatprep.subr.bf16.mxu0 0
    %4881 = vmatpush1.bf16.msra.mxu0 %v4854
    %4882 = vmatprep.subr.bf16.mxu0 0
    %4883 = vmatpush1.bf16.msra.mxu0 %v4853
    %4884 = vmatprep.subr.bf16.mxu0 0
    %4885 = vmatpush1.bf16.msra.mxu0 %v4852
    %4886 = vmatprep.subr.bf16.mxu0 0
    %4887 = vmatpush1.bf16.msra.mxu0 %v4851
    %4888 = vmatprep.subr.bf16.mxu0 0
    %4889 = vmatpush1.bf16.msra.mxu0 %v4850
    %4890 = vmatprep.subr.bf16.mxu0 0
    %4891 = vmatpush1.bf16.msra.mxu0 %v4849
    %4892 = vmatprep.subr.bf16.mxu0 0
    %4893 = vmatpush2.bf16.msra.mxu0 0
    %4894 = vmatprep.subr.bf16.mxu0 0
    %4895 = vmatpush2.bf16.msra.mxu0 0
    %4896 = vmatprep.subr.bf16.mxu0 0
    %4897 = vmatpush2.bf16.msra.mxu0 0
    %4898 = vmatprep.subr.bf16.mxu0 0
    %4899 = vmatpush2.bf16.msra.mxu0 0
    %4900 = vmatprep.subr.bf16.mxu0 0
    %4901 = vmatpush2.bf16.msra.mxu0 0
    %4902 = vmatprep.subr.bf16.mxu0 0
    %4903 = vmatpush2.bf16.msra.mxu0 %v4874
    %4904 = vmatprep.subr.bf16.mxu0 0
    %4905 = vmatpush2.bf16.msra.mxu0 %v4858
    %4906 = vmatprep.subr.bf16.mxu0 0
    %4907 = vmatpush2.bf16.msra.mxu0 %v4857
    %4908 = vmatprep.mubr.bf16.mxu0 %v4871
    %4909 = vmatmul.mubr.bf16.gmra.mxu0 %v1747
    %v4910 = vpop.f32.mrf.mxu0
    %v4911 = vadd.f32 0.0, %v4910
    %v4912 = vpop.f32.mrf.mxu0
    %v4913 = vpop.f32.mrf.mxu0
    %v4914 = vpop.f32.mrf.mxu0
    %4915 = vdwg.mxu0
    %v4938 = vunpack.c.l.b16 %v2253
    %v4939 = vunpack.c.l.b16 %v2254
    %v4940 = vunpack.c.l.b16 %v2255
    %v4941 = vunpack.c.l.b16 %v2256
    %v4942 = vunpack.c.l.b16 %v2257
    %v4943 = vunpack.c.l.b16 %v2258
    %v4944 = vunpack.c.l.b16 %v2259
    %v4945 = vunpack.c.l.b16 %v2260
    %v4946 = vunpack.c.l.b16 %v2261
    %v4947 = vunpack.c.l.b16 %v2262
    %v4948 = vunpack.c.l.b16 %v2263
    %v4949 = vunpack.c.l.b16 %v2264
    %v4950 = vunpack.c.l.b16 %v2265
    %v4951 = vunpack.c.l.b16 %v2266
    %v4952 = vunpack.c.l.b16 %v2267
    %v4953 = vunpack.c.l.b16 %v2268
    %v4954 = vunpack.c.l.b16 %v2269
    %v4955 = vunpack.c.l.b16 %v2270
    %v4956 = vunpack.c.l.b16 %v2271
    %v4957 = vunpack.c.l.b16 %v2272
    %v4958 = vunpack.c.l.b16 %v2273
    %v4959 = vunpack.c.l.b16 %v2274
    %v4960 = vpack.c.b16 %v4939, %v4938
    %v4961 = vpack.c.b16 %v4941, %v4940
    %v4962 = vpack.c.b16 %v4943, %v4942
    %v4963 = vpack.c.b16 %v4945, %v4944
    %v4964 = vpack.c.b16 %v4947, %v4946
    %v4965 = vpack.c.b16 %v4949, %v4948
    %v4966 = vpack.c.b16 %v4951, %v4950
    %v4967 = vpack.c.b16 %v4953, %v4952
    %v4968 = vpack.c.b16 %v4955, %v4954
    %v4969 = vpack.c.b16 %v4957, %v4956
    %v4970 = vpack.c.b16 %v4959, %v4958
    %v4982 = vsel %vm2538, %v1750, 0
    %v4985 = vand.u32 %v4970, %v96
    %4987 = vmatprep.subr.bf16.mxu0 0
    %4988 = vmatpush1.bf16.msra.mxu0 %v4967
    %4989 = vmatprep.subr.bf16.mxu0 0
    %4990 = vmatpush1.bf16.msra.mxu0 %v4966
    %4991 = vmatprep.subr.bf16.mxu0 0
    %4992 = vmatpush1.bf16.msra.mxu0 %v4965
    %4993 = vmatprep.subr.bf16.mxu0 0
    %4994 = vmatpush1.bf16.msra.mxu0 %v4964
    %4995 = vmatprep.subr.bf16.mxu0 0
    %4996 = vmatpush1.bf16.msra.mxu0 %v4963
    %4997 = vmatprep.subr.bf16.mxu0 0
    %4998 = vmatpush1.bf16.msra.mxu0 %v4962
    %4999 = vmatprep.subr.bf16.mxu0 0
    %5000 = vmatpush1.bf16.msra.mxu0 %v4961
    %5001 = vmatprep.subr.bf16.mxu0 0
    %5002 = vmatpush1.bf16.msra.mxu0 %v4960
    %5003 = vmatprep.subr.bf16.mxu0 0
    %5004 = vmatpush2.bf16.msra.mxu0 0
    %5005 = vmatprep.subr.bf16.mxu0 0
    %5006 = vmatpush2.bf16.msra.mxu0 0
    %5007 = vmatprep.subr.bf16.mxu0 0
    %5008 = vmatpush2.bf16.msra.mxu0 0
    %5009 = vmatprep.subr.bf16.mxu0 0
    %5010 = vmatpush2.bf16.msra.mxu0 0
    %5011 = vmatprep.subr.bf16.mxu0 0
    %5012 = vmatpush2.bf16.msra.mxu0 0
    %5013 = vmatprep.subr.bf16.mxu0 0
    %5014 = vmatpush2.bf16.msra.mxu0 %v4985
    %5015 = vmatprep.subr.bf16.mxu0 0
    %5016 = vmatpush2.bf16.msra.mxu0 %v4969
    %5017 = vmatprep.subr.bf16.mxu0 0
    %5018 = vmatpush2.bf16.msra.mxu0 %v4968
    %5019 = vmatprep.mubr.bf16.mxu0 %v4982
    %5020 = vmatmul.mubr.bf16.gmra.mxu0 %v1749
    %v5021 = vpop.f32.mrf.mxu0
    %v5022 = vadd.f32 0.0, %v5021
    %v5023 = vpop.f32.mrf.mxu0
    %v5024 = vpop.f32.mrf.mxu0
    %v5025 = vpop.f32.mrf.mxu0
    %5026 = vdwg.mxu0
    %v5049 = vunpack.c.l.b16 %v2275
    %v5050 = vunpack.c.l.b16 %v2276
    %v5051 = vunpack.c.l.b16 %v2277
    %v5052 = vunpack.c.l.b16 %v2278
    %v5053 = vunpack.c.l.b16 %v2279
    %v5054 = vunpack.c.l.b16 %v2280
    %v5055 = vunpack.c.l.b16 %v2281
    %v5056 = vunpack.c.l.b16 %v2282
    %v5057 = vunpack.c.l.b16 %v2283
    %v5058 = vunpack.c.l.b16 %v2284
    %v5059 = vunpack.c.l.b16 %v2285
    %v5060 = vunpack.c.l.b16 %v2286
    %v5061 = vunpack.c.l.b16 %v2287
    %v5062 = vunpack.c.l.b16 %v2288
    %v5063 = vunpack.c.l.b16 %v2289
    %v5064 = vunpack.c.l.b16 %v2290
    %v5065 = vunpack.c.l.b16 %v2291
    %v5066 = vunpack.c.l.b16 %v2292
    %v5067 = vunpack.c.l.b16 %v2293
    %v5068 = vunpack.c.l.b16 %v2294
    %v5069 = vunpack.c.l.b16 %v2295
    %v5070 = vunpack.c.l.b16 %v2296
    %v5071 = vpack.c.b16 %v5050, %v5049
    %v5072 = vpack.c.b16 %v5052, %v5051
    %v5073 = vpack.c.b16 %v5054, %v5053
    %v5074 = vpack.c.b16 %v5056, %v5055
    %v5075 = vpack.c.b16 %v5058, %v5057
    %v5076 = vpack.c.b16 %v5060, %v5059
    %v5077 = vpack.c.b16 %v5062, %v5061
    %v5078 = vpack.c.b16 %v5064, %v5063
    %v5079 = vpack.c.b16 %v5066, %v5065
    %v5080 = vpack.c.b16 %v5068, %v5067
    %v5081 = vpack.c.b16 %v5070, %v5069
    %v5093 = vsel %vm2538, %v1752, 0
    %v5096 = vand.u32 %v5081, %v96
    %5098 = vmatprep.subr.bf16.mxu0 0
    %5099 = vmatpush1.bf16.msra.mxu0 %v5078
    %5100 = vmatprep.subr.bf16.mxu0 0
    %5101 = vmatpush1.bf16.msra.mxu0 %v5077
    %5102 = vmatprep.subr.bf16.mxu0 0
    %5103 = vmatpush1.bf16.msra.mxu0 %v5076
    %5104 = vmatprep.subr.bf16.mxu0 0
    %5105 = vmatpush1.bf16.msra.mxu0 %v5075
    %5106 = vmatprep.subr.bf16.mxu0 0
    %5107 = vmatpush1.bf16.msra.mxu0 %v5074
    %5108 = vmatprep.subr.bf16.mxu0 0
    %5109 = vmatpush1.bf16.msra.mxu0 %v5073
    %5110 = vmatprep.subr.bf16.mxu0 0
    %5111 = vmatpush1.bf16.msra.mxu0 %v5072
    %5112 = vmatprep.subr.bf16.mxu0 0
    %5113 = vmatpush1.bf16.msra.mxu0 %v5071
    %5114 = vmatprep.subr.bf16.mxu0 0
    %5115 = vmatpush2.bf16.msra.mxu0 0
    %5116 = vmatprep.subr.bf16.mxu0 0
    %5117 = vmatpush2.bf16.msra.mxu0 0
    %5118 = vmatprep.subr.bf16.mxu0 0
    %5119 = vmatpush2.bf16.msra.mxu0 0
    %5120 = vmatprep.subr.bf16.mxu0 0
    %5121 = vmatpush2.bf16.msra.mxu0 0
    %5122 = vmatprep.subr.bf16.mxu0 0
    %5123 = vmatpush2.bf16.msra.mxu0 0
    %5124 = vmatprep.subr.bf16.mxu0 0
    %5125 = vmatpush2.bf16.msra.mxu0 %v5096
    %5126 = vmatprep.subr.bf16.mxu0 0
    %5127 = vmatpush2.bf16.msra.mxu0 %v5080
    %5128 = vmatprep.subr.bf16.mxu0 0
    %5129 = vmatpush2.bf16.msra.mxu0 %v5079
    %5130 = vmatprep.mubr.bf16.mxu0 %v5093
    %5131 = vmatmul.mubr.bf16.gmra.mxu0 %v1751
    %v5132 = vpop.f32.mrf.mxu0
    %v5133 = vadd.f32 0.0, %v5132
    %v5134 = vpop.f32.mrf.mxu0
    %v5135 = vpop.f32.mrf.mxu0
    %v5136 = vpop.f32.mrf.mxu0
    %5137 = vdwg.mxu0
    %v5160 = vunpack.c.l.b16 %v2297
    %v5161 = vunpack.c.l.b16 %v2298
    %v5162 = vunpack.c.l.b16 %v2299
    %v5163 = vunpack.c.l.b16 %v2300
    %v5164 = vunpack.c.l.b16 %v2301
    %v5165 = vunpack.c.l.b16 %v2302
    %v5166 = vunpack.c.l.b16 %v2303
    %v5167 = vunpack.c.l.b16 %v2304
    %v5168 = vunpack.c.l.b16 %v2305
    %v5169 = vunpack.c.l.b16 %v2306
    %v5170 = vunpack.c.l.b16 %v2307
    %v5171 = vunpack.c.l.b16 %v2308
    %v5172 = vunpack.c.l.b16 %v2309
    %v5173 = vunpack.c.l.b16 %v2310
    %v5174 = vunpack.c.l.b16 %v2311
    %v5175 = vunpack.c.l.b16 %v2312
    %v5176 = vunpack.c.l.b16 %v2313
    %v5177 = vunpack.c.l.b16 %v2314
    %v5178 = vunpack.c.l.b16 %v2315
    %v5179 = vunpack.c.l.b16 %v2316
    %v5180 = vunpack.c.l.b16 %v2317
    %v5181 = vunpack.c.l.b16 %v2318
    %v5182 = vpack.c.b16 %v5161, %v5160
    %v5183 = vpack.c.b16 %v5163, %v5162
    %v5184 = vpack.c.b16 %v5165, %v5164
    %v5185 = vpack.c.b16 %v5167, %v5166
    %v5186 = vpack.c.b16 %v5169, %v5168
    %v5187 = vpack.c.b16 %v5171, %v5170
    %v5188 = vpack.c.b16 %v5173, %v5172
    %v5189 = vpack.c.b16 %v5175, %v5174
    %v5190 = vpack.c.b16 %v5177, %v5176
    %v5191 = vpack.c.b16 %v5179, %v5178
    %v5192 = vpack.c.b16 %v5181, %v5180
    %v5204 = vsel %vm2538, %v1754, 0
    %v5207 = vand.u32 %v5192, %v96
    %5209 = vmatprep.subr.bf16.mxu0 0
    %5210 = vmatpush1.bf16.msra.mxu0 %v5189
    %5211 = vmatprep.subr.bf16.mxu0 0
    %5212 = vmatpush1.bf16.msra.mxu0 %v5188
    %5213 = vmatprep.subr.bf16.mxu0 0
    %5214 = vmatpush1.bf16.msra.mxu0 %v5187
    %5215 = vmatprep.subr.bf16.mxu0 0
    %5216 = vmatpush1.bf16.msra.mxu0 %v5186
    %5217 = vmatprep.subr.bf16.mxu0 0
    %5218 = vmatpush1.bf16.msra.mxu0 %v5185
    %5219 = vmatprep.subr.bf16.mxu0 0
    %5220 = vmatpush1.bf16.msra.mxu0 %v5184
    %5221 = vmatprep.subr.bf16.mxu0 0
    %5222 = vmatpush1.bf16.msra.mxu0 %v5183
    %5223 = vmatprep.subr.bf16.mxu0 0
    %5224 = vmatpush1.bf16.msra.mxu0 %v5182
    %5225 = vmatprep.subr.bf16.mxu0 0
    %5226 = vmatpush2.bf16.msra.mxu0 0
    %5227 = vmatprep.subr.bf16.mxu0 0
    %5228 = vmatpush2.bf16.msra.mxu0 0
    %5229 = vmatprep.subr.bf16.mxu0 0
    %5230 = vmatpush2.bf16.msra.mxu0 0
    %5231 = vmatprep.subr.bf16.mxu0 0
    %5232 = vmatpush2.bf16.msra.mxu0 0
    %5233 = vmatprep.subr.bf16.mxu0 0
    %5234 = vmatpush2.bf16.msra.mxu0 0
    %5235 = vmatprep.subr.bf16.mxu0 0
    %5236 = vmatpush2.bf16.msra.mxu0 %v5207
    %5237 = vmatprep.subr.bf16.mxu0 0
    %5238 = vmatpush2.bf16.msra.mxu0 %v5191
    %5239 = vmatprep.subr.bf16.mxu0 0
    %5240 = vmatpush2.bf16.msra.mxu0 %v5190
    %5241 = vmatprep.mubr.bf16.mxu0 %v5204
    %5242 = vmatmul.mubr.bf16.gmra.mxu0 %v1753
    %v5243 = vpop.f32.mrf.mxu0
    %v5244 = vadd.f32 0.0, %v5243
    %v5245 = vpop.f32.mrf.mxu0
    %v5246 = vpop.f32.mrf.mxu0
    %v5247 = vpop.f32.mrf.mxu0
    %5248 = vdwg.mxu0
    %v5271 = vunpack.c.l.b16 %v2319
    %v5272 = vunpack.c.l.b16 %v2320
    %v5273 = vunpack.c.l.b16 %v2321
    %v5274 = vunpack.c.l.b16 %v2322
    %v5275 = vunpack.c.l.b16 %v2323
    %v5276 = vunpack.c.l.b16 %v2324
    %v5277 = vunpack.c.l.b16 %v2325
    %v5278 = vunpack.c.l.b16 %v2326
    %v5279 = vunpack.c.l.b16 %v2327
    %v5280 = vunpack.c.l.b16 %v2328
    %v5281 = vunpack.c.l.b16 %v2329
    %v5282 = vunpack.c.l.b16 %v2330
    %v5283 = vunpack.c.l.b16 %v2331
    %v5284 = vunpack.c.l.b16 %v2332
    %v5285 = vunpack.c.l.b16 %v2333
    %v5286 = vunpack.c.l.b16 %v2334
    %v5287 = vunpack.c.l.b16 %v2335
    %v5288 = vunpack.c.l.b16 %v2336
    %v5289 = vunpack.c.l.b16 %v2337
    %v5290 = vunpack.c.l.b16 %v2338
    %v5291 = vunpack.c.l.b16 %v2339
    %v5292 = vunpack.c.l.b16 %v2340
    %v5293 = vpack.c.b16 %v5272, %v5271
    %v5294 = vpack.c.b16 %v5274, %v5273
    %v5295 = vpack.c.b16 %v5276, %v5275
    %v5296 = vpack.c.b16 %v5278, %v5277
    %v5297 = vpack.c.b16 %v5280, %v5279
    %v5298 = vpack.c.b16 %v5282, %v5281
    %v5299 = vpack.c.b16 %v5284, %v5283
    %v5300 = vpack.c.b16 %v5286, %v5285
    %v5301 = vpack.c.b16 %v5288, %v5287
    %v5302 = vpack.c.b16 %v5290, %v5289
    %v5303 = vpack.c.b16 %v5292, %v5291
    %v5315 = vsel %vm2538, %v1756, 0
    %v5318 = vand.u32 %v5303, %v96
    %5320 = vmatprep.subr.bf16.mxu0 0
    %5321 = vmatpush1.bf16.msra.mxu0 %v5300
    %5322 = vmatprep.subr.bf16.mxu0 0
    %5323 = vmatpush1.bf16.msra.mxu0 %v5299
    %5324 = vmatprep.subr.bf16.mxu0 0
    %5325 = vmatpush1.bf16.msra.mxu0 %v5298
    %5326 = vmatprep.subr.bf16.mxu0 0
    %5327 = vmatpush1.bf16.msra.mxu0 %v5297
    %5328 = vmatprep.subr.bf16.mxu0 0
    %5329 = vmatpush1.bf16.msra.mxu0 %v5296
    %5330 = vmatprep.subr.bf16.mxu0 0
    %5331 = vmatpush1.bf16.msra.mxu0 %v5295
    %5332 = vmatprep.subr.bf16.mxu0 0
    %5333 = vmatpush1.bf16.msra.mxu0 %v5294
    %5334 = vmatprep.subr.bf16.mxu0 0
    %5335 = vmatpush1.bf16.msra.mxu0 %v5293
    %5336 = vmatprep.subr.bf16.mxu0 0
    %5337 = vmatpush2.bf16.msra.mxu0 0
    %5338 = vmatprep.subr.bf16.mxu0 0
    %5339 = vmatpush2.bf16.msra.mxu0 0
    %5340 = vmatprep.subr.bf16.mxu0 0
    %5341 = vmatpush2.bf16.msra.mxu0 0
    %5342 = vmatprep.subr.bf16.mxu0 0
    %5343 = vmatpush2.bf16.msra.mxu0 0
    %5344 = vmatprep.subr.bf16.mxu0 0
    %5345 = vmatpush2.bf16.msra.mxu0 0
    %5346 = vmatprep.subr.bf16.mxu0 0
    %5347 = vmatpush2.bf16.msra.mxu0 %v5318
    %5348 = vmatprep.subr.bf16.mxu0 0
    %5349 = vmatpush2.bf16.msra.mxu0 %v5302
    %5350 = vmatprep.subr.bf16.mxu0 0
    %5351 = vmatpush2.bf16.msra.mxu0 %v5301
    %5352 = vmatprep.mubr.bf16.mxu0 %v5315
    %5353 = vmatmul.mubr.bf16.gmra.mxu0 %v1755
    %v5354 = vpop.f32.mrf.mxu0
    %v5355 = vadd.f32 0.0, %v5354
    %v5356 = vpop.f32.mrf.mxu0
    %v5357 = vpop.f32.mrf.mxu0
    %v5358 = vpop.f32.mrf.mxu0
    %5359 = vdwg.mxu0
    %v5382 = vunpack.c.l.b16 %v2341
    %v5383 = vunpack.c.l.b16 %v2342
    %v5384 = vunpack.c.l.b16 %v2343
    %v5385 = vunpack.c.l.b16 %v2344
    %v5386 = vunpack.c.l.b16 %v2345
    %v5387 = vunpack.c.l.b16 %v2346
    %v5388 = vunpack.c.l.b16 %v2347
    %v5389 = vunpack.c.l.b16 %v2348
    %v5390 = vunpack.c.l.b16 %v2349
    %v5391 = vunpack.c.l.b16 %v2350
    %v5392 = vunpack.c.l.b16 %v2351
    %v5393 = vunpack.c.l.b16 %v2352
    %v5394 = vunpack.c.l.b16 %v2353
    %v5395 = vunpack.c.l.b16 %v2354
    %v5396 = vunpack.c.l.b16 %v2355
    %v5397 = vunpack.c.l.b16 %v2356
    %v5398 = vunpack.c.l.b16 %v2357
    %v5399 = vunpack.c.l.b16 %v2358
    %v5400 = vunpack.c.l.b16 %v2359
    %v5401 = vunpack.c.l.b16 %v2360
    %v5402 = vunpack.c.l.b16 %v2361
    %v5403 = vunpack.c.l.b16 %v2362
    %v5404 = vpack.c.b16 %v5383, %v5382
    %v5405 = vpack.c.b16 %v5385, %v5384
    %v5406 = vpack.c.b16 %v5387, %v5386
    %v5407 = vpack.c.b16 %v5389, %v5388
    %v5408 = vpack.c.b16 %v5391, %v5390
    %v5409 = vpack.c.b16 %v5393, %v5392
    %v5410 = vpack.c.b16 %v5395, %v5394
    %v5411 = vpack.c.b16 %v5397, %v5396
    %v5412 = vpack.c.b16 %v5399, %v5398
    %v5413 = vpack.c.b16 %v5401, %v5400
    %v5414 = vpack.c.b16 %v5403, %v5402
    %v5426 = vsel %vm2538, %v1758, 0
    %v5429 = vand.u32 %v5414, %v96
    %5431 = vmatprep.subr.bf16.mxu0 0
    %5432 = vmatpush1.bf16.msra.mxu0 %v5411
    %5433 = vmatprep.subr.bf16.mxu0 0
    %5434 = vmatpush1.bf16.msra.mxu0 %v5410
    %5435 = vmatprep.subr.bf16.mxu0 0
    %5436 = vmatpush1.bf16.msra.mxu0 %v5409
    %5437 = vmatprep.subr.bf16.mxu0 0
    %5438 = vmatpush1.bf16.msra.mxu0 %v5408
    %5439 = vmatprep.subr.bf16.mxu0 0
    %5440 = vmatpush1.bf16.msra.mxu0 %v5407
    %5441 = vmatprep.subr.bf16.mxu0 0
    %5442 = vmatpush1.bf16.msra.mxu0 %v5406
    %5443 = vmatprep.subr.bf16.mxu0 0
    %5444 = vmatpush1.bf16.msra.mxu0 %v5405
    %5445 = vmatprep.subr.bf16.mxu0 0
    %5446 = vmatpush1.bf16.msra.mxu0 %v5404
    %5447 = vmatprep.subr.bf16.mxu0 0
    %5448 = vmatpush2.bf16.msra.mxu0 0
    %5449 = vmatprep.subr.bf16.mxu0 0
    %5450 = vmatpush2.bf16.msra.mxu0 0
    %5451 = vmatprep.subr.bf16.mxu0 0
    %5452 = vmatpush2.bf16.msra.mxu0 0
    %5453 = vmatprep.subr.bf16.mxu0 0
    %5454 = vmatpush2.bf16.msra.mxu0 0
    %5455 = vmatprep.subr.bf16.mxu0 0
    %5456 = vmatpush2.bf16.msra.mxu0 0
    %5457 = vmatprep.subr.bf16.mxu0 0
    %5458 = vmatpush2.bf16.msra.mxu0 %v5429
    %5459 = vmatprep.subr.bf16.mxu0 0
    %5460 = vmatpush2.bf16.msra.mxu0 %v5413
    %5461 = vmatprep.subr.bf16.mxu0 0
    %5462 = vmatpush2.bf16.msra.mxu0 %v5412
    %5463 = vmatprep.mubr.bf16.mxu0 %v5426
    %5464 = vmatmul.mubr.bf16.gmra.mxu0 %v1757
    %v5465 = vpop.f32.mrf.mxu0
    %v5466 = vadd.f32 0.0, %v5465
    %v5467 = vpop.f32.mrf.mxu0
    %v5468 = vpop.f32.mrf.mxu0
    %v5469 = vpop.f32.mrf.mxu0
    %5470 = vdwg.mxu0
    %v5493 = vunpack.c.l.b16 %v2363
    %v5494 = vunpack.c.l.b16 %v2364
    %v5495 = vunpack.c.l.b16 %v2365
    %v5496 = vunpack.c.l.b16 %v2366
    %v5497 = vunpack.c.l.b16 %v2367
    %v5498 = vunpack.c.l.b16 %v2368
    %v5499 = vunpack.c.l.b16 %v2369
    %v5500 = vunpack.c.l.b16 %v2370
    %v5501 = vunpack.c.l.b16 %v2371
    %v5502 = vunpack.c.l.b16 %v2372
    %v5503 = vunpack.c.l.b16 %v2373
    %v5504 = vunpack.c.l.b16 %v2374
    %v5505 = vunpack.c.l.b16 %v2375
    %v5506 = vunpack.c.l.b16 %v2376
    %v5507 = vunpack.c.l.b16 %v2377
    %v5508 = vunpack.c.l.b16 %v2378
    %v5509 = vunpack.c.l.b16 %v2379
    %v5510 = vunpack.c.l.b16 %v2380
    %v5511 = vunpack.c.l.b16 %v2381
    %v5512 = vunpack.c.l.b16 %v2382
    %v5513 = vunpack.c.l.b16 %v2383
    %v5514 = vunpack.c.l.b16 %v2384
    %v5515 = vpack.c.b16 %v5494, %v5493
    %v5516 = vpack.c.b16 %v5496, %v5495
    %v5517 = vpack.c.b16 %v5498, %v5497
    %v5518 = vpack.c.b16 %v5500, %v5499
    %v5519 = vpack.c.b16 %v5502, %v5501
    %v5520 = vpack.c.b16 %v5504, %v5503
    %v5521 = vpack.c.b16 %v5506, %v5505
    %v5522 = vpack.c.b16 %v5508, %v5507
    %v5523 = vpack.c.b16 %v5510, %v5509
    %v5524 = vpack.c.b16 %v5512, %v5511
    %v5525 = vpack.c.b16 %v5514, %v5513
    %v5537 = vsel %vm2538, %v1760, 0
    %v5540 = vand.u32 %v5525, %v96
    %5542 = vmatprep.subr.bf16.mxu0 0
    %5543 = vmatpush1.bf16.msra.mxu0 %v5522
    %5544 = vmatprep.subr.bf16.mxu0 0
    %5545 = vmatpush1.bf16.msra.mxu0 %v5521
    %5546 = vmatprep.subr.bf16.mxu0 0
    %5547 = vmatpush1.bf16.msra.mxu0 %v5520
    %5548 = vmatprep.subr.bf16.mxu0 0
    %5549 = vmatpush1.bf16.msra.mxu0 %v5519
    %5550 = vmatprep.subr.bf16.mxu0 0
    %5551 = vmatpush1.bf16.msra.mxu0 %v5518
    %5552 = vmatprep.subr.bf16.mxu0 0
    %5553 = vmatpush1.bf16.msra.mxu0 %v5517
    %5554 = vmatprep.subr.bf16.mxu0 0
    %5555 = vmatpush1.bf16.msra.mxu0 %v5516
    %5556 = vmatprep.subr.bf16.mxu0 0
    %5557 = vmatpush1.bf16.msra.mxu0 %v5515
    %5558 = vmatprep.subr.bf16.mxu0 0
    %5559 = vmatpush2.bf16.msra.mxu0 0
    %5560 = vmatprep.subr.bf16.mxu0 0
    %5561 = vmatpush2.bf16.msra.mxu0 0
    %5562 = vmatprep.subr.bf16.mxu0 0
    %5563 = vmatpush2.bf16.msra.mxu0 0
    %5564 = vmatprep.subr.bf16.mxu0 0
    %5565 = vmatpush2.bf16.msra.mxu0 0
    %5566 = vmatprep.subr.bf16.mxu0 0
    %5567 = vmatpush2.bf16.msra.mxu0 0
    %5568 = vmatprep.subr.bf16.mxu0 0
    %5569 = vmatpush2.bf16.msra.mxu0 %v5540
    %5570 = vmatprep.subr.bf16.mxu0 0
    %5571 = vmatpush2.bf16.msra.mxu0 %v5524
    %5572 = vmatprep.subr.bf16.mxu0 0
    %5573 = vmatpush2.bf16.msra.mxu0 %v5523
    %5574 = vmatprep.mubr.bf16.mxu0 %v5537
    %5575 = vmatmul.mubr.bf16.gmra.mxu0 %v1759
    %v5576 = vpop.f32.mrf.mxu0
    %v5577 = vadd.f32 0.0, %v5576
    %v5578 = vpop.f32.mrf.mxu0
    %v5579 = vpop.f32.mrf.mxu0
    %v5580 = vpop.f32.mrf.mxu0
    %5581 = vdwg.mxu0
    %v5604 = vunpack.c.l.b16 %v2385
    %v5605 = vunpack.c.l.b16 %v2386
    %v5606 = vunpack.c.l.b16 %v2387
    %v5607 = vunpack.c.l.b16 %v2388
    %v5608 = vunpack.c.l.b16 %v2389
    %v5609 = vunpack.c.l.b16 %v2390
    %v5610 = vunpack.c.l.b16 %v2391
    %v5611 = vunpack.c.l.b16 %v2392
    %v5612 = vunpack.c.l.b16 %v2393
    %v5613 = vunpack.c.l.b16 %v2394
    %v5614 = vunpack.c.l.b16 %v2395
    %v5615 = vunpack.c.l.b16 %v2396
    %v5616 = vunpack.c.l.b16 %v2397
    %v5617 = vunpack.c.l.b16 %v2398
    %v5618 = vunpack.c.l.b16 %v2399
    %v5619 = vunpack.c.l.b16 %v2400
    %v5620 = vunpack.c.l.b16 %v2401
    %v5621 = vunpack.c.l.b16 %v2402
    %v5622 = vunpack.c.l.b16 %v2403
    %v5623 = vunpack.c.l.b16 %v2404
    %v5624 = vunpack.c.l.b16 %v2405
    %v5625 = vunpack.c.l.b16 %v2406
    %v5626 = vpack.c.b16 %v5605, %v5604
    %v5627 = vpack.c.b16 %v5607, %v5606
    %v5628 = vpack.c.b16 %v5609, %v5608
    %v5629 = vpack.c.b16 %v5611, %v5610
    %v5630 = vpack.c.b16 %v5613, %v5612
    %v5631 = vpack.c.b16 %v5615, %v5614
    %v5632 = vpack.c.b16 %v5617, %v5616
    %v5633 = vpack.c.b16 %v5619, %v5618
    %v5634 = vpack.c.b16 %v5621, %v5620
    %v5635 = vpack.c.b16 %v5623, %v5622
    %v5636 = vpack.c.b16 %v5625, %v5624
    %v5648 = vsel %vm2538, %v1762, 0
    %v5651 = vand.u32 %v5636, %v96
    %5653 = vmatprep.subr.bf16.mxu0 0
    %5654 = vmatpush1.bf16.msra.mxu0 %v5633
    %5655 = vmatprep.subr.bf16.mxu0 0
    %5656 = vmatpush1.bf16.msra.mxu0 %v5632
    %5657 = vmatprep.subr.bf16.mxu0 0
    %5658 = vmatpush1.bf16.msra.mxu0 %v5631
    %5659 = vmatprep.subr.bf16.mxu0 0
    %5660 = vmatpush1.bf16.msra.mxu0 %v5630
    %5661 = vmatprep.subr.bf16.mxu0 0
    %5662 = vmatpush1.bf16.msra.mxu0 %v5629
    %5663 = vmatprep.subr.bf16.mxu0 0
    %5664 = vmatpush1.bf16.msra.mxu0 %v5628
    %5665 = vmatprep.subr.bf16.mxu0 0
    %5666 = vmatpush1.bf16.msra.mxu0 %v5627
    %5667 = vmatprep.subr.bf16.mxu0 0
    %5668 = vmatpush1.bf16.msra.mxu0 %v5626
    %5669 = vmatprep.subr.bf16.mxu0 0
    %5670 = vmatpush2.bf16.msra.mxu0 0
    %5671 = vmatprep.subr.bf16.mxu0 0
    %5672 = vmatpush2.bf16.msra.mxu0 0
    %5673 = vmatprep.subr.bf16.mxu0 0
    %5674 = vmatpush2.bf16.msra.mxu0 0
    %5675 = vmatprep.subr.bf16.mxu0 0
    %5676 = vmatpush2.bf16.msra.mxu0 0
    %5677 = vmatprep.subr.bf16.mxu0 0
    %5678 = vmatpush2.bf16.msra.mxu0 0
    %5679 = vmatprep.subr.bf16.mxu0 0
    %5680 = vmatpush2.bf16.msra.mxu0 %v5651
    %5681 = vmatprep.subr.bf16.mxu0 0
    %5682 = vmatpush2.bf16.msra.mxu0 %v5635
    %5683 = vmatprep.subr.bf16.mxu0 0
    %5684 = vmatpush2.bf16.msra.mxu0 %v5634
    %5685 = vmatprep.mubr.bf16.mxu0 %v5648
    %5686 = vmatmul.mubr.bf16.gmra.mxu0 %v1761
    %v5687 = vpop.f32.mrf.mxu0
    %v5688 = vadd.f32 0.0, %v5687
    %v5689 = vpop.f32.mrf.mxu0
    %v5690 = vpop.f32.mrf.mxu0
    %v5691 = vpop.f32.mrf.mxu0
    %5692 = vdwg.mxu0
    %v5715 = vunpack.c.l.b16 %v2407
    %v5716 = vunpack.c.l.b16 %v2408
    %v5717 = vunpack.c.l.b16 %v2409
    %v5718 = vunpack.c.l.b16 %v2410
    %v5719 = vunpack.c.l.b16 %v2411
    %v5720 = vunpack.c.l.b16 %v2412
    %v5721 = vunpack.c.l.b16 %v2413
    %v5722 = vunpack.c.l.b16 %v2414
    %v5723 = vunpack.c.l.b16 %v2415
    %v5724 = vunpack.c.l.b16 %v2416
    %v5725 = vunpack.c.l.b16 %v2417
    %v5726 = vunpack.c.l.b16 %v2418
    %v5727 = vunpack.c.l.b16 %v2419
    %v5728 = vunpack.c.l.b16 %v2420
    %v5729 = vunpack.c.l.b16 %v2421
    %v5730 = vunpack.c.l.b16 %v2422
    %v5731 = vunpack.c.l.b16 %v2423
    %v5732 = vunpack.c.l.b16 %v2424
    %v5733 = vunpack.c.l.b16 %v2425
    %v5734 = vunpack.c.l.b16 %v2426
    %v5735 = vunpack.c.l.b16 %v2427
    %v5736 = vunpack.c.l.b16 %v2428
    %v5737 = vpack.c.b16 %v5716, %v5715
    %v5738 = vpack.c.b16 %v5718, %v5717
    %v5739 = vpack.c.b16 %v5720, %v5719
    %v5740 = vpack.c.b16 %v5722, %v5721
    %v5741 = vpack.c.b16 %v5724, %v5723
    %v5742 = vpack.c.b16 %v5726, %v5725
    %v5743 = vpack.c.b16 %v5728, %v5727
    %v5744 = vpack.c.b16 %v5730, %v5729
    %v5745 = vpack.c.b16 %v5732, %v5731
    %v5746 = vpack.c.b16 %v5734, %v5733
    %v5747 = vpack.c.b16 %v5736, %v5735
    %v5759 = vsel %vm2538, %v1764, 0
    %v5762 = vand.u32 %v5747, %v96
    %5764 = vmatprep.subr.bf16.mxu0 0
    %5765 = vmatpush1.bf16.msra.mxu0 %v5744
    %5766 = vmatprep.subr.bf16.mxu0 0
    %5767 = vmatpush1.bf16.msra.mxu0 %v5743
    %5768 = vmatprep.subr.bf16.mxu0 0
    %5769 = vmatpush1.bf16.msra.mxu0 %v5742
    %5770 = vmatprep.subr.bf16.mxu0 0
    %5771 = vmatpush1.bf16.msra.mxu0 %v5741
    %5772 = vmatprep.subr.bf16.mxu0 0
    %5773 = vmatpush1.bf16.msra.mxu0 %v5740
    %5774 = vmatprep.subr.bf16.mxu0 0
    %5775 = vmatpush1.bf16.msra.mxu0 %v5739
    %5776 = vmatprep.subr.bf16.mxu0 0
    %5777 = vmatpush1.bf16.msra.mxu0 %v5738
    %5778 = vmatprep.subr.bf16.mxu0 0
    %5779 = vmatpush1.bf16.msra.mxu0 %v5737
    %5780 = vmatprep.subr.bf16.mxu0 0
    %5781 = vmatpush2.bf16.msra.mxu0 0
    %5782 = vmatprep.subr.bf16.mxu0 0
    %5783 = vmatpush2.bf16.msra.mxu0 0
    %5784 = vmatprep.subr.bf16.mxu0 0
    %5785 = vmatpush2.bf16.msra.mxu0 0
    %5786 = vmatprep.subr.bf16.mxu0 0
    %5787 = vmatpush2.bf16.msra.mxu0 0
    %5788 = vmatprep.subr.bf16.mxu0 0
    %5789 = vmatpush2.bf16.msra.mxu0 0
    %5790 = vmatprep.subr.bf16.mxu0 0
    %5791 = vmatpush2.bf16.msra.mxu0 %v5762
    %5792 = vmatprep.subr.bf16.mxu0 0
    %5793 = vmatpush2.bf16.msra.mxu0 %v5746
    %5794 = vmatprep.subr.bf16.mxu0 0
    %5795 = vmatpush2.bf16.msra.mxu0 %v5745
    %5796 = vmatprep.mubr.bf16.mxu0 %v5759
    %5797 = vmatmul.mubr.bf16.gmra.mxu0 %v1763
    %v5798 = vpop.f32.mrf.mxu0
    %v5799 = vadd.f32 0.0, %v5798
    %v5800 = vpop.f32.mrf.mxu0
    %v5801 = vpop.f32.mrf.mxu0
    %v5802 = vpop.f32.mrf.mxu0
    %5803 = vdwg.mxu0
    %v5826 = vunpack.c.l.b16 %v2429
    %v5827 = vunpack.c.l.b16 %v2430
    %v5828 = vunpack.c.l.b16 %v2431
    %v5829 = vunpack.c.l.b16 %v2432
    %v5830 = vunpack.c.l.b16 %v2433
    %v5831 = vunpack.c.l.b16 %v2434
    %v5832 = vunpack.c.l.b16 %v2435
    %v5833 = vunpack.c.l.b16 %v2436
    %v5834 = vunpack.c.l.b16 %v2437
    %v5835 = vunpack.c.l.b16 %v2438
    %v5836 = vunpack.c.l.b16 %v2439
    %v5837 = vunpack.c.l.b16 %v2440
    %v5838 = vunpack.c.l.b16 %v2441
    %v5839 = vunpack.c.l.b16 %v2442
    %v5840 = vunpack.c.l.b16 %v2443
    %v5841 = vunpack.c.l.b16 %v2444
    %v5842 = vunpack.c.l.b16 %v2445
    %v5843 = vunpack.c.l.b16 %v2446
    %v5844 = vunpack.c.l.b16 %v2447
    %v5845 = vunpack.c.l.b16 %v2448
    %v5846 = vunpack.c.l.b16 %v2449
    %v5847 = vunpack.c.l.b16 %v2450
    %v5848 = vpack.c.b16 %v5827, %v5826
    %v5849 = vpack.c.b16 %v5829, %v5828
    %v5850 = vpack.c.b16 %v5831, %v5830
    %v5851 = vpack.c.b16 %v5833, %v5832
    %v5852 = vpack.c.b16 %v5835, %v5834
    %v5853 = vpack.c.b16 %v5837, %v5836
    %v5854 = vpack.c.b16 %v5839, %v5838
    %v5855 = vpack.c.b16 %v5841, %v5840
    %v5856 = vpack.c.b16 %v5843, %v5842
    %v5857 = vpack.c.b16 %v5845, %v5844
    %v5858 = vpack.c.b16 %v5847, %v5846
    %v5870 = vsel %vm2538, %v1766, 0
    %v5873 = vand.u32 %v5858, %v96
    %5875 = vmatprep.subr.bf16.mxu0 0
    %5876 = vmatpush1.bf16.msra.mxu0 %v5855
    %5877 = vmatprep.subr.bf16.mxu0 0
    %5878 = vmatpush1.bf16.msra.mxu0 %v5854
    %5879 = vmatprep.subr.bf16.mxu0 0
    %5880 = vmatpush1.bf16.msra.mxu0 %v5853
    %5881 = vmatprep.subr.bf16.mxu0 0
    %5882 = vmatpush1.bf16.msra.mxu0 %v5852
    %5883 = vmatprep.subr.bf16.mxu0 0
    %5884 = vmatpush1.bf16.msra.mxu0 %v5851
    %5885 = vmatprep.subr.bf16.mxu0 0
    %5886 = vmatpush1.bf16.msra.mxu0 %v5850
    %5887 = vmatprep.subr.bf16.mxu0 0
    %5888 = vmatpush1.bf16.msra.mxu0 %v5849
    %5889 = vmatprep.subr.bf16.mxu0 0
    %5890 = vmatpush1.bf16.msra.mxu0 %v5848
    %5891 = vmatprep.subr.bf16.mxu0 0
    %5892 = vmatpush2.bf16.msra.mxu0 0
    %5893 = vmatprep.subr.bf16.mxu0 0
    %5894 = vmatpush2.bf16.msra.mxu0 0
    %5895 = vmatprep.subr.bf16.mxu0 0
    %5896 = vmatpush2.bf16.msra.mxu0 0
    %5897 = vmatprep.subr.bf16.mxu0 0
    %5898 = vmatpush2.bf16.msra.mxu0 0
    %5899 = vmatprep.subr.bf16.mxu0 0
    %5900 = vmatpush2.bf16.msra.mxu0 0
    %5901 = vmatprep.subr.bf16.mxu0 0
    %5902 = vmatpush2.bf16.msra.mxu0 %v5873
    %5903 = vmatprep.subr.bf16.mxu0 0
    %5904 = vmatpush2.bf16.msra.mxu0 %v5857
    %5905 = vmatprep.subr.bf16.mxu0 0
    %5906 = vmatpush2.bf16.msra.mxu0 %v5856
    %5907 = vmatprep.mubr.bf16.mxu0 %v5870
    %5908 = vmatmul.mubr.bf16.gmra.mxu0 %v1765
    %v5909 = vpop.f32.mrf.mxu0
    %v5910 = vadd.f32 0.0, %v5909
    %v5911 = vpop.f32.mrf.mxu0
    %v5912 = vpop.f32.mrf.mxu0
    %v5913 = vpop.f32.mrf.mxu0
    %5914 = vdwg.mxu0
    %v5937 = vunpack.c.l.b16 %v2451
    %v5938 = vunpack.c.l.b16 %v2452
    %v5939 = vunpack.c.l.b16 %v2453
    %v5940 = vunpack.c.l.b16 %v2454
    %v5941 = vunpack.c.l.b16 %v2455
    %v5942 = vunpack.c.l.b16 %v2456
    %v5943 = vunpack.c.l.b16 %v2457
    %v5944 = vunpack.c.l.b16 %v2458
    %v5945 = vunpack.c.l.b16 %v2459
    %v5946 = vunpack.c.l.b16 %v2460
    %v5947 = vunpack.c.l.b16 %v2461
    %v5948 = vunpack.c.l.b16 %v2462
    %v5949 = vunpack.c.l.b16 %v2463
    %v5950 = vunpack.c.l.b16 %v2464
    %v5951 = vunpack.c.l.b16 %v2465
    %v5952 = vunpack.c.l.b16 %v2466
    %v5953 = vunpack.c.l.b16 %v2467
    %v5954 = vunpack.c.l.b16 %v2468
    %v5955 = vunpack.c.l.b16 %v2469
    %v5956 = vunpack.c.l.b16 %v2470
    %v5957 = vunpack.c.l.b16 %v2471
    %v5958 = vunpack.c.l.b16 %v2472
    %v5959 = vpack.c.b16 %v5938, %v5937
    %v5960 = vpack.c.b16 %v5940, %v5939
    %v5961 = vpack.c.b16 %v5942, %v5941
    %v5962 = vpack.c.b16 %v5944, %v5943
    %v5963 = vpack.c.b16 %v5946, %v5945
    %v5964 = vpack.c.b16 %v5948, %v5947
    %v5965 = vpack.c.b16 %v5950, %v5949
    %v5966 = vpack.c.b16 %v5952, %v5951
    %v5967 = vpack.c.b16 %v5954, %v5953
    %v5968 = vpack.c.b16 %v5956, %v5955
    %v5969 = vpack.c.b16 %v5958, %v5957
    %v5981 = vsel %vm2538, %v1768, 0
    %v5984 = vand.u32 %v5969, %v96
    %5986 = vmatprep.subr.bf16.mxu0 0
    %5987 = vmatpush1.bf16.msra.mxu0 %v5966
    %5988 = vmatprep.subr.bf16.mxu0 0
    %5989 = vmatpush1.bf16.msra.mxu0 %v5965
    %5990 = vmatprep.subr.bf16.mxu0 0
    %5991 = vmatpush1.bf16.msra.mxu0 %v5964
    %5992 = vmatprep.subr.bf16.mxu0 0
    %5993 = vmatpush1.bf16.msra.mxu0 %v5963
    %5994 = vmatprep.subr.bf16.mxu0 0
    %5995 = vmatpush1.bf16.msra.mxu0 %v5962
    %5996 = vmatprep.subr.bf16.mxu0 0
    %5997 = vmatpush1.bf16.msra.mxu0 %v5961
    %5998 = vmatprep.subr.bf16.mxu0 0
    %5999 = vmatpush1.bf16.msra.mxu0 %v5960
    %6000 = vmatprep.subr.bf16.mxu0 0
    %6001 = vmatpush1.bf16.msra.mxu0 %v5959
    %6002 = vmatprep.subr.bf16.mxu0 0
    %6003 = vmatpush2.bf16.msra.mxu0 0
    %6004 = vmatprep.subr.bf16.mxu0 0
    %6005 = vmatpush2.bf16.msra.mxu0 0
    %6006 = vmatprep.subr.bf16.mxu0 0
    %6007 = vmatpush2.bf16.msra.mxu0 0
    %6008 = vmatprep.subr.bf16.mxu0 0
    %6009 = vmatpush2.bf16.msra.mxu0 0
    %6010 = vmatprep.subr.bf16.mxu0 0
    %6011 = vmatpush2.bf16.msra.mxu0 0
    %6012 = vmatprep.subr.bf16.mxu0 0
    %6013 = vmatpush2.bf16.msra.mxu0 %v5984
    %6014 = vmatprep.subr.bf16.mxu0 0
    %6015 = vmatpush2.bf16.msra.mxu0 %v5968
    %6016 = vmatprep.subr.bf16.mxu0 0
    %6017 = vmatpush2.bf16.msra.mxu0 %v5967
    %6018 = vmatprep.mubr.bf16.mxu0 %v5981
    %6019 = vmatmul.mubr.bf16.gmra.mxu0 %v1767
    %v6020 = vpop.f32.mrf.mxu0
    %v6021 = vadd.f32 0.0, %v6020
    %v6022 = vpop.f32.mrf.mxu0
    %v6023 = vpop.f32.mrf.mxu0
    %v6024 = vpop.f32.mrf.mxu0
    %6025 = vdwg.mxu0
    %vm6026 = vcmask 1041408
    %v6027 = vsel %vm6026, %v2580, 0.0
    %v6028 = vsel %vm6026, %v2691, 0.0
    %v6029 = vadd.f32 %v6027, %v6028
    %v6030 = vsel %vm6026, %v2802, 0.0
    %v6031 = vadd.f32 %v6029, %v6030
    %v6032 = vsel %vm6026, %v2913, 0.0
    %v6033 = vadd.f32 %v6031, %v6032
    %v6034 = vsel %vm6026, %v3024, 0.0
    %v6035 = vadd.f32 %v6033, %v6034
    %v6036 = vsel %vm6026, %v3135, 0.0
    %v6037 = vadd.f32 %v6035, %v6036
    %v6038 = vsel %vm6026, %v3246, 0.0
    %v6039 = vadd.f32 %v6037, %v6038
    %v6040 = vsel %vm6026, %v3357, 0.0
    %v6041 = vadd.f32 %v6039, %v6040
    %v6042 = vsel %vm6026, %v3468, 0.0
    %v6043 = vadd.f32 %v6041, %v6042
    %v6044 = vsel %vm6026, %v3579, 0.0
    %v6045 = vadd.f32 %v6043, %v6044
    %v6046 = vsel %vm6026, %v3690, 0.0
    %v6047 = vadd.f32 %v6045, %v6046
    %v6048 = vsel %vm6026, %v3801, 0.0
    %v6049 = vadd.f32 %v6047, %v6048
    %v6050 = vsel %vm6026, %v3912, 0.0
    %v6051 = vadd.f32 %v6049, %v6050
    %v6052 = vsel %vm6026, %v4023, 0.0
    %v6053 = vadd.f32 %v6051, %v6052
    %v6054 = vsel %vm6026, %v4134, 0.0
    %v6055 = vadd.f32 %v6053, %v6054
    %v6056 = vsel %vm6026, %v4245, 0.0
    %v6057 = vadd.f32 %v6055, %v6056
    %v6058 = vsel %vm6026, %v4356, 0.0
    %v6059 = vadd.f32 %v6057, %v6058
    %v6060 = vsel %vm6026, %v4467, 0.0
    %v6061 = vadd.f32 %v6059, %v6060
    %v6062 = vsel %vm6026, %v4578, 0.0
    %v6063 = vadd.f32 %v6061, %v6062
    %v6064 = vsel %vm6026, %v4689, 0.0
    %v6065 = vadd.f32 %v6063, %v6064
    %v6066 = vsel %vm6026, %v4800, 0.0
    %v6067 = vadd.f32 %v6065, %v6066
    %v6068 = vsel %vm6026, %v4911, 0.0
    %v6069 = vadd.f32 %v6067, %v6068
    %v6070 = vsel %vm6026, %v5022, 0.0
    %v6071 = vadd.f32 %v6069, %v6070
    %v6072 = vsel %vm6026, %v5133, 0.0
    %v6073 = vadd.f32 %v6071, %v6072
    %v6074 = vsel %vm6026, %v5244, 0.0
    %v6075 = vadd.f32 %v6073, %v6074
    %v6076 = vsel %vm6026, %v5355, 0.0
    %v6077 = vadd.f32 %v6075, %v6076
    %v6078 = vsel %vm6026, %v5466, 0.0
    %v6079 = vadd.f32 %v6077, %v6078
    %v6080 = vsel %vm6026, %v5577, 0.0
    %v6081 = vadd.f32 %v6079, %v6080
    %v6082 = vsel %vm6026, %v5688, 0.0
    %v6083 = vadd.f32 %v6081, %v6082
    %v6084 = vsel %vm6026, %v5799, 0.0
    %v6085 = vadd.f32 %v6083, %v6084
    %v6086 = vsel %vm6026, %v5910, 0.0
    %v6087 = vadd.f32 %v6085, %v6086
    %v6088 = vsel %vm6026, %v6021, 0.0
    %v6089 = vadd.f32 %v6087, %v6088
    %v6090 = vld [vmem:[%s4] sm:$0x1]
    %v6092 = vlaneseq
    %v6093 = vshrl.u32 %v6092, 7
    %v6094 = vsub.s32 0, %v6093
    %v6095 = vrot.slane %v6090, %v6094
    %v6097 = vadd.f32 %v6089, %v6095
    %v6098 = vmax.f32 %v6097, 0.0
    %v6099 = vld [vmem:[%s5] sm:$0xff]
    %v6100 = vld [vmem:[%s5 + $0x8] sm:$0xff]
    %v6101 = vld [vmem:[%s5 + $0x10] sm:$0xff]
    %v6102 = vld [vmem:[%s5 + $0x18] sm:$0xff]
    %v6103 = vld [vmem:[%s5 + $0x20] sm:$0xff]
    %v6104 = vld [vmem:[%s5 + $0x28] sm:$0xff]
    %v6105 = vld [vmem:[%s5 + $0x30] sm:$0xff]
    %v6106 = vld [vmem:[%s5 + $0x38] sm:$0xff]
    %v6107 = vld [vmem:[%s5 + $0x40] sm:$0xff]
    %v6108 = vld [vmem:[%s5 + $0x48] sm:$0xff]
    %v6109 = vld [vmem:[%s5 + $0x50] sm:$0xff]
    %v6110 = vld [vmem:[%s5 + $0x58] sm:$0xff]
    %v6111 = vld [vmem:[%s5 + $0x60] sm:$0xff]
    %v6112 = vld [vmem:[%s5 + $0x68] sm:$0xff]
    %v6113 = vld [vmem:[%s5 + $0x70] sm:$0xff]
    %v6114 = vld [vmem:[%s5 + $0x78] sm:$0xff]
    %v6115 = vld [vmem:[%s6] sm:$0x1]
    %v6117 = vlaneseq
    %v6118 = vshrl.u32 %v6117, 7
    %v6119 = vsub.s32 0, %v6118
    %v6120 = vrot.slane %v6115, %v6119
    %6122 = vmatprep.subr.mxu0 0.0
    %6123 = vmatpush1.msra.mxu0 %v6114
    %6124 = vmatprep.subr.mxu0 0.0
    %6125 = vmatpush1.msra.mxu0 %v6113
    %6126 = vmatprep.subr.mxu0 0.0
    %6127 = vmatpush1.msra.mxu0 %v6112
    %6128 = vmatprep.subr.mxu0 0.0
    %6129 = vmatpush1.msra.mxu0 %v6111
    %6130 = vmatprep.subr.mxu0 0.0
    %6131 = vmatpush1.msra.mxu0 %v6110
    %6132 = vmatprep.subr.mxu0 0.0
    %6133 = vmatpush1.msra.mxu0 %v6109
    %6134 = vmatprep.subr.mxu0 0.0
    %6135 = vmatpush1.msra.mxu0 %v6108
    %6136 = vmatprep.subr.mxu0 0.0
    %6137 = vmatpush1.msra.mxu0 %v6107
    %6138 = vmatprep.subr.mxu0 0.0
    %6139 = vmatpush1.msra.mxu0 %v6106
    %6140 = vmatprep.subr.mxu0 0.0
    %6141 = vmatpush1.msra.mxu0 %v6105
    %6142 = vmatprep.subr.mxu0 0.0
    %6143 = vmatpush1.msra.mxu0 %v6104
    %6144 = vmatprep.subr.mxu0 0.0
    %6145 = vmatpush1.msra.mxu0 %v6103
    %6146 = vmatprep.subr.mxu0 0.0
    %6147 = vmatpush1.msra.mxu0 %v6102
    %6148 = vmatprep.subr.mxu0 0.0
    %6149 = vmatpush1.msra.mxu0 %v6101
    %6150 = vmatprep.subr.mxu0 0.0
    %6151 = vmatpush1.msra.mxu0 %v6100
    %6152 = vmatprep.subr.mxu0 0.0
    %6153 = vmatpush1.msra.mxu0 %v6099
    %6154 = vmatprep.subr.mxu0 0.0
    %6155 = vmatpush2.msra.mxu0 0.0
    %6156 = vmatprep.subr.mxu0 0.0
    %6157 = vmatpush2.msra.mxu0 0.0
    %6158 = vmatprep.subr.mxu0 0.0
    %6159 = vmatpush2.msra.mxu0 0.0
    %6160 = vmatprep.subr.mxu0 0.0
    %6161 = vmatpush2.msra.mxu0 0.0
    %6162 = vmatprep.subr.mxu0 0.0
    %6163 = vmatpush2.msra.mxu0 0.0
    %6164 = vmatprep.subr.mxu0 0.0
    %6165 = vmatpush2.msra.mxu0 0.0
    %6166 = vmatprep.subr.mxu0 0.0
    %6167 = vmatpush2.msra.mxu0 0.0
    %6168 = vmatprep.subr.mxu0 0.0
    %6169 = vmatpush2.msra.mxu0 0.0
    %6170 = vmatprep.subr.mxu0 0.0
    %6171 = vmatpush2.msra.mxu0 0.0
    %6172 = vmatprep.subr.mxu0 0.0
    %6173 = vmatpush2.msra.mxu0 0.0
    %6174 = vmatprep.subr.mxu0 0.0
    %6175 = vmatpush2.msra.mxu0 0.0
    %6176 = vmatprep.subr.mxu0 0.0
    %6177 = vmatpush2.msra.mxu0 0.0
    %6178 = vmatprep.subr.mxu0 0.0
    %6179 = vmatpush2.msra.mxu0 0.0
    %6180 = vmatprep.subr.mxu0 0.0
    %6181 = vmatpush2.msra.mxu0 0.0
    %6182 = vmatprep.subr.mxu0 0.0
    %6183 = vmatpush2.msra.mxu0 0.0
    %6184 = vmatprep.subr.mxu0 0.0
    %6185 = vmatpush2.msra.mxu0 0.0
    %6186 = vmatprep.mubr.f32.mxu0 0.0
    %6187 = vmatmul.mubr.f32.gmra.mxu0 %v6098
    %v6188 = vpop.f32.mrf.mxu0
    %v6189 = vadd.f32 %v6120, %v6188
    %v6190 = vpop.f32.mrf.mxu0
    %6191 = vdwg.mxu0
    %vm6192 = vcmask 74752
    %v6193 = vsel %vm6192, %v6189, -inf
    %6194 = vmax.xlane.f32.xlu0 %v6193
    %v6195 = vpop.xlane.xlu0 %6194
    %v6196 = vsub.f32 %v6189, %v6195
    %v6197 = vmul.f32 %v6196, 1.442695
    %v6198 = vpow.pop %v6197
    %v6199 = vsel %vm6192, %v6198, 0.0
    %6200 = vadd.xlane.f32.xlu0 %v6199
    %v6201 = vpop.xlane.xlu0 %6200
    %v6202 = vrcp.pop %v6201
    %v6203 = vmul.f32 %v6198, %v6202
    %6204 = vst.msk [vmem:[#allocation3] sm:$0x3] %vm6192, %v6203
    // Predicated region
    $region30: #{quantum_convnet_forward.1} parent=1 // pred_check
      _
    $region31: #{quantum_convnet_forward.1} parent=1 // pred_check_branch
      %6206 = sbr.rel (0) target = $region33
    $region32: #{quantum_convnet_forward.1} parent=1 // pred_region
      %s6208 = ssub.s32 32, 32
      %6209 = vsyncadd [#allocation4], %s6208
      %s6211 = sshll.u32 [#allocation3], 4
      %s6212 = int_to_ptr.vmem [resolvable:$true] %s6211
      %6214 = dma.vmem_to_hbm [thread:$0]  %s6212, 32, %s7, [#allocation4]
    $region33: #{quantum_convnet_forward.1} parent=1 // pred_fallthru
      _
    // Predicated region
    $region34: #{quantum_convnet_forward.1} parent=1 // pred_check
      _
    $region35: #{quantum_convnet_forward.1} parent=1 // pred_check_branch
      %6216 = sbr.rel (0) target = $region37
    $region36: #{quantum_convnet_forward.1} parent=1 // pred_region
      %6217 = dma.done [#allocation4], 32
    $region37: #{quantum_convnet_forward.1} parent=1 // pred_fallthru
      _
    %6218 = vsyncpa [#allocation4], 1

</llo_original>
